<compile_context>
chip_gen: v7x
topology: tpu7x:2x2x1
jax: 0.10.0
libtpu: 0.0.40
codegen_flags: <defaults>
</compile_context>

<pallas_src>
import functools

import jax
import jax.numpy as jnp
from jax.experimental import pallas as pl
from jax.experimental.pallas import tpu as pltpu

CIN = 3            # input image channels (NCHW)
CIN_PAD = 8        # pad the channel (sublane) axis to a full sublane group
CFEAT = 128        # backbone feature channels (bridge in/out channels)
CMID = 64          # bridge hidden channels
C3D = 512          # 3D-resnet feature dim feeding the classifier
MAX_TILE_P = 2048  # pixel (lane) tile: big enough for v6e step-overhead
                   # amortization, small enough for v7x's 64 MiB VMEM.


# --------------------------------------------------------------------------
# Fused kernel: stems (emo + idex) -> bridges (expBridge + idBridge) -> TFE
# plus per-frame pooled partial sums for the 3D head.
# Layout inside the kernel: channels on sublanes, pixels on lanes, so outputs
# are already NCHW (flattened spatially) -- no post-kernel transpose needed.
# --------------------------------------------------------------------------
def _make_fused_kernel(tile_p, pixels, with_visuals):
    needs_mask = (pixels % tile_p) != 0

    def kernel(x_ref,
               wse_ref, bse_ref, wsi_ref, bsi_ref,
               w1e_ref, b1e_ref, w2e_ref, b2e_ref, w3e_ref, b3e_ref,
               w1i_ref, b1i_ref, w2i_ref, b2i_ref, w3i_ref, b3i_ref,
               *out_refs):
        pb = pl.program_id(1)
        if with_visuals:
            emo_ref, id_ref, tfe_ref, pooled_ref = out_refs
        else:
            tfe_ref, pooled_ref = out_refs
            emo_ref = id_ref = None

        @pl.when(pb == 0)
        def _():
            pooled_ref[...] = jnp.zeros_like(pooled_ref)

        def cbr(h_bf16, w_ref, b_ref, out_dtype):
            # Folded-BN 1x1 conv: (Cout,Cin) @ (Cin,tile_p) on the MXU with f32
            # accumulation; bias + ReLU epilogue in f32, then cast.
            z = jnp.dot(w_ref[...], h_bf16, preferred_element_type=jnp.float32)
            return jnp.maximum(z + b_ref[...], 0.0).astype(out_dtype)

        x = x_ref[...]                                   # (CIN_PAD, tile_p) bf16

        # --- emo stem + expBridge chain (Dropout(0.2) is identity at inference)
        h0e = cbr(x, wse_ref, bse_ref, jnp.bfloat16)     # (128, tile_p)
        if with_visuals:
            emo_ref[...] = h0e
        h1e = cbr(h0e, w1e_ref, b1e_ref, jnp.bfloat16)   # (64, tile_p)
        h2e = cbr(h1e, w2e_ref, b2e_ref, jnp.bfloat16)   # (64, tile_p)
        h3e = cbr(h2e, w3e_ref, b3e_ref, jnp.float32)    # (128, tile_p) f32

        # --- id stem + idBridge chain
        h0i = cbr(x, wsi_ref, bsi_ref, jnp.bfloat16)
        if with_visuals:
            id_ref[...] = h0i
        h1i = cbr(h0i, w1i_ref, b1i_ref, jnp.bfloat16)
        h2i = cbr(h1i, w2i_ref, b2i_ref, jnp.bfloat16)
        h3i = cbr(h2i, w3i_ref, b3i_ref, jnp.float32)

        # TFE = torch.add(emo_out, torch.neg(id_out))  (computed in f32)
        tfe = h3e - h3i
        tfe_ref[...] = tfe.astype(tfe_ref.dtype)

        # Per-frame pooled partial sum (GAP input for the stand-in 3D head).
        if needs_mask:
            col = jax.lax.broadcasted_iota(jnp.int32, (1, tile_p), 1) + pb * tile_p
            tfe = jnp.where(col < pixels, tfe, 0.0)
        pooled_ref[...] += jnp.sum(tfe, axis=1, keepdims=True)

    return kernel


def fused_stem_bridge_tfe(x_ncp, fused_params, with_visuals):
    """x_ncp: (N, CIN_PAD, P) bf16, channels on sublanes / pixels on lanes."""
    N, _, P = x_ncp.shape
    tile_p = P if P <= MAX_TILE_P else MAX_TILE_P
    num_p_blocks = pl.cdiv(P, tile_p)

    kernel = _make_fused_kernel(tile_p, P, with_visuals)

    x_spec = pl.BlockSpec((None, CIN_PAD, tile_p), lambda n, p: (n, 0, p))
    # Weights/biases: whole-array, block-invariant (constant index map).
    w_specs = [pl.BlockSpec(w.shape, lambda n, p: (0, 0)) for w in fused_params]

    feat_shape = jax.ShapeDtypeStruct((N, CFEAT, P), jnp.bfloat16)
    feat_spec = pl.BlockSpec((None, CFEAT, tile_p), lambda n, p: (n, 0, p))
    pooled_shape = jax.ShapeDtypeStruct((N, CFEAT, 1), jnp.float32)
    pooled_spec = pl.BlockSpec((None, CFEAT, 1), lambda n, p: (n, 0, 0))

    if with_visuals:
        out_shape = (feat_shape, feat_shape, feat_shape, pooled_shape)
        out_specs = (feat_spec, feat_spec, feat_spec, pooled_spec)
    else:
        out_shape = (feat_shape, pooled_shape)
        out_specs = (feat_spec, pooled_spec)

    return pl.pallas_call(
        kernel,
        out_shape=out_shape,
        grid=(N, num_p_blocks),
        in_specs=[x_spec] + w_specs,
        out_specs=out_specs,
        compiler_params=pltpu.CompilerParams(
            # Frame axis (N = batch*num_segments) is parallel -> both v7x TCs
            # always have work; pixel axis carries the resident pooled sum.
            dimension_semantics=("parallel", "arbitrary")),
    )(x_ncp, *fused_params)


# --------------------------------------------------------------------------
# Parameter construction (deterministic, synthetic; no checkpoint loading).
# BN (inference) is folded: scale into the bf16 weights, bias kept in f32.
# --------------------------------------------------------------------------
def init_params(key, num_classes):
    keys = iter(jax.random.split(key, 64))

    def conv_bn(cin, cout):
        w = 0.05 * jax.random.normal(next(keys), (cout, cin), jnp.float32)
        cb = 0.01 * jax.random.normal(next(keys), (cout,), jnp.float32)
        gamma = 1.0 + 0.1 * jax.random.normal(next(keys), (cout,), jnp.float32)
        beta = 0.1 * jax.random.normal(next(keys), (cout,), jnp.float32)
        mean = 0.1 * jax.random.normal(next(keys), (cout,), jnp.float32)
        var = 1.0 + jnp.abs(jax.random.normal(next(keys), (cout,), jnp.float32))
        scale = gamma / jnp.sqrt(var + 1e-5)
        w_folded = w * scale[:, None]                 # fold BN scale into conv
        bias = beta + scale * (cb - mean)
        return w_folded, bias.reshape(cout, 1)

    def stem():
        # TODO(synk): stand-in for SENet / SENet_idex (SE-ResNet18) backbone.
        w, b = conv_bn(CIN, CFEAT)
        w = jnp.pad(w, ((0, 0), (0, CIN_PAD - CIN)))  # (128, 8)
        return w.astype(jnp.bfloat16), b

    def bridge():
        layers = []
        for cin, cout in [(CFEAT, CMID), (CMID, CMID), (CMID, CFEAT)]:
            w, b = conv_bn(cin, cout)
            layers += [w.astype(jnp.bfloat16), b]
        return layers

    wse, bse = stem()                                 # emo stem
    wsi, bsi = stem()                                 # idex stem
    fused = [wse, bse, wsi, bsi] + bridge() + bridge()   # expBridge, idBridge

    w3d = 0.05 * jax.random.normal(next(keys), (CFEAT, C3D), jnp.float32)
    wc = 0.05 * jax.random.normal(next(keys), (C3D, num_classes), jnp.float32)
    bc = 0.01 * jax.random.normal(next(keys), (num_classes,), jnp.float32)
    return {"fused": tuple(fused),
            "w3d": w3d.astype(jnp.bfloat16),
            "wc": wc.astype(jnp.bfloat16),
            "bc": bc}


# --------------------------------------------------------------------------
# Forward pass (mirrors emo_id_net.forward)
# --------------------------------------------------------------------------
def emo_id_forward(x_nchw, params, num_segments, num_classes, with_visuals=True):
    N, C, H, W = x_nchw.shape
    assert N % num_segments == 0
    B = N // num_segments
    P = H * W

    # NCHW stays NCHW: flatten spatial (free reshape), cast to bf16 and pad the
    # channel axis to 8 sublanes.  No transposes anywhere in the wrapper.
    x = x_nchw.reshape(N, C, P).astype(jnp.bfloat16)
    x = jnp.pad(x, ((0, 0), (0, CIN_PAD - C), (0, 0)))

    outs = fused_stem_bridge_tfe(x, params["fused"], with_visuals)
    if with_visuals:
        emo, idf, tfe, pooled = outs
    else:
        tfe, pooled = outs
        emo = idf = None

    # (N, 128, H*W) -> (N, 128, H, W): free reshapes, no data movement.
    TFE_out = tfe.reshape(N, CFEAT, H, W)
    emo_visual = emo.reshape(N, CFEAT, H, W) if with_visuals else None
    id_visual = idf.reshape(N, CFEAT, H, W) if with_visuals else None

    # Head in plain jnp (tiny: B rows) -- saves a kernel launch, XLA fuses it.
    # TODO(synk): ResNet_threed (3D ResNet-18) body is not provided; stand-in =
    # GAP over (T,H,W) + Linear(128->512) + ReLU; classifier Linear(512,C) real.
    mean = pooled.reshape(B, num_segments, CFEAT).sum(axis=1) / float(num_segments * P)
    feat = jnp.maximum(jnp.dot(mean.astype(jnp.bfloat16), params["w3d"],
                               preferred_element_type=jnp.float32), 0.0)
    final = jnp.dot(feat.astype(jnp.bfloat16), params["wc"],
                    preferred_element_type=jnp.float32) + params["bc"]
    return TFE_out, final, emo_visual, id_visual


# --------------------------------------------------------------------------
# Pure-JAX reference (same bf16 casting) -- correctness guard for the kernel.
# --------------------------------------------------------------------------
def reference_forward(x_nchw, params, num_segments, num_classes):
    N, C, H, W = x_nchw.shape
    B = N // num_segments
    P = H * W
    x = jnp.pad(x_nchw.reshape(N, C, P).astype(jnp.bfloat16),
                ((0, 0), (0, CIN_PAD - C), (0, 0)))
    (wse, bse, wsi, bsi,
     w1e, b1e, w2e, b2e, w3e, b3e,
     w1i, b1i, w2i, b2i, w3i, b3i) = params["fused"]

    def cbr(h, w, b, dt):
        z = jnp.einsum("oc,ncp->nop", w, h, preferred_element_type=jnp.float32)
        return jnp.maximum(z + b[None], 0.0).astype(dt)

    h0e = cbr(x, wse, bse, jnp.bfloat16)
    h1e = cbr(h0e, w1e, b1e, jnp.bfloat16)
    h2e = cbr(h1e, w2e, b2e, jnp.bfloat16)
    h3e = cbr(h2e, w3e, b3e, jnp.float32)
    h0i = cbr(x, wsi, bsi, jnp.bfloat16)
    h1i = cbr(h0i, w1i, b1i, jnp.bfloat16)
    h2i = cbr(h1i, w2i, b2i, jnp.bfloat16)
    h3i = cbr(h2i, w3i, b3i, jnp.float32)
    tfe = h3e - h3i
    TFE_out = tfe.astype(jnp.bfloat16).reshape(N, CFEAT, H, W)
    mean = tfe.reshape(B, num_segments, CFEAT, P).mean(axis=(1, 3))
    feat = jnp.maximum(jnp.dot(mean.astype(jnp.bfloat16), params["w3d"],
                               preferred_element_type=jnp.float32), 0.0)
    final = jnp.dot(feat.astype(jnp.bfloat16), params["wc"],
                    preferred_element_type=jnp.float32) + params["bc"]
    emo_visual = h0e.reshape(N, CFEAT, H, W)
    id_visual = h0i.reshape(N, CFEAT, H, W)
    return TFE_out, final, emo_visual, id_visual


if __name__ == "__main__":
    num_classes = 7
    num_segments = 4
    batch = 2
    N = batch * num_segments        # frames stacked along batch, PyTorch-style
    H = W = 16

    key = jax.random.PRNGKey(0)
    pkey, xkey = jax.random.split(key)
    params = init_params(pkey, num_classes)
    x = jax.random.normal(xkey, (N, CIN, H, W), jnp.float32)   # NCHW input

    fwd = jax.jit(functools.partial(emo_id_forward,
                                    num_segments=num_segments,
                                    num_classes=num_classes,
                                    with_visuals=True))
    TFE_out, final, emo_visual, id_visual = jax.block_until_ready(fwd(x, params))

    assert TFE_out.shape == (N, CFEAT, H, W)
    assert emo_visual.shape == (N, CFEAT, H, W)
    assert id_visual.shape == (N, CFEAT, H, W)
    assert final.shape == (batch, num_classes)
    assert bool(jnp.all(jnp.isfinite(final)))

    # Correctness vs. a pure-JAX reference using identical bf16 casting.
    TFE_r, final_r, emo_r, id_r = reference_forward(x, params, num_segments,
                                                    num_classes)

    def maxdiff(a, b):
        return float(jnp.max(jnp.abs(a.astype(jnp.float32) - b.astype(jnp.float32))))

    assert maxdiff(final, final_r) < 5e-2
    assert maxdiff(TFE_out, TFE_r) < 5e-2
    assert maxdiff(emo_visual, emo_r) < 5e-2
    assert maxdiff(id_visual, id_r) < 5e-2

    # Visual-free path (drops ~2/3 of the kernel's HBM writes) must agree.
    fwd_nv = jax.jit(functools.partial(emo_id_forward,
                                       num_segments=num_segments,
                                       num_classes=num_classes,
                                       with_visuals=False))
    TFE_nv, final_nv, _, _ = jax.block_until_ready(fwd_nv(x, params))
    assert maxdiff(TFE_nv, TFE_out) < 1e-6
    assert maxdiff(final_nv, final) < 1e-5

    print("KERNEL_OK")
</pallas_src>

<mosaic_0001>
module attributes {stable_mosaic.version = 11 : i64} {
  func.func @kernel(%arg0: i32, %arg1: i32, %arg2: memref<1x8x256xbf16, #tpu.memory_space<vmem>>, %arg3: memref<128x8xbf16, #tpu.memory_space<vmem>>, %arg4: memref<128x1xf32, #tpu.memory_space<vmem>>, %arg5: memref<128x8xbf16, #tpu.memory_space<vmem>>, %arg6: memref<128x1xf32, #tpu.memory_space<vmem>>, %arg7: memref<64x128xbf16, #tpu.memory_space<vmem>>, %arg8: memref<64x1xf32, #tpu.memory_space<vmem>>, %arg9: memref<64x64xbf16, #tpu.memory_space<vmem>>, %arg10: memref<64x1xf32, #tpu.memory_space<vmem>>, %arg11: memref<128x64xbf16, #tpu.memory_space<vmem>>, %arg12: memref<128x1xf32, #tpu.memory_space<vmem>>, %arg13: memref<64x128xbf16, #tpu.memory_space<vmem>>, %arg14: memref<64x1xf32, #tpu.memory_space<vmem>>, %arg15: memref<64x64xbf16, #tpu.memory_space<vmem>>, %arg16: memref<64x1xf32, #tpu.memory_space<vmem>>, %arg17: memref<128x64xbf16, #tpu.memory_space<vmem>>, %arg18: memref<128x1xf32, #tpu.memory_space<vmem>>, %arg19: memref<1x128x256xbf16, #tpu.memory_space<vmem>>, %arg20: memref<1x128x256xbf16, #tpu.memory_space<vmem>>, %arg21: memref<1x128x256xbf16, #tpu.memory_space<vmem>>, %arg22: memref<1x128x1xf32, #tpu.memory_space<vmem>>) attributes {dimension_semantics = [#tpu.dimension_semantics<parallel>, #tpu.dimension_semantics<arbitrary>], iteration_bounds = array<i64: 8, 1>, scalar_prefetch = 0 : i64, scratch_operands = 0 : i64, tpu.core_type = #tpu.core_type<tc>, window_params = [{transform_indices = @transform_0, window_bounds = array<i64: 1, 8, 256>}, {pipeline_mode = #tpu.pipeline_mode<synchronous>, transform_indices = @transform_1, window_bounds = array<i64: 128, 8>}, {pipeline_mode = #tpu.pipeline_mode<synchronous>, transform_indices = @transform_2, window_bounds = array<i64: 128, 1>}, {pipeline_mode = #tpu.pipeline_mode<synchronous>, transform_indices = @transform_3, window_bounds = array<i64: 128, 8>}, {pipeline_mode = #tpu.pipeline_mode<synchronous>, transform_indices = @transform_4, window_bounds = array<i64: 128, 1>}, {pipeline_mode = #tpu.pipeline_mode<synchronous>, transform_indices = @transform_5, window_bounds = array<i64: 64, 128>}, {pipeline_mode = #tpu.pipeline_mode<synchronous>, transform_indices = @transform_6, window_bounds = array<i64: 64, 1>}, {pipeline_mode = #tpu.pipeline_mode<synchronous>, transform_indices = @transform_7, window_bounds = array<i64: 64, 64>}, {pipeline_mode = #tpu.pipeline_mode<synchronous>, transform_indices = @transform_8, window_bounds = array<i64: 64, 1>}, {pipeline_mode = #tpu.pipeline_mode<synchronous>, transform_indices = @transform_9, window_bounds = array<i64: 128, 64>}, {pipeline_mode = #tpu.pipeline_mode<synchronous>, transform_indices = @transform_10, window_bounds = array<i64: 128, 1>}, {pipeline_mode = #tpu.pipeline_mode<synchronous>, transform_indices = @transform_11, window_bounds = array<i64: 64, 128>}, {pipeline_mode = #tpu.pipeline_mode<synchronous>, transform_indices = @transform_12, window_bounds = array<i64: 64, 1>}, {pipeline_mode = #tpu.pipeline_mode<synchronous>, transform_indices = @transform_13, window_bounds = array<i64: 64, 64>}, {pipeline_mode = #tpu.pipeline_mode<synchronous>, transform_indices = @transform_14, window_bounds = array<i64: 64, 1>}, {pipeline_mode = #tpu.pipeline_mode<synchronous>, transform_indices = @transform_15, window_bounds = array<i64: 128, 64>}, {pipeline_mode = #tpu.pipeline_mode<synchronous>, transform_indices = @transform_16, window_bounds = array<i64: 128, 1>}, {transform_indices = @transform_17, window_bounds = array<i64: 1, 128, 256>}, {transform_indices = @transform_18, window_bounds = array<i64: 1, 128, 256>}, {transform_indices = @transform_19, window_bounds = array<i64: 1, 128, 256>}, {transform_indices = @transform_20, window_bounds = array<i64: 1, 128, 1>}]} {
    %c0_i32 = arith.constant 0 : i32
    %0 = arith.cmpi eq, %arg1, %c0_i32 : i32
    %1 = arith.extui %0 : i1 to i32
    %c0_i32_0 = arith.constant 0 : i32
    %2 = arith.cmpi ne, %1, %c0_i32_0 : i32
    scf.if %2 {
      %cst_66 = arith.constant 0.000000e+00 : f32
      %86 = vector.broadcast %cst_66 : f32 to vector<128x1xf32>
      %c0_67 = arith.constant 0 : index
      %c0_68 = arith.constant 0 : index
      %c0_69 = arith.constant 0 : index
      %87 = vector.load %arg22[%c0_67, %c0_68, %c0_69] : memref<1x128x1xf32, #tpu.memory_space<vmem>>, vector<1x128x1xf32>
      %88 = vector.shape_cast %87 : vector<1x128x1xf32> to vector<128x1xf32>
      %89 = vector.shape_cast %86 : vector<128x1xf32> to vector<1x128x1xf32>
      tpu.vector_store %arg22[%c0_67, %c0_68, %c0_69], %89 {strides = array<i32>} : memref<1x128x1xf32, #tpu.memory_space<vmem>>, vector<1x128x1xf32>,
    } else {
    }
    %c0 = arith.constant 0 : index
    %c0_1 = arith.constant 0 : index
    %c0_2 = arith.constant 0 : index
    %3 = vector.load %arg2[%c0, %c0_1, %c0_2] : memref<1x8x256xbf16, #tpu.memory_space<vmem>>, vector<1x8x256xbf16>
    %4 = vector.shape_cast %3 : vector<1x8x256xbf16> to vector<8x256xbf16>
    %c0_3 = arith.constant 0 : index
    %c0_4 = arith.constant 0 : index
    %5 = vector.load %arg3[%c0_3, %c0_4] : memref<128x8xbf16, #tpu.memory_space<vmem>>, vector<128x8xbf16>
    %cst = arith.constant dense<0.000000e+00> : vector<128x256xf32>
    %6 = tpu.matmul %5, %4, %cst {dimension_numbers = #tpu.dot_dimension_numbers<[1], [0], [0], [1], [0, 0, 1, 1], [], []>} : vector<128x8xbf16>, vector<8x256xbf16>, vector<128x256xf32> -> vector<128x256xf32>
    %c0_5 = arith.constant 0 : index
    %c0_6 = arith.constant 0 : index
    %7 = vector.load %arg4[%c0_5, %c0_6] : memref<128x1xf32, #tpu.memory_space<vmem>>, vector<128x1xf32>
    %8 = vector.broadcast %7 : vector<128x1xf32> to vector<128x256xf32>
    %9 = arith.addf %6, %8 : vector<128x256xf32>
    %cst_7 = arith.constant 0.000000e+00 : f32
    %10 = vector.broadcast %cst_7 : f32 to vector<128x256xf32>
    %11 = arith.maximumf %9, %10 : vector<128x256xf32>
    %12 = arith.truncf %11 : vector<128x256xf32> to vector<128x256xbf16>
    %c0_8 = arith.constant 0 : index
    %c0_9 = arith.constant 0 : index
    %c0_10 = arith.constant 0 : index
    %13 = vector.load %arg19[%c0_8, %c0_9, %c0_10] : memref<1x128x256xbf16, #tpu.memory_space<vmem>>, vector<1x128x256xbf16>
    %14 = vector.shape_cast %13 : vector<1x128x256xbf16> to vector<128x256xbf16>
    %15 = vector.shape_cast %12 : vector<128x256xbf16> to vector<1x128x256xbf16>
    tpu.vector_store %arg19[%c0_8, %c0_9, %c0_10], %15 {strides = array<i32>} : memref<1x128x256xbf16, #tpu.memory_space<vmem>>, vector<1x128x256xbf16>,
    %c0_11 = arith.constant 0 : index
    %c0_12 = arith.constant 0 : index
    %16 = vector.load %arg7[%c0_11, %c0_12] : memref<64x128xbf16, #tpu.memory_space<vmem>>, vector<64x128xbf16>
    %cst_13 = arith.constant dense<0.000000e+00> : vector<64x256xf32>
    %17 = tpu.matmul %16, %12, %cst_13 {dimension_numbers = #tpu.dot_dimension_numbers<[1], [0], [0], [1], [0, 0, 1, 1], [], []>} : vector<64x128xbf16>, vector<128x256xbf16>, vector<64x256xf32> -> vector<64x256xf32>
    %c0_14 = arith.constant 0 : index
    %c0_15 = arith.constant 0 : index
    %18 = vector.load %arg8[%c0_14, %c0_15] : memref<64x1xf32, #tpu.memory_space<vmem>>, vector<64x1xf32>
    %19 = vector.broadcast %18 : vector<64x1xf32> to vector<64x256xf32>
    %20 = arith.addf %17, %19 : vector<64x256xf32>
    %cst_16 = arith.constant 0.000000e+00 : f32
    %21 = vector.broadcast %cst_16 : f32 to vector<64x256xf32>
    %22 = arith.maximumf %20, %21 : vector<64x256xf32>
    %23 = arith.truncf %22 : vector<64x256xf32> to vector<64x256xbf16>
    %c0_17 = arith.constant 0 : index
    %c0_18 = arith.constant 0 : index
    %24 = vector.load %arg9[%c0_17, %c0_18] : memref<64x64xbf16, #tpu.memory_space<vmem>>, vector<64x64xbf16>
    %cst_19 = arith.constant dense<0.000000e+00> : vector<64x256xf32>
    %25 = tpu.matmul %24, %23, %cst_19 {dimension_numbers = #tpu.dot_dimension_numbers<[1], [0], [0], [1], [0, 0, 1, 1], [], []>} : vector<64x64xbf16>, vector<64x256xbf16>, vector<64x256xf32> -> vector<64x256xf32>
    %c0_20 = arith.constant 0 : index
    %c0_21 = arith.constant 0 : index
    %26 = vector.load %arg10[%c0_20, %c0_21] : memref<64x1xf32, #tpu.memory_space<vmem>>, vector<64x1xf32>
    %27 = vector.broadcast %26 : vector<64x1xf32> to vector<64x256xf32>
    %28 = arith.addf %25, %27 : vector<64x256xf32>
    %cst_22 = arith.constant 0.000000e+00 : f32
    %29 = vector.broadcast %cst_22 : f32 to vector<64x256xf32>
    %30 = arith.maximumf %28, %29 : vector<64x256xf32>
    %31 = arith.truncf %30 : vector<64x256xf32> to vector<64x256xbf16>
    %c0_23 = arith.constant 0 : index
    %c0_24 = arith.constant 0 : index
    %32 = vector.load %arg11[%c0_23, %c0_24] : memref<128x64xbf16, #tpu.memory_space<vmem>>, vector<128x64xbf16>
    %cst_25 = arith.constant dense<0.000000e+00> : vector<128x256xf32>
    %33 = tpu.matmul %32, %31, %cst_25 {dimension_numbers = #tpu.dot_dimension_numbers<[1], [0], [0], [1], [0, 0, 1, 1], [], []>} : vector<128x64xbf16>, vector<64x256xbf16>, vector<128x256xf32> -> vector<128x256xf32>
    %c0_26 = arith.constant 0 : index
    %c0_27 = arith.constant 0 : index
    %34 = vector.load %arg12[%c0_26, %c0_27] : memref<128x1xf32, #tpu.memory_space<vmem>>, vector<128x1xf32>
    %35 = vector.broadcast %34 : vector<128x1xf32> to vector<128x256xf32>
    %36 = arith.addf %33, %35 : vector<128x256xf32>
    %cst_28 = arith.constant 0.000000e+00 : f32
    %37 = vector.broadcast %cst_28 : f32 to vector<128x256xf32>
    %38 = arith.maximumf %36, %37 : vector<128x256xf32>
    %c0_29 = arith.constant 0 : index
    %c0_30 = arith.constant 0 : index
    %39 = vector.load %arg5[%c0_29, %c0_30] : memref<128x8xbf16, #tpu.memory_space<vmem>>, vector<128x8xbf16>
    %cst_31 = arith.constant dense<0.000000e+00> : vector<128x256xf32>
    %40 = tpu.matmul %39, %4, %cst_31 {dimension_numbers = #tpu.dot_dimension_numbers<[1], [0], [0], [1], [0, 0, 1, 1], [], []>} : vector<128x8xbf16>, vector<8x256xbf16>, vector<128x256xf32> -> vector<128x256xf32>
    %c0_32 = arith.constant 0 : index
    %c0_33 = arith.constant 0 : index
    %41 = vector.load %arg6[%c0_32, %c0_33] : memref<128x1xf32, #tpu.memory_space<vmem>>, vector<128x1xf32>
    %42 = vector.broadcast %41 : vector<128x1xf32> to vector<128x256xf32>
    %43 = arith.addf %40, %42 : vector<128x256xf32>
    %cst_34 = arith.constant 0.000000e+00 : f32
    %44 = vector.broadcast %cst_34 : f32 to vector<128x256xf32>
    %45 = arith.maximumf %43, %44 : vector<128x256xf32>
    %46 = arith.truncf %45 : vector<128x256xf32> to vector<128x256xbf16>
    %c0_35 = arith.constant 0 : index
    %c0_36 = arith.constant 0 : index
    %c0_37 = arith.constant 0 : index
    %47 = vector.load %arg20[%c0_35, %c0_36, %c0_37] : memref<1x128x256xbf16, #tpu.memory_space<vmem>>, vector<1x128x256xbf16>
    %48 = vector.shape_cast %47 : vector<1x128x256xbf16> to vector<128x256xbf16>
    %49 = vector.shape_cast %46 : vector<128x256xbf16> to vector<1x128x256xbf16>
    tpu.vector_store %arg20[%c0_35, %c0_36, %c0_37], %49 {strides = array<i32>} : memref<1x128x256xbf16, #tpu.memory_space<vmem>>, vector<1x128x256xbf16>,
    %c0_38 = arith.constant 0 : index
    %c0_39 = arith.constant 0 : index
    %50 = vector.load %arg13[%c0_38, %c0_39] : memref<64x128xbf16, #tpu.memory_space<vmem>>, vector<64x128xbf16>
    %cst_40 = arith.constant dense<0.000000e+00> : vector<64x256xf32>
    %51 = tpu.matmul %50, %46, %cst_40 {dimension_numbers = #tpu.dot_dimension_numbers<[1], [0], [0], [1], [0, 0, 1, 1], [], []>} : vector<64x128xbf16>, vector<128x256xbf16>, vector<64x256xf32> -> vector<64x256xf32>
    %c0_41 = arith.constant 0 : index
    %c0_42 = arith.constant 0 : index
    %52 = vector.load %arg14[%c0_41, %c0_42] : memref<64x1xf32, #tpu.memory_space<vmem>>, vector<64x1xf32>
    %53 = vector.broadcast %52 : vector<64x1xf32> to vector<64x256xf32>
    %54 = arith.addf %51, %53 : vector<64x256xf32>
    %cst_43 = arith.constant 0.000000e+00 : f32
    %55 = vector.broadcast %cst_43 : f32 to vector<64x256xf32>
    %56 = arith.maximumf %54, %55 : vector<64x256xf32>
    %57 = arith.truncf %56 : vector<64x256xf32> to vector<64x256xbf16>
    %c0_44 = arith.constant 0 : index
    %c0_45 = arith.constant 0 : index
    %58 = vector.load %arg15[%c0_44, %c0_45] : memref<64x64xbf16, #tpu.memory_space<vmem>>, vector<64x64xbf16>
    %cst_46 = arith.constant dense<0.000000e+00> : vector<64x256xf32>
    %59 = tpu.matmul %58, %57, %cst_46 {dimension_numbers = #tpu.dot_dimension_numbers<[1], [0], [0], [1], [0, 0, 1, 1], [], []>} : vector<64x64xbf16>, vector<64x256xbf16>, vector<64x256xf32> -> vector<64x256xf32>
    %c0_47 = arith.constant 0 : index
    %c0_48 = arith.constant 0 : index
    %60 = vector.load %arg16[%c0_47, %c0_48] : memref<64x1xf32, #tpu.memory_space<vmem>>, vector<64x1xf32>
    %61 = vector.broadcast %60 : vector<64x1xf32> to vector<64x256xf32>
    %62 = arith.addf %59, %61 : vector<64x256xf32>
    %cst_49 = arith.constant 0.000000e+00 : f32
    %63 = vector.broadcast %cst_49 : f32 to vector<64x256xf32>
    %64 = arith.maximumf %62, %63 : vector<64x256xf32>
    %65 = arith.truncf %64 : vector<64x256xf32> to vector<64x256xbf16>
    %c0_50 = arith.constant 0 : index
    %c0_51 = arith.constant 0 : index
    %66 = vector.load %arg17[%c0_50, %c0_51] : memref<128x64xbf16, #tpu.memory_space<vmem>>, vector<128x64xbf16>
    %cst_52 = arith.constant dense<0.000000e+00> : vector<128x256xf32>
    %67 = tpu.matmul %66, %65, %cst_52 {dimension_numbers = #tpu.dot_dimension_numbers<[1], [0], [0], [1], [0, 0, 1, 1], [], []>} : vector<128x64xbf16>, vector<64x256xbf16>, vector<128x256xf32> -> vector<128x256xf32>
    %c0_53 = arith.constant 0 : index
    %c0_54 = arith.constant 0 : index
    %68 = vector.load %arg18[%c0_53, %c0_54] : memref<128x1xf32, #tpu.memory_space<vmem>>, vector<128x1xf32>
    %69 = vector.broadcast %68 : vector<128x1xf32> to vector<128x256xf32>
    %70 = arith.addf %67, %69 : vector<128x256xf32>
    %cst_55 = arith.constant 0.000000e+00 : f32
    %71 = vector.broadcast %cst_55 : f32 to vector<128x256xf32>
    %72 = arith.maximumf %70, %71 : vector<128x256xf32>
    %73 = arith.subf %38, %72 : vector<128x256xf32>
    %74 = arith.truncf %73 : vector<128x256xf32> to vector<128x256xbf16>
    %c0_56 = arith.constant 0 : index
    %c0_57 = arith.constant 0 : index
    %c0_58 = arith.constant 0 : index
    %75 = vector.load %arg21[%c0_56, %c0_57, %c0_58] : memref<1x128x256xbf16, #tpu.memory_space<vmem>>, vector<1x128x256xbf16>
    %76 = vector.shape_cast %75 : vector<1x128x256xbf16> to vector<128x256xbf16>
    %77 = vector.shape_cast %74 : vector<128x256xbf16> to vector<1x128x256xbf16>
    tpu.vector_store %arg21[%c0_56, %c0_57, %c0_58], %77 {strides = array<i32>} : memref<1x128x256xbf16, #tpu.memory_space<vmem>>, vector<1x128x256xbf16>,
    %c0_59 = arith.constant 0 : index
    %c0_60 = arith.constant 0 : index
    %c0_61 = arith.constant 0 : index
    %78 = vector.load %arg22[%c0_59, %c0_60, %c0_61] : memref<1x128x1xf32, #tpu.memory_space<vmem>>, vector<1x128x1xf32>
    %79 = vector.shape_cast %78 : vector<1x128x1xf32> to vector<128x1xf32>
    %cst_62 = arith.constant dense<0.000000e+00> : vector<128xf32>
    %80 = vector.multi_reduction <add>, %73, %cst_62 [1] : vector<128x256xf32> to vector<128xf32>
    %81 = vector.shape_cast %80 : vector<128xf32> to vector<128x1xf32>
    %82 = arith.addf %79, %81 : vector<128x1xf32>
    %c0_63 = arith.constant 0 : index
    %c0_64 = arith.constant 0 : index
    %c0_65 = arith.constant 0 : index
    %83 = vector.load %arg22[%c0_63, %c0_64, %c0_65] : memref<1x128x1xf32, #tpu.memory_space<vmem>>, vector<1x128x1xf32>
    %84 = vector.shape_cast %83 : vector<1x128x1xf32> to vector<128x1xf32>
    %85 = vector.shape_cast %82 : vector<128x1xf32> to vector<1x128x1xf32>
    tpu.vector_store %arg22[%c0_63, %c0_64, %c0_65], %85 {strides = array<i32>} : memref<1x128x1xf32, #tpu.memory_space<vmem>>, vector<1x128x1xf32>,
    return
  }
  func.func @transform_0(%arg0: i32, %arg1: i32) -> (i32, i32, i32) {
    %c0_i32 = arith.constant 0 : i32
    %c0_i32_0 = arith.constant 0 : i32
    return %arg0, %c0_i32, %arg1 : i32, i32, i32
  }
  func.func @transform_1(%arg0: i32, %arg1: i32) -> (i32, i32) {
    %c0_i32 = arith.constant 0 : i32
    %c0_i32_0 = arith.constant 0 : i32
    %c0_i32_1 = arith.constant 0 : i32
    return %c0_i32, %c0_i32_0 : i32, i32
  }
  func.func @transform_2(%arg0: i32, %arg1: i32) -> (i32, i32) {
    %c0_i32 = arith.constant 0 : i32
    %c0_i32_0 = arith.constant 0 : i32
    %c0_i32_1 = arith.constant 0 : i32
    return %c0_i32, %c0_i32_0 : i32, i32
  }
  func.func @transform_3(%arg0: i32, %arg1: i32) -> (i32, i32) {
    %c0_i32 = arith.constant 0 : i32
    %c0_i32_0 = arith.constant 0 : i32
    %c0_i32_1 = arith.constant 0 : i32
    return %c0_i32, %c0_i32_0 : i32, i32
  }
  func.func @transform_4(%arg0: i32, %arg1: i32) -> (i32, i32) {
    %c0_i32 = arith.constant 0 : i32
    %c0_i32_0 = arith.constant 0 : i32
    %c0_i32_1 = arith.constant 0 : i32
    return %c0_i32, %c0_i32_0 : i32, i32
  }
  func.func @transform_5(%arg0: i32, %arg1: i32) -> (i32, i32) {
    %c0_i32 = arith.constant 0 : i32
    %c0_i32_0 = arith.constant 0 : i32
    %c0_i32_1 = arith.constant 0 : i32
    return %c0_i32, %c0_i32_0 : i32, i32
  }
  func.func @transform_6(%arg0: i32, %arg1: i32) -> (i32, i32) {
    %c0_i32 = arith.constant 0 : i32
    %c0_i32_0 = arith.constant 0 : i32
    %c0_i32_1 = arith.constant 0 : i32
    return %c0_i32, %c0_i32_0 : i32, i32
  }
  func.func @transform_7(%arg0: i32, %arg1: i32) -> (i32, i32) {
    %c0_i32 = arith.constant 0 : i32
    %c0_i32_0 = arith.constant 0 : i32
    %c0_i32_1 = arith.constant 0 : i32
    return %c0_i32, %c0_i32_0 : i32, i32
  }
  func.func @transform_8(%arg0: i32, %arg1: i32) -> (i32, i32) {
    %c0_i32 = arith.constant 0 : i32
    %c0_i32_0 = arith.constant 0 : i32
    %c0_i32_1 = arith.constant 0 : i32
    return %c0_i32, %c0_i32_0 : i32, i32
  }
  func.func @transform_9(%arg0: i32, %arg1: i32) -> (i32, i32) {
    %c0_i32 = arith.constant 0 : i32
    %c0_i32_0 = arith.constant 0 : i32
    %c0_i32_1 = arith.constant 0 : i32
    return %c0_i32, %c0_i32_0 : i32, i32
  }
  func.func @transform_10(%arg0: i32, %arg1: i32) -> (i32, i32) {
    %c0_i32 = arith.constant 0 : i32
    %c0_i32_0 = arith.constant 0 : i32
    %c0_i32_1 = arith.constant 0 : i32
    return %c0_i32, %c0_i32_0 : i32, i32
  }
  func.func @transform_11(%arg0: i32, %arg1: i32) -> (i32, i32) {
    %c0_i32 = arith.constant 0 : i32
    %c0_i32_0 = arith.constant 0 : i32
    %c0_i32_1 = arith.constant 0 : i32
    return %c0_i32, %c0_i32_0 : i32, i32
  }
  func.func @transform_12(%arg0: i32, %arg1: i32) -> (i32, i32) {
    %c0_i32 = arith.constant 0 : i32
    %c0_i32_0 = arith.constant 0 : i32
    %c0_i32_1 = arith.constant 0 : i32
    return %c0_i32, %c0_i32_0 : i32, i32
  }
  func.func @transform_13(%arg0: i32, %arg1: i32) -> (i32, i32) {
    %c0_i32 = arith.constant 0 : i32
    %c0_i32_0 = arith.constant 0 : i32
    %c0_i32_1 = arith.constant 0 : i32
    return %c0_i32, %c0_i32_0 : i32, i32
  }
  func.func @transform_14(%arg0: i32, %arg1: i32) -> (i32, i32) {
    %c0_i32 = arith.constant 0 : i32
    %c0_i32_0 = arith.constant 0 : i32
    %c0_i32_1 = arith.constant 0 : i32
    return %c0_i32, %c0_i32_0 : i32, i32
  }
  func.func @transform_15(%arg0: i32, %arg1: i32) -> (i32, i32) {
    %c0_i32 = arith.constant 0 : i32
    %c0_i32_0 = arith.constant 0 : i32
    %c0_i32_1 = arith.constant 0 : i32
    return %c0_i32, %c0_i32_0 : i32, i32
  }
  func.func @transform_16(%arg0: i32, %arg1: i32) -> (i32, i32) {
    %c0_i32 = arith.constant 0 : i32
    %c0_i32_0 = arith.constant 0 : i32
    %c0_i32_1 = arith.constant 0 : i32
    return %c0_i32, %c0_i32_0 : i32, i32
  }
  func.func @transform_17(%arg0: i32, %arg1: i32) -> (i32, i32, i32) {
    %c0_i32 = arith.constant 0 : i32
    %c0_i32_0 = arith.constant 0 : i32
    return %arg0, %c0_i32, %arg1 : i32, i32, i32
  }
  func.func @transform_18(%arg0: i32, %arg1: i32) -> (i32, i32, i32) {
    %c0_i32 = arith.constant 0 : i32
    %c0_i32_0 = arith.constant 0 : i32
    return %arg0, %c0_i32, %arg1 : i32, i32, i32
  }
  func.func @transform_19(%arg0: i32, %arg1: i32) -> (i32, i32, i32) {
    %c0_i32 = arith.constant 0 : i32
    %c0_i32_0 = arith.constant 0 : i32
    return %arg0, %c0_i32, %arg1 : i32, i32, i32
  }
  func.func @transform_20(%arg0: i32, %arg1: i32) -> (i32, i32, i32) {
    %c0_i32 = arith.constant 0 : i32
    %c0_i32_0 = arith.constant 0 : i32
    %c0_i32_1 = arith.constant 0 : i32
    return %arg0, %c0_i32, %c0_i32_0 : i32, i32, i32
  }
}

</mosaic_0001>

<llo_original>
// kernel: emo_id_forward.1
$region0: #{emo_id_forward.1}
  #allocation0 [shape = 'u32[]', space=smem, size = 0x4, offset = 0x4, fixed_abs, tag = 'smem constant byte address 0x4 - core index']
  #allocation1 [shape = 'u32[144,128]{1,0:T(1,128)}', space=vmem, size = 0x12000, scoped, tag = 'internal scratch']
  %s0 = inlined_call_operand.vmem [shape: bf16[8,8,256], index: 0, kind: input, shape index: {}]
  %s1 = inlined_call_operand.vmem [shape: bf16[128,8], index: 1, kind: input, shape index: {}]
  %s2 = inlined_call_operand.vmem [shape: f32[128,1], index: 2, kind: input, shape index: {}]
  %s3 = inlined_call_operand.vmem [shape: bf16[128,8], index: 3, kind: input, shape index: {}]
  %s4 = inlined_call_operand.vmem [shape: f32[128,1], index: 4, kind: input, shape index: {}]
  %s5 = inlined_call_operand.vmem [shape: bf16[64,128], index: 5, kind: input, shape index: {}]
  %s6 = inlined_call_operand.vmem [shape: f32[64,1], index: 6, kind: input, shape index: {}]
  %s7 = inlined_call_operand.vmem [shape: bf16[64,64], index: 7, kind: input, shape index: {}]
  %s8 = inlined_call_operand.vmem [shape: f32[64,1], index: 8, kind: input, shape index: {}]
  %s9 = inlined_call_operand.vmem [shape: bf16[128,64], index: 9, kind: input, shape index: {}]
  %s10 = inlined_call_operand.vmem [shape: f32[128,1], index: 10, kind: input, shape index: {}]
  %s11 = inlined_call_operand.vmem [shape: bf16[64,128], index: 11, kind: input, shape index: {}]
  %s12 = inlined_call_operand.vmem [shape: f32[64,1], index: 12, kind: input, shape index: {}]
  %s13 = inlined_call_operand.vmem [shape: bf16[64,64], index: 13, kind: input, shape index: {}]
  %s14 = inlined_call_operand.vmem [shape: f32[64,1], index: 14, kind: input, shape index: {}]
  %s15 = inlined_call_operand.vmem [shape: bf16[128,64], index: 15, kind: input, shape index: {}]
  %s16 = inlined_call_operand.vmem [shape: f32[128,1], index: 16, kind: input, shape index: {}]
  %s17 = inlined_call_operand.vmem [shape: bf16[8,128,256], index: 17, kind: output, shape index: {0}]
  %s18 = inlined_call_operand.vmem [shape: bf16[8,128,256], index: 18, kind: output, shape index: {1}]
  %s19 = inlined_call_operand.vmem [shape: bf16[8,128,256], index: 19, kind: output, shape index: {2}]
  %s20 = inlined_call_operand.vmem [shape: f32[8,128,1], index: 20, kind: output, shape index: {3}]
  %21 = xla_tuple %s17, %s18, %s19, %s20
  %s22 = sld [smem:[#allocation0]]
  $region129: #{emo_id_forward.1} parent=0
    _
  %s24 = ssub.s32 1, %s22
  %s25 = scalar_select 0, %s24, %s22
  loop: start=0, step=1, limit=10
  $region2: #{emo_id_forward.1} parent=0 // loop_pre_header
    _
  $region3: #{emo_id_forward.1} parent=0 // loop_header
    %s27 = sphi 0, %s31
    %p28 = scmp.ge.s32.totalorder %s27, 10
    %s34 = sphi 0, %s46
    %s35 = sphi 0, %s42
    %s36 = sphi 0, %s34
    %s37 = sphi 0, %s35
    %s38 = sphi 0, %s36
    %s39 = sphi 0, %s37
    %s51 = sphi 0, %s53
    %s54 = sphi 0, %s51
    %s55 = sphi 0, %s54
    %s71 = sphi 0, %s55
    %s75 = sphi 0, %s75
    %s77 = sphi 0, %s75
    %s78 = sphi 0, %s77
    %s92 = sphi 0, %s78
    %s96 = sphi 0, %s96
    %s98 = sphi 0, %s96
    %s99 = sphi 0, %s98
    %s113 = sphi 0, %s99
    %s117 = sphi 0, %s117
    %s119 = sphi 0, %s117
    %s120 = sphi 0, %s119
    %s134 = sphi 0, %s120
    %s138 = sphi 0, %s138
    %s140 = sphi 0, %s138
    %s141 = sphi 0, %s140
    %s155 = sphi 0, %s141
    %s159 = sphi 0, %s159
    %s161 = sphi 0, %s159
    %s162 = sphi 0, %s161
    %s176 = sphi 0, %s162
    %s180 = sphi 0, %s180
    %s182 = sphi 0, %s180
    %s183 = sphi 0, %s182
    %s197 = sphi 0, %s183
    %s201 = sphi 0, %s201
    %s203 = sphi 0, %s201
    %s204 = sphi 0, %s203
    %s218 = sphi 0, %s204
    %s222 = sphi 0, %s222
    %s224 = sphi 0, %s222
    %s225 = sphi 0, %s224
    %s239 = sphi 0, %s225
    %s243 = sphi 0, %s243
    %s245 = sphi 0, %s243
    %s246 = sphi 0, %s245
    %s260 = sphi 0, %s246
    %s264 = sphi 0, %s264
    %s266 = sphi 0, %s264
    %s267 = sphi 0, %s266
    %s281 = sphi 0, %s267
    %s285 = sphi 0, %s285
    %s287 = sphi 0, %s285
    %s288 = sphi 0, %s287
    %s302 = sphi 0, %s288
    %s306 = sphi 0, %s306
    %s308 = sphi 0, %s306
    %s309 = sphi 0, %s308
    %s323 = sphi 0, %s309
    %s327 = sphi 0, %s327
    %s329 = sphi 0, %s327
    %s330 = sphi 0, %s329
    %s344 = sphi 0, %s330
    %s348 = sphi 0, %s348
    %s350 = sphi 0, %s348
    %s351 = sphi 0, %s350
    %s365 = sphi 0, %s351
    %s369 = sphi 0, %s369
    %s371 = sphi 0, %s369
    %s372 = sphi 0, %s371
    %s386 = sphi 0, %s372
    %s390 = sphi 0, %s390
    %s392 = sphi 0, %s390
    %s393 = sphi 0, %s392
    %s407 = sphi 0, %s393
    %s415 = sphi 0, %s417
    %s418 = sphi 0, %s415
    %s419 = sphi 0, %s418
    %s435 = sphi 0, %s419
    %s443 = sphi 0, %s445
    %s446 = sphi 0, %s443
    %s447 = sphi 0, %s446
    %s463 = sphi 0, %s447
    %s471 = sphi 0, %s473
    %s474 = sphi 0, %s471
    %s475 = sphi 0, %s474
    %s491 = sphi 0, %s475
    %s497 = sphi 0, %s499
    %s500 = sphi 0, %s497
    %s501 = sphi 0, %s500
    %s517 = sphi 0, %s501
  $region4: #{emo_id_forward.1} parent=0 // loop_header_branch
    %30 = sbr.rel (%p28) target = $region8
  $region5: #{emo_id_forward.1} parent=0 // loop_body
    %s32 = ssub.s32 %s27, 1
    %s33 = ssub.s32 %s27, 2
    %s40 = sadd.s32 1, %s35
    %p41 = scmp.ge.s32.totalorder %s40, 1
    %s42 = scalar_select %p41, 0, %s40
    %s43 = sadd.s32 1, %s34
    %s44 = scalar_select %p41, %s43, %s34
    %p45 = scmp.ge.s32.totalorder %s44, 8
    %s46 = scalar_select %p45, 0, %s44
    %s47 = ssub.s32 %s34, %s46
    %s48 = ssub.s32 %s35, %s42
    %s49 = sor.u32 %s47, %s48
    %p50 = scmp.eq.s32.totalorder %s49, 0
    %s52 = sadd.s32 %s51, 1
    %s53 = scalar_select %p50, %s51, %s52
    %p56 = pneg %p50
    %p57 = scmp.eq.s32.totalorder %s27, 7
    %p58 = por %p56, %p57
    %p59 = scmp.ne.s32.totalorder %s51, %s54
    %p60 = scmp.eq.s32.totalorder %s27, 0
    %p61 = por %p59, %p60
    %p62 = scmp.ne.s32.totalorder %s51, %s54
    %p63 = scmp.eq.s32.totalorder %s32, 7
    %p64 = por %p62, %p63
    %p65 = scmp.ne.s32.totalorder %s54, %s55
    %p66 = scmp.eq.s32.totalorder %s32, 0
    %p67 = por %p65, %p66
    %p68 = scmp.ne.s32.totalorder %s54, %s55
    %p69 = scmp.eq.s32.totalorder %s33, 7
    %p70 = por %p68, %p69
    %p72 = scmp.ne.s32.totalorder %s55, %s71
    %p73 = scmp.eq.s32.totalorder %s33, 0
    %p74 = por %p72, %p73
    %s76 = sadd.s32 %s75, 1
    %p79 = scmp.eq.s32.totalorder %s27, 7
    %p80 = scmp.ne.s32.totalorder %s75, %s77
    %p81 = scmp.eq.s32.totalorder %s27, 0
    %p82 = por %p80, %p81
    %p83 = scmp.ne.s32.totalorder %s75, %s77
    %p84 = scmp.eq.s32.totalorder %s32, 7
    %p85 = por %p83, %p84
    %p86 = scmp.ne.s32.totalorder %s77, %s78
    %p87 = scmp.eq.s32.totalorder %s32, 0
    %p88 = por %p86, %p87
    %p89 = scmp.ne.s32.totalorder %s77, %s78
    %p90 = scmp.eq.s32.totalorder %s33, 7
    %p91 = por %p89, %p90
    %p93 = scmp.ne.s32.totalorder %s78, %s92
    %p94 = scmp.eq.s32.totalorder %s33, 0
    %p95 = por %p93, %p94
    %s97 = sadd.s32 %s96, 1
    %p100 = scmp.eq.s32.totalorder %s27, 7
    %p101 = scmp.ne.s32.totalorder %s96, %s98
    %p102 = scmp.eq.s32.totalorder %s27, 0
    %p103 = por %p101, %p102
    %p104 = scmp.ne.s32.totalorder %s96, %s98
    %p105 = scmp.eq.s32.totalorder %s32, 7
    %p106 = por %p104, %p105
    %p107 = scmp.ne.s32.totalorder %s98, %s99
    %p108 = scmp.eq.s32.totalorder %s32, 0
    %p109 = por %p107, %p108
    %p110 = scmp.ne.s32.totalorder %s98, %s99
    %p111 = scmp.eq.s32.totalorder %s33, 7
    %p112 = por %p110, %p111
    %p114 = scmp.ne.s32.totalorder %s99, %s113
    %p115 = scmp.eq.s32.totalorder %s33, 0
    %p116 = por %p114, %p115
    %s118 = sadd.s32 %s117, 1
    %p121 = scmp.eq.s32.totalorder %s27, 7
    %p122 = scmp.ne.s32.totalorder %s117, %s119
    %p123 = scmp.eq.s32.totalorder %s27, 0
    %p124 = por %p122, %p123
    %p125 = scmp.ne.s32.totalorder %s117, %s119
    %p126 = scmp.eq.s32.totalorder %s32, 7
    %p127 = por %p125, %p126
    %p128 = scmp.ne.s32.totalorder %s119, %s120
    %p129 = scmp.eq.s32.totalorder %s32, 0
    %p130 = por %p128, %p129
    %p131 = scmp.ne.s32.totalorder %s119, %s120
    %p132 = scmp.eq.s32.totalorder %s33, 7
    %p133 = por %p131, %p132
    %p135 = scmp.ne.s32.totalorder %s120, %s134
    %p136 = scmp.eq.s32.totalorder %s33, 0
    %p137 = por %p135, %p136
    %s139 = sadd.s32 %s138, 1
    %p142 = scmp.eq.s32.totalorder %s27, 7
    %p143 = scmp.ne.s32.totalorder %s138, %s140
    %p144 = scmp.eq.s32.totalorder %s27, 0
    %p145 = por %p143, %p144
    %p146 = scmp.ne.s32.totalorder %s138, %s140
    %p147 = scmp.eq.s32.totalorder %s32, 7
    %p148 = por %p146, %p147
    %p149 = scmp.ne.s32.totalorder %s140, %s141
    %p150 = scmp.eq.s32.totalorder %s32, 0
    %p151 = por %p149, %p150
    %p152 = scmp.ne.s32.totalorder %s140, %s141
    %p153 = scmp.eq.s32.totalorder %s33, 7
    %p154 = por %p152, %p153
    %p156 = scmp.ne.s32.totalorder %s141, %s155
    %p157 = scmp.eq.s32.totalorder %s33, 0
    %p158 = por %p156, %p157
    %s160 = sadd.s32 %s159, 1
    %p163 = scmp.eq.s32.totalorder %s27, 7
    %p164 = scmp.ne.s32.totalorder %s159, %s161
    %p165 = scmp.eq.s32.totalorder %s27, 0
    %p166 = por %p164, %p165
    %p167 = scmp.ne.s32.totalorder %s159, %s161
    %p168 = scmp.eq.s32.totalorder %s32, 7
    %p169 = por %p167, %p168
    %p170 = scmp.ne.s32.totalorder %s161, %s162
    %p171 = scmp.eq.s32.totalorder %s32, 0
    %p172 = por %p170, %p171
    %p173 = scmp.ne.s32.totalorder %s161, %s162
    %p174 = scmp.eq.s32.totalorder %s33, 7
    %p175 = por %p173, %p174
    %p177 = scmp.ne.s32.totalorder %s162, %s176
    %p178 = scmp.eq.s32.totalorder %s33, 0
    %p179 = por %p177, %p178
    %s181 = sadd.s32 %s180, 1
    %p184 = scmp.eq.s32.totalorder %s27, 7
    %p185 = scmp.ne.s32.totalorder %s180, %s182
    %p186 = scmp.eq.s32.totalorder %s27, 0
    %p187 = por %p185, %p186
    %p188 = scmp.ne.s32.totalorder %s180, %s182
    %p189 = scmp.eq.s32.totalorder %s32, 7
    %p190 = por %p188, %p189
    %p191 = scmp.ne.s32.totalorder %s182, %s183
    %p192 = scmp.eq.s32.totalorder %s32, 0
    %p193 = por %p191, %p192
    %p194 = scmp.ne.s32.totalorder %s182, %s183
    %p195 = scmp.eq.s32.totalorder %s33, 7
    %p196 = por %p194, %p195
    %p198 = scmp.ne.s32.totalorder %s183, %s197
    %p199 = scmp.eq.s32.totalorder %s33, 0
    %p200 = por %p198, %p199
    %s202 = sadd.s32 %s201, 1
    %p205 = scmp.eq.s32.totalorder %s27, 7
    %p206 = scmp.ne.s32.totalorder %s201, %s203
    %p207 = scmp.eq.s32.totalorder %s27, 0
    %p208 = por %p206, %p207
    %p209 = scmp.ne.s32.totalorder %s201, %s203
    %p210 = scmp.eq.s32.totalorder %s32, 7
    %p211 = por %p209, %p210
    %p212 = scmp.ne.s32.totalorder %s203, %s204
    %p213 = scmp.eq.s32.totalorder %s32, 0
    %p214 = por %p212, %p213
    %p215 = scmp.ne.s32.totalorder %s203, %s204
    %p216 = scmp.eq.s32.totalorder %s33, 7
    %p217 = por %p215, %p216
    %p219 = scmp.ne.s32.totalorder %s204, %s218
    %p220 = scmp.eq.s32.totalorder %s33, 0
    %p221 = por %p219, %p220
    %s223 = sadd.s32 %s222, 1
    %p226 = scmp.eq.s32.totalorder %s27, 7
    %p227 = scmp.ne.s32.totalorder %s222, %s224
    %p228 = scmp.eq.s32.totalorder %s27, 0
    %p229 = por %p227, %p228
    %p230 = scmp.ne.s32.totalorder %s222, %s224
    %p231 = scmp.eq.s32.totalorder %s32, 7
    %p232 = por %p230, %p231
    %p233 = scmp.ne.s32.totalorder %s224, %s225
    %p234 = scmp.eq.s32.totalorder %s32, 0
    %p235 = por %p233, %p234
    %p236 = scmp.ne.s32.totalorder %s224, %s225
    %p237 = scmp.eq.s32.totalorder %s33, 7
    %p238 = por %p236, %p237
    %p240 = scmp.ne.s32.totalorder %s225, %s239
    %p241 = scmp.eq.s32.totalorder %s33, 0
    %p242 = por %p240, %p241
    %s244 = sadd.s32 %s243, 1
    %p247 = scmp.eq.s32.totalorder %s27, 7
    %p248 = scmp.ne.s32.totalorder %s243, %s245
    %p249 = scmp.eq.s32.totalorder %s27, 0
    %p250 = por %p248, %p249
    %p251 = scmp.ne.s32.totalorder %s243, %s245
    %p252 = scmp.eq.s32.totalorder %s32, 7
    %p253 = por %p251, %p252
    %p254 = scmp.ne.s32.totalorder %s245, %s246
    %p255 = scmp.eq.s32.totalorder %s32, 0
    %p256 = por %p254, %p255
    %p257 = scmp.ne.s32.totalorder %s245, %s246
    %p258 = scmp.eq.s32.totalorder %s33, 7
    %p259 = por %p257, %p258
    %p261 = scmp.ne.s32.totalorder %s246, %s260
    %p262 = scmp.eq.s32.totalorder %s33, 0
    %p263 = por %p261, %p262
    %s265 = sadd.s32 %s264, 1
    %p268 = scmp.eq.s32.totalorder %s27, 7
    %p269 = scmp.ne.s32.totalorder %s264, %s266
    %p270 = scmp.eq.s32.totalorder %s27, 0
    %p271 = por %p269, %p270
    %p272 = scmp.ne.s32.totalorder %s264, %s266
    %p273 = scmp.eq.s32.totalorder %s32, 7
    %p274 = por %p272, %p273
    %p275 = scmp.ne.s32.totalorder %s266, %s267
    %p276 = scmp.eq.s32.totalorder %s32, 0
    %p277 = por %p275, %p276
    %p278 = scmp.ne.s32.totalorder %s266, %s267
    %p279 = scmp.eq.s32.totalorder %s33, 7
    %p280 = por %p278, %p279
    %p282 = scmp.ne.s32.totalorder %s267, %s281
    %p283 = scmp.eq.s32.totalorder %s33, 0
    %p284 = por %p282, %p283
    %s286 = sadd.s32 %s285, 1
    %p289 = scmp.eq.s32.totalorder %s27, 7
    %p290 = scmp.ne.s32.totalorder %s285, %s287
    %p291 = scmp.eq.s32.totalorder %s27, 0
    %p292 = por %p290, %p291
    %p293 = scmp.ne.s32.totalorder %s285, %s287
    %p294 = scmp.eq.s32.totalorder %s32, 7
    %p295 = por %p293, %p294
    %p296 = scmp.ne.s32.totalorder %s287, %s288
    %p297 = scmp.eq.s32.totalorder %s32, 0
    %p298 = por %p296, %p297
    %p299 = scmp.ne.s32.totalorder %s287, %s288
    %p300 = scmp.eq.s32.totalorder %s33, 7
    %p301 = por %p299, %p300
    %p303 = scmp.ne.s32.totalorder %s288, %s302
    %p304 = scmp.eq.s32.totalorder %s33, 0
    %p305 = por %p303, %p304
    %s307 = sadd.s32 %s306, 1
    %p310 = scmp.eq.s32.totalorder %s27, 7
    %p311 = scmp.ne.s32.totalorder %s306, %s308
    %p312 = scmp.eq.s32.totalorder %s27, 0
    %p313 = por %p311, %p312
    %p314 = scmp.ne.s32.totalorder %s306, %s308
    %p315 = scmp.eq.s32.totalorder %s32, 7
    %p316 = por %p314, %p315
    %p317 = scmp.ne.s32.totalorder %s308, %s309
    %p318 = scmp.eq.s32.totalorder %s32, 0
    %p319 = por %p317, %p318
    %p320 = scmp.ne.s32.totalorder %s308, %s309
    %p321 = scmp.eq.s32.totalorder %s33, 7
    %p322 = por %p320, %p321
    %p324 = scmp.ne.s32.totalorder %s309, %s323
    %p325 = scmp.eq.s32.totalorder %s33, 0
    %p326 = por %p324, %p325
    %s328 = sadd.s32 %s327, 1
    %p331 = scmp.eq.s32.totalorder %s27, 7
    %p332 = scmp.ne.s32.totalorder %s327, %s329
    %p333 = scmp.eq.s32.totalorder %s27, 0
    %p334 = por %p332, %p333
    %p335 = scmp.ne.s32.totalorder %s327, %s329
    %p336 = scmp.eq.s32.totalorder %s32, 7
    %p337 = por %p335, %p336
    %p338 = scmp.ne.s32.totalorder %s329, %s330
    %p339 = scmp.eq.s32.totalorder %s32, 0
    %p340 = por %p338, %p339
    %p341 = scmp.ne.s32.totalorder %s329, %s330
    %p342 = scmp.eq.s32.totalorder %s33, 7
    %p343 = por %p341, %p342
    %p345 = scmp.ne.s32.totalorder %s330, %s344
    %p346 = scmp.eq.s32.totalorder %s33, 0
    %p347 = por %p345, %p346
    %s349 = sadd.s32 %s348, 1
    %p352 = scmp.eq.s32.totalorder %s27, 7
    %p353 = scmp.ne.s32.totalorder %s348, %s350
    %p354 = scmp.eq.s32.totalorder %s27, 0
    %p355 = por %p353, %p354
    %p356 = scmp.ne.s32.totalorder %s348, %s350
    %p357 = scmp.eq.s32.totalorder %s32, 7
    %p358 = por %p356, %p357
    %p359 = scmp.ne.s32.totalorder %s350, %s351
    %p360 = scmp.eq.s32.totalorder %s32, 0
    %p361 = por %p359, %p360
    %p362 = scmp.ne.s32.totalorder %s350, %s351
    %p363 = scmp.eq.s32.totalorder %s33, 7
    %p364 = por %p362, %p363
    %p366 = scmp.ne.s32.totalorder %s351, %s365
    %p367 = scmp.eq.s32.totalorder %s33, 0
    %p368 = por %p366, %p367
    %s370 = sadd.s32 %s369, 1
    %p373 = scmp.eq.s32.totalorder %s27, 7
    %p374 = scmp.ne.s32.totalorder %s369, %s371
    %p375 = scmp.eq.s32.totalorder %s27, 0
    %p376 = por %p374, %p375
    %p377 = scmp.ne.s32.totalorder %s369, %s371
    %p378 = scmp.eq.s32.totalorder %s32, 7
    %p379 = por %p377, %p378
    %p380 = scmp.ne.s32.totalorder %s371, %s372
    %p381 = scmp.eq.s32.totalorder %s32, 0
    %p382 = por %p380, %p381
    %p383 = scmp.ne.s32.totalorder %s371, %s372
    %p384 = scmp.eq.s32.totalorder %s33, 7
    %p385 = por %p383, %p384
    %p387 = scmp.ne.s32.totalorder %s372, %s386
    %p388 = scmp.eq.s32.totalorder %s33, 0
    %p389 = por %p387, %p388
    %s391 = sadd.s32 %s390, 1
    %p394 = scmp.eq.s32.totalorder %s27, 7
    %p395 = scmp.ne.s32.totalorder %s390, %s392
    %p396 = scmp.eq.s32.totalorder %s27, 0
    %p397 = por %p395, %p396
    %p398 = scmp.ne.s32.totalorder %s390, %s392
    %p399 = scmp.eq.s32.totalorder %s32, 7
    %p400 = por %p398, %p399
    %p401 = scmp.ne.s32.totalorder %s392, %s393
    %p402 = scmp.eq.s32.totalorder %s32, 0
    %p403 = por %p401, %p402
    %p404 = scmp.ne.s32.totalorder %s392, %s393
    %p405 = scmp.eq.s32.totalorder %s33, 7
    %p406 = por %p404, %p405
    %p408 = scmp.ne.s32.totalorder %s393, %s407
    %p409 = scmp.eq.s32.totalorder %s33, 0
    %p410 = por %p408, %p409
    %s411 = ssub.s32 %s34, %s46
    %s412 = ssub.s32 %s35, %s42
    %s413 = sor.u32 %s411, %s412
    %p414 = scmp.eq.s32.totalorder %s413, 0
    %s416 = sadd.s32 %s415, 1
    %s417 = scalar_select %p414, %s415, %s416
    %p420 = pneg %p414
    %p421 = scmp.eq.s32.totalorder %s27, 7
    %p422 = por %p420, %p421
    %p423 = scmp.ne.s32.totalorder %s415, %s418
    %p424 = scmp.eq.s32.totalorder %s27, 0
    %p425 = por %p423, %p424
    %p426 = scmp.ne.s32.totalorder %s415, %s418
    %p427 = scmp.eq.s32.totalorder %s32, 7
    %p428 = por %p426, %p427
    %p429 = scmp.ne.s32.totalorder %s418, %s419
    %p430 = scmp.eq.s32.totalorder %s32, 0
    %p431 = por %p429, %p430
    %p432 = scmp.ne.s32.totalorder %s418, %s419
    %p433 = scmp.eq.s32.totalorder %s33, 7
    %p434 = por %p432, %p433
    %p436 = scmp.ne.s32.totalorder %s419, %s435
    %p437 = scmp.eq.s32.totalorder %s33, 0
    %p438 = por %p436, %p437
    %s439 = ssub.s32 %s34, %s46
    %s440 = ssub.s32 %s35, %s42
    %s441 = sor.u32 %s439, %s440
    %p442 = scmp.eq.s32.totalorder %s441, 0
    %s444 = sadd.s32 %s443, 1
    %s445 = scalar_select %p442, %s443, %s444
    %p448 = pneg %p442
    %p449 = scmp.eq.s32.totalorder %s27, 7
    %p450 = por %p448, %p449
    %p451 = scmp.ne.s32.totalorder %s443, %s446
    %p452 = scmp.eq.s32.totalorder %s27, 0
    %p453 = por %p451, %p452
    %p454 = scmp.ne.s32.totalorder %s443, %s446
    %p455 = scmp.eq.s32.totalorder %s32, 7
    %p456 = por %p454, %p455
    %p457 = scmp.ne.s32.totalorder %s446, %s447
    %p458 = scmp.eq.s32.totalorder %s32, 0
    %p459 = por %p457, %p458
    %p460 = scmp.ne.s32.totalorder %s446, %s447
    %p461 = scmp.eq.s32.totalorder %s33, 7
    %p462 = por %p460, %p461
    %p464 = scmp.ne.s32.totalorder %s447, %s463
    %p465 = scmp.eq.s32.totalorder %s33, 0
    %p466 = por %p464, %p465
    %s467 = ssub.s32 %s34, %s46
    %s468 = ssub.s32 %s35, %s42
    %s469 = sor.u32 %s467, %s468
    %p470 = scmp.eq.s32.totalorder %s469, 0
    %s472 = sadd.s32 %s471, 1
    %s473 = scalar_select %p470, %s471, %s472
    %p476 = pneg %p470
    %p477 = scmp.eq.s32.totalorder %s27, 7
    %p478 = por %p476, %p477
    %p479 = scmp.ne.s32.totalorder %s471, %s474
    %p480 = scmp.eq.s32.totalorder %s27, 0
    %p481 = por %p479, %p480
    %p482 = scmp.ne.s32.totalorder %s471, %s474
    %p483 = scmp.eq.s32.totalorder %s32, 7
    %p484 = por %p482, %p483
    %p485 = scmp.ne.s32.totalorder %s474, %s475
    %p486 = scmp.eq.s32.totalorder %s32, 0
    %p487 = por %p485, %p486
    %p488 = scmp.ne.s32.totalorder %s474, %s475
    %p489 = scmp.eq.s32.totalorder %s33, 7
    %p490 = por %p488, %p489
    %p492 = scmp.ne.s32.totalorder %s475, %s491
    %p493 = scmp.eq.s32.totalorder %s33, 0
    %p494 = por %p492, %p493
    %s495 = ssub.s32 %s34, %s46
    %p496 = scmp.eq.s32.totalorder %s495, 0
    %s498 = sadd.s32 %s497, 1
    %s499 = scalar_select %p496, %s497, %s498
    %p502 = pneg %p496
    %p503 = scmp.eq.s32.totalorder %s27, 7
    %p504 = por %p502, %p503
    %p505 = scmp.ne.s32.totalorder %s497, %s500
    %p506 = scmp.eq.s32.totalorder %s27, 0
    %p507 = por %p505, %p506
    %p508 = scmp.ne.s32.totalorder %s497, %s500
    %p509 = scmp.eq.s32.totalorder %s32, 7
    %p510 = por %p508, %p509
    %p511 = scmp.ne.s32.totalorder %s500, %s501
    %p512 = scmp.eq.s32.totalorder %s32, 0
    %p513 = por %p511, %p512
    %p514 = scmp.ne.s32.totalorder %s500, %s501
    %p515 = scmp.eq.s32.totalorder %s33, 7
    %p516 = por %p514, %p515
    %p518 = scmp.ne.s32.totalorder %s501, %s517
    %p519 = scmp.eq.s32.totalorder %s33, 0
    %p520 = por %p518, %p519
    %p521 = scmp.le.s32.totalorder 1, %s27
    %p522 = scmp.lt.s32.totalorder %s27, 9
    %p523 = pnand %p521, %p522
    %p524 = pneg %p523
    // Predicated region
    $region9: #{emo_id_forward.1} parent=5 // pred_check
      _
    $region10: #{emo_id_forward.1} parent=5 // pred_check_branch
      %526 = sbr.rel (%p523) target = $region12
    $region11: #{emo_id_forward.1} parent=5 // pred_region
      %s527 = ssub.s32 %s27, 1
      // Predicated region
      $region13: #{emo_id_forward.1} parent=11 // pred_check
        %p528 = pneg %p88
      $region14: #{emo_id_forward.1} parent=11 // pred_check_branch
        %530 = sbr.rel (%p528) target = $region16
      $region15: #{emo_id_forward.1} parent=11 // pred_region
        _
      $region16: #{emo_id_forward.1} parent=11 // pred_fallthru
        _
      // Predicated region
      $region17: #{emo_id_forward.1} parent=11 // pred_check
        %p531 = pneg %p109
      $region18: #{emo_id_forward.1} parent=11 // pred_check_branch
        %533 = sbr.rel (%p531) target = $region20
      $region19: #{emo_id_forward.1} parent=11 // pred_region
        _
      $region20: #{emo_id_forward.1} parent=11 // pred_fallthru
        _
      // Predicated region
      $region21: #{emo_id_forward.1} parent=11 // pred_check
        %p534 = pneg %p130
      $region22: #{emo_id_forward.1} parent=11 // pred_check_branch
        %536 = sbr.rel (%p534) target = $region24
      $region23: #{emo_id_forward.1} parent=11 // pred_region
        _
      $region24: #{emo_id_forward.1} parent=11 // pred_fallthru
        _
      // Predicated region
      $region25: #{emo_id_forward.1} parent=11 // pred_check
        %p537 = pneg %p151
      $region26: #{emo_id_forward.1} parent=11 // pred_check_branch
        %539 = sbr.rel (%p537) target = $region28
      $region27: #{emo_id_forward.1} parent=11 // pred_region
        _
      $region28: #{emo_id_forward.1} parent=11 // pred_fallthru
        _
      // Predicated region
      $region29: #{emo_id_forward.1} parent=11 // pred_check
        %p540 = pneg %p172
      $region30: #{emo_id_forward.1} parent=11 // pred_check_branch
        %542 = sbr.rel (%p540) target = $region32
      $region31: #{emo_id_forward.1} parent=11 // pred_region
        _
      $region32: #{emo_id_forward.1} parent=11 // pred_fallthru
        _
      // Predicated region
      $region33: #{emo_id_forward.1} parent=11 // pred_check
        %p543 = pneg %p193
      $region34: #{emo_id_forward.1} parent=11 // pred_check_branch
        %545 = sbr.rel (%p543) target = $region36
      $region35: #{emo_id_forward.1} parent=11 // pred_region
        _
      $region36: #{emo_id_forward.1} parent=11 // pred_fallthru
        _
      // Predicated region
      $region37: #{emo_id_forward.1} parent=11 // pred_check
        %p546 = pneg %p214
      $region38: #{emo_id_forward.1} parent=11 // pred_check_branch
        %548 = sbr.rel (%p546) target = $region40
      $region39: #{emo_id_forward.1} parent=11 // pred_region
        _
      $region40: #{emo_id_forward.1} parent=11 // pred_fallthru
        _
      // Predicated region
      $region41: #{emo_id_forward.1} parent=11 // pred_check
        %p549 = pneg %p235
      $region42: #{emo_id_forward.1} parent=11 // pred_check_branch
        %551 = sbr.rel (%p549) target = $region44
      $region43: #{emo_id_forward.1} parent=11 // pred_region
        _
      $region44: #{emo_id_forward.1} parent=11 // pred_fallthru
        _
      // Predicated region
      $region45: #{emo_id_forward.1} parent=11 // pred_check
        %p552 = pneg %p256
      $region46: #{emo_id_forward.1} parent=11 // pred_check_branch
        %554 = sbr.rel (%p552) target = $region48
      $region47: #{emo_id_forward.1} parent=11 // pred_region
        _
      $region48: #{emo_id_forward.1} parent=11 // pred_fallthru
        _
      // Predicated region
      $region49: #{emo_id_forward.1} parent=11 // pred_check
        %p555 = pneg %p277
      $region50: #{emo_id_forward.1} parent=11 // pred_check_branch
        %557 = sbr.rel (%p555) target = $region52
      $region51: #{emo_id_forward.1} parent=11 // pred_region
        _
      $region52: #{emo_id_forward.1} parent=11 // pred_fallthru
        _
      // Predicated region
      $region53: #{emo_id_forward.1} parent=11 // pred_check
        %p558 = pneg %p298
      $region54: #{emo_id_forward.1} parent=11 // pred_check_branch
        %560 = sbr.rel (%p558) target = $region56
      $region55: #{emo_id_forward.1} parent=11 // pred_region
        _
      $region56: #{emo_id_forward.1} parent=11 // pred_fallthru
        _
      // Predicated region
      $region57: #{emo_id_forward.1} parent=11 // pred_check
        %p561 = pneg %p319
      $region58: #{emo_id_forward.1} parent=11 // pred_check_branch
        %563 = sbr.rel (%p561) target = $region60
      $region59: #{emo_id_forward.1} parent=11 // pred_region
        _
      $region60: #{emo_id_forward.1} parent=11 // pred_fallthru
        _
      // Predicated region
      $region61: #{emo_id_forward.1} parent=11 // pred_check
        %p564 = pneg %p340
      $region62: #{emo_id_forward.1} parent=11 // pred_check_branch
        %566 = sbr.rel (%p564) target = $region64
      $region63: #{emo_id_forward.1} parent=11 // pred_region
        _
      $region64: #{emo_id_forward.1} parent=11 // pred_fallthru
        _
      // Predicated region
      $region65: #{emo_id_forward.1} parent=11 // pred_check
        %p567 = pneg %p361
      $region66: #{emo_id_forward.1} parent=11 // pred_check_branch
        %569 = sbr.rel (%p567) target = $region68
      $region67: #{emo_id_forward.1} parent=11 // pred_region
        _
      $region68: #{emo_id_forward.1} parent=11 // pred_fallthru
        _
      // Predicated region
      $region69: #{emo_id_forward.1} parent=11 // pred_check
        %p570 = pneg %p382
      $region70: #{emo_id_forward.1} parent=11 // pred_check_branch
        %572 = sbr.rel (%p570) target = $region72
      $region71: #{emo_id_forward.1} parent=11 // pred_region
        _
      $region72: #{emo_id_forward.1} parent=11 // pred_fallthru
        _
      // Predicated region
      $region73: #{emo_id_forward.1} parent=11 // pred_check
        %p573 = pneg %p403
      $region74: #{emo_id_forward.1} parent=11 // pred_check_branch
        %575 = sbr.rel (%p573) target = $region76
      $region75: #{emo_id_forward.1} parent=11 // pred_region
        _
      $region76: #{emo_id_forward.1} parent=11 // pred_fallthru
        _
    $region12: #{emo_id_forward.1} parent=5 // pred_fallthru
      _
    %p576 = scmp.lt.s32.totalorder %s27, 8
    // Predicated region
    $region77: #{emo_id_forward.1} parent=5 // pred_check
      %p577 = pneg %p576
    $region78: #{emo_id_forward.1} parent=5 // pred_check_branch
      %579 = sbr.rel (%p577) target = $region80
    $region79: #{emo_id_forward.1} parent=5 // pred_region
      // Predicated region
      $region81: #{emo_id_forward.1} parent=79 // pred_check
        %p580 = pneg %p61
      $region82: #{emo_id_forward.1} parent=79 // pred_check_branch
        %582 = sbr.rel (%p580) target = $region84
      $region83: #{emo_id_forward.1} parent=79 // pred_region
        %s583 = smul.u32 2, %s35
        %p584 = scmp.lt.s32.totalorder %s34, 7
        %s585 = scalar_select %p584, %s34, 7
        %p586 = scmp.lt.s32.totalorder %s583, 1
        %s587 = scalar_select %p586, %s583, 1
        %s588 = smul.addr %s585, 2
        %s589 = sadd.s32 %s587, %s588
        %s590 = smul.addr %s589, 4
        %s591 = scalar_lea.vmem %s0, %s590
        %s592 = smul.u32 2, %s35
      $region84: #{emo_id_forward.1} parent=79 // pred_fallthru
        _
    $region80: #{emo_id_forward.1} parent=5 // pred_fallthru
      _
    %p593 = scmp.le.s32.totalorder 1, %s27
    %p594 = scmp.lt.s32.totalorder %s27, 9
    %p595 = pnand %p593, %p594
    %p596 = pneg %p595
    // Predicated region
    $region85: #{emo_id_forward.1} parent=5 // pred_check
      _
    $region86: #{emo_id_forward.1} parent=5 // pred_check_branch
      %598 = sbr.rel (%p595) target = $region88
    $region87: #{emo_id_forward.1} parent=5 // pred_region
      %s599 = ssub.s32 %s27, 1
      %s600 = smul.u32 2, %s37
      %p601 = scmp.lt.s32.totalorder %s36, 7
      %s602 = scalar_select %p601, %s36, 7
      %p603 = scmp.lt.s32.totalorder %s600, 1
      %s604 = scalar_select %p603, %s600, 1
      %s605 = smul.addr %s602, 2
      %s606 = sadd.s32 %s604, %s605
      %s607 = smul.addr %s606, 4
      %s608 = scalar_lea.vmem %s0, %s607
      %p609 = pneg %p67
      %p610 = pneg %p64
      %p611 = pneg %p88
      %p612 = pneg %p85
      %p613 = pneg %p109
      %p614 = pneg %p106
      %p615 = pneg %p130
      %p616 = pneg %p127
      %p617 = pneg %p151
      %p618 = pneg %p148
      %p619 = pneg %p172
      %p620 = pneg %p169
      %p621 = pneg %p193
      %p622 = pneg %p190
      %p623 = pneg %p214
      %p624 = pneg %p211
      %p625 = pneg %p235
      %p626 = pneg %p232
      %p627 = pneg %p256
      %p628 = pneg %p253
      %p629 = pneg %p277
      %p630 = pneg %p274
      %p631 = pneg %p298
      %p632 = pneg %p295
      %p633 = pneg %p319
      %p634 = pneg %p316
      %p635 = pneg %p340
      %p636 = pneg %p337
      %p637 = pneg %p361
      %p638 = pneg %p358
      %p639 = pneg %p382
      %p640 = pneg %p379
      %p641 = pneg %p403
      %p642 = pneg %p400
      %p643 = pneg %p431
      %p644 = pneg %p428
      %s645 = smul.u32 2, %s37
      %p646 = scmp.lt.s32.totalorder %s36, 7
      %s647 = scalar_select %p646, %s36, 7
      %p648 = scmp.lt.s32.totalorder %s645, 1
      %s649 = scalar_select %p648, %s645, 1
      %s650 = smul.addr %s647, 32
      %s651 = sadd.s32 %s649, %s650
      %s652 = smul.addr %s651, 4
      %s653 = scalar_lea.vmem %s17, %s652
      %p654 = pneg %p459
      %p655 = pneg %p456
      %s656 = smul.u32 2, %s37
      %p657 = scmp.lt.s32.totalorder %s36, 7
      %s658 = scalar_select %p657, %s36, 7
      %p659 = scmp.lt.s32.totalorder %s656, 1
      %s660 = scalar_select %p659, %s656, 1
      %s661 = smul.addr %s658, 32
      %s662 = sadd.s32 %s660, %s661
      %s663 = smul.addr %s662, 4
      %s664 = scalar_lea.vmem %s18, %s663
      %p665 = pneg %p487
      %p666 = pneg %p484
      %s667 = smul.u32 2, %s37
      %p668 = scmp.lt.s32.totalorder %s36, 7
      %s669 = scalar_select %p668, %s36, 7
      %p670 = scmp.lt.s32.totalorder %s667, 1
      %s671 = scalar_select %p670, %s667, 1
      %s672 = smul.addr %s669, 32
      %s673 = sadd.s32 %s671, %s672
      %s674 = smul.addr %s673, 4
      %s675 = scalar_lea.vmem %s19, %s674
      %p676 = pneg %p513
      %p677 = pneg %p510
      %p678 = scmp.lt.s32.totalorder %s36, 7
      %s679 = scalar_select %p678, %s36, 7
      %s680 = smul.addr %s679, 16
      %s681 = smul.addr %s680, 8
      %s682 = scalar_lea.vmem %s20, %s681
      %s683 = smul.u32 2, %s37
      %p684 = scmp.lt.s32.totalorder %s36, 7
      %s685 = scalar_select %p684, %s36, 7
      %p686 = scmp.lt.s32.totalorder %s683, 1
      %s687 = scalar_select %p686, %s683, 1
      %s688 = smul.addr %s685, 2
      %s689 = sadd.s32 %s687, %s688
      %s690 = smul.addr %s689, 4
      %s691 = scalar_lea.vmem %s0, %s690
      %s692 = smul.u32 2, %s37
      %s693 = smul.u32 2, %s37
      %p694 = scmp.lt.s32.totalorder %s36, 7
      %s695 = scalar_select %p694, %s36, 7
      %p696 = scmp.lt.s32.totalorder %s693, 1
      %s697 = scalar_select %p696, %s693, 1
      %s698 = smul.addr %s695, 32
      %s699 = sadd.s32 %s697, %s698
      %s700 = smul.addr %s699, 4
      %s701 = scalar_lea.vmem %s17, %s700
      %s702 = smul.u32 2, %s37
      %s703 = smul.u32 2, %s37
      %p704 = scmp.lt.s32.totalorder %s36, 7
      %s705 = scalar_select %p704, %s36, 7
      %p706 = scmp.lt.s32.totalorder %s703, 1
      %s707 = scalar_select %p706, %s703, 1
      %s708 = smul.addr %s705, 32
      %s709 = sadd.s32 %s707, %s708
      %s710 = smul.addr %s709, 4
      %s711 = scalar_lea.vmem %s18, %s710
      %s712 = smul.u32 2, %s37
      %s713 = smul.u32 2, %s37
      %p714 = scmp.lt.s32.totalorder %s36, 7
      %s715 = scalar_select %p714, %s36, 7
      %p716 = scmp.lt.s32.totalorder %s713, 1
      %s717 = scalar_select %p716, %s713, 1
      %s718 = smul.addr %s715, 32
      %s719 = sadd.s32 %s717, %s718
      %s720 = smul.addr %s719, 4
      %s721 = scalar_lea.vmem %s19, %s720
      %s722 = smul.u32 2, %s37
      %p723 = scmp.lt.s32.totalorder %s36, 7
      %s724 = scalar_select %p723, %s36, 7
      %s725 = smul.addr %s724, 16
      %s726 = smul.addr %s725, 8
      %s727 = scalar_lea.vmem %s20, %s726
      %p729 = scmp.eq.s32.totalorder %s37, 0
      // Predicated region
      $region89: #{emo_id_forward.1} parent=87 // pred_check
        %p730 = pneg %p729
      $region90: #{emo_id_forward.1} parent=87 // pred_check_branch
        %732 = sbr.rel (%p730) target = $region92
      $region91: #{emo_id_forward.1} parent=87 // pred_region
        %vm733 = vcmask 7168
        %734 = vst.msk [vmem:[%s727] sm:$0xff] %vm733, 0.0
        %735 = vst.msk [vmem:[%s727 + $0x8] sm:$0xff] %vm733, 0.0
        %736 = vst.msk [vmem:[%s727 + $0x10] sm:$0xff] %vm733, 0.0
        %737 = vst.msk [vmem:[%s727 + $0x18] sm:$0xff] %vm733, 0.0
        %738 = vst.msk [vmem:[%s727 + $0x20] sm:$0xff] %vm733, 0.0
        %739 = vst.msk [vmem:[%s727 + $0x28] sm:$0xff] %vm733, 0.0
        %740 = vst.msk [vmem:[%s727 + $0x30] sm:$0xff] %vm733, 0.0
        %741 = vst.msk [vmem:[%s727 + $0x38] sm:$0xff] %vm733, 0.0
        %742 = vst.msk [vmem:[%s727 + $0x40] sm:$0xff] %vm733, 0.0
        %743 = vst.msk [vmem:[%s727 + $0x48] sm:$0xff] %vm733, 0.0
        %744 = vst.msk [vmem:[%s727 + $0x50] sm:$0xff] %vm733, 0.0
        %745 = vst.msk [vmem:[%s727 + $0x58] sm:$0xff] %vm733, 0.0
        %746 = vst.msk [vmem:[%s727 + $0x60] sm:$0xff] %vm733, 0.0
        %747 = vst.msk [vmem:[%s727 + $0x68] sm:$0xff] %vm733, 0.0
        %748 = vst.msk [vmem:[%s727 + $0x70] sm:$0xff] %vm733, 0.0
        %749 = vst.msk [vmem:[%s727 + $0x78] sm:$0xff] %vm733, 0.0
      $region92: #{emo_id_forward.1} parent=87 // pred_fallthru
        _
      %v750 = vld [vmem:[%s691] sm:$0xff]
      %v751 = vld [vmem:[%s1] sm:$0xf]
      %v752 = vld [vmem:[%s1 + $0x4] sm:$0xf]
      %v753 = vld [vmem:[%s1 + $0x8] sm:$0xf]
      %v754 = vld [vmem:[%s1 + $0xc] sm:$0xf]
      %v755 = vld [vmem:[%s1 + $0x10] sm:$0xf]
      %v756 = vld [vmem:[%s1 + $0x14] sm:$0xf]
      %v757 = vld [vmem:[%s1 + $0x18] sm:$0xf]
      %v758 = vld [vmem:[%s1 + $0x1c] sm:$0xf]
      %v759 = vld [vmem:[%s1 + $0x20] sm:$0xf]
      %v760 = vld [vmem:[%s1 + $0x24] sm:$0xf]
      %v761 = vld [vmem:[%s1 + $0x28] sm:$0xf]
      %v762 = vld [vmem:[%s1 + $0x2c] sm:$0xf]
      %v763 = vld [vmem:[%s1 + $0x30] sm:$0xf]
      %v764 = vld [vmem:[%s1 + $0x34] sm:$0xf]
      %v765 = vld [vmem:[%s1 + $0x38] sm:$0xf]
      %v766 = vld [vmem:[%s1 + $0x3c] sm:$0xf]
      %v767 = vld [vmem:[%s2] sm:$0xff]
      %v768 = vld [vmem:[%s2 + $0x8] sm:$0xff]
      %v769 = vld [vmem:[%s2 + $0x10] sm:$0xff]
      %v770 = vld [vmem:[%s2 + $0x18] sm:$0xff]
      %v771 = vld [vmem:[%s2 + $0x20] sm:$0xff]
      %v772 = vld [vmem:[%s2 + $0x28] sm:$0xff]
      %v773 = vld [vmem:[%s2 + $0x30] sm:$0xff]
      %v774 = vld [vmem:[%s2 + $0x38] sm:$0xff]
      %v775 = vld [vmem:[%s2 + $0x40] sm:$0xff]
      %v776 = vld [vmem:[%s2 + $0x48] sm:$0xff]
      %v777 = vld [vmem:[%s2 + $0x50] sm:$0xff]
      %v778 = vld [vmem:[%s2 + $0x58] sm:$0xff]
      %v779 = vld [vmem:[%s2 + $0x60] sm:$0xff]
      %v780 = vld [vmem:[%s2 + $0x68] sm:$0xff]
      %v781 = vld [vmem:[%s2 + $0x70] sm:$0xff]
      %v782 = vld [vmem:[%s2 + $0x78] sm:$0xff]
      %784 = vset.pattern.permute.xlu0 0
      %785 = vperm.xlu0 %784, %v767
      %v786 = vpop.permute.xlu0 %785
      %789 = vset.pattern.permute.xlu0 0
      %790 = vperm.xlu0 %789, %v768
      %v791 = vpop.permute.xlu0 %790
      %794 = vset.pattern.permute.xlu0 0
      %795 = vperm.xlu0 %794, %v769
      %v796 = vpop.permute.xlu0 %795
      %799 = vset.pattern.permute.xlu0 0
      %800 = vperm.xlu0 %799, %v770
      %v801 = vpop.permute.xlu0 %800
      %804 = vset.pattern.permute.xlu0 0
      %805 = vperm.xlu0 %804, %v771
      %v806 = vpop.permute.xlu0 %805
      %809 = vset.pattern.permute.xlu0 0
      %810 = vperm.xlu0 %809, %v772
      %v811 = vpop.permute.xlu0 %810
      %814 = vset.pattern.permute.xlu0 0
      %815 = vperm.xlu0 %814, %v773
      %v816 = vpop.permute.xlu0 %815
      %819 = vset.pattern.permute.xlu0 0
      %820 = vperm.xlu0 %819, %v774
      %v821 = vpop.permute.xlu0 %820
      %824 = vset.pattern.permute.xlu0 0
      %825 = vperm.xlu0 %824, %v775
      %v826 = vpop.permute.xlu0 %825
      %829 = vset.pattern.permute.xlu0 0
      %830 = vperm.xlu0 %829, %v776
      %v831 = vpop.permute.xlu0 %830
      %834 = vset.pattern.permute.xlu0 0
      %835 = vperm.xlu0 %834, %v777
      %v836 = vpop.permute.xlu0 %835
      %839 = vset.pattern.permute.xlu0 0
      %840 = vperm.xlu0 %839, %v778
      %v841 = vpop.permute.xlu0 %840
      %844 = vset.pattern.permute.xlu0 0
      %845 = vperm.xlu0 %844, %v779
      %v846 = vpop.permute.xlu0 %845
      %849 = vset.pattern.permute.xlu0 0
      %850 = vperm.xlu0 %849, %v780
      %v851 = vpop.permute.xlu0 %850
      %854 = vset.pattern.permute.xlu0 0
      %855 = vperm.xlu0 %854, %v781
      %v856 = vpop.permute.xlu0 %855
      %859 = vset.pattern.permute.xlu0 0
      %860 = vperm.xlu0 %859, %v782
      %v861 = vpop.permute.xlu0 %860
      %v879 = vunpack.c.l.b16 %v751
      %v880 = vunpack.c.l.b16 %v752
      %v881 = vunpack.c.l.b16 %v753
      %v882 = vunpack.c.l.b16 %v754
      %v883 = vunpack.c.l.b16 %v755
      %v884 = vunpack.c.l.b16 %v756
      %v885 = vunpack.c.l.b16 %v757
      %v886 = vunpack.c.l.b16 %v758
      %v887 = vunpack.c.l.b16 %v759
      %v888 = vunpack.c.l.b16 %v760
      %v889 = vunpack.c.l.b16 %v761
      %v890 = vunpack.c.l.b16 %v762
      %v891 = vunpack.c.l.b16 %v763
      %v892 = vunpack.c.l.b16 %v764
      %v893 = vunpack.c.l.b16 %v765
      %v894 = vunpack.c.l.b16 %v766
      %v895 = vpack.c.b16 %v880, %v879
      %v896 = vpack.c.b16 %v882, %v881
      %v897 = vpack.c.b16 %v884, %v883
      %v898 = vpack.c.b16 %v886, %v885
      %v899 = vpack.c.b16 %v888, %v887
      %v900 = vpack.c.b16 %v890, %v889
      %v901 = vpack.c.b16 %v892, %v891
      %v902 = vpack.c.b16 %v894, %v893
      %v904 = vunpack.c.l.b16 %v750
      %v905 = vunpack.c.h.b16 %v750
      %v906 = vpack.c.b16 %v904, %v904
      %v907 = vpack.c.b16 %v905, %v905
      %vm908 = vcmask 64512
      %v910 = vsel %vm908, %v895, 0
      %v913 = vsel %vm908, %v896, 0
      %v916 = vsel %vm908, %v897, 0
      %v919 = vsel %vm908, %v898, 0
      %v922 = vsel %vm908, %v899, 0
      %v925 = vsel %vm908, %v900, 0
      %v928 = vsel %vm908, %v901, 0
      %v931 = vsel %vm908, %v902, 0
      %vm933 = vcmask 1043456
      %v935 = vsel %vm933, %v906, 0
      %v938 = vsel %vm933, %v907, 0
      %940 = vmatprep.subr.bf16.mxu0 %v938
      %941 = vmatpush1.bf16.msra.mxu0 %v935
      %942 = vmatprep.subr.bf16.mxu0 0
      %943 = vmatpush1.bf16.msra.mxu0 0
      %944 = vmatprep.subr.bf16.mxu0 0
      %945 = vmatpush1.bf16.msra.mxu0 0
      %946 = vmatprep.subr.bf16.mxu0 0
      %947 = vmatpush1.bf16.msra.mxu0 0
      %948 = vmatprep.subr.bf16.mxu0 0
      %949 = vmatpush1.bf16.msra.mxu0 0
      %950 = vmatprep.subr.bf16.mxu0 0
      %951 = vmatpush1.bf16.msra.mxu0 0
      %952 = vmatprep.subr.bf16.mxu0 0
      %953 = vmatpush1.bf16.msra.mxu0 0
      %954 = vmatprep.subr.bf16.mxu0 0
      %955 = vmatpush1.bf16.msra.mxu0 0
      %956 = vmatprep.subr.bf16.mxu0 0
      %957 = vmatpush1.bf16.msra.mxu0 0
      %958 = vmatprep.subr.bf16.mxu0 0
      %959 = vmatpush1.bf16.msra.mxu0 0
      %960 = vmatprep.subr.bf16.mxu0 0
      %961 = vmatpush1.bf16.msra.mxu0 0
      %962 = vmatprep.subr.bf16.mxu0 0
      %963 = vmatpush1.bf16.msra.mxu0 0
      %964 = vmatprep.subr.bf16.mxu0 0
      %965 = vmatpush1.bf16.msra.mxu0 0
      %966 = vmatprep.subr.bf16.mxu0 0
      %967 = vmatpush1.bf16.msra.mxu0 0
      %968 = vmatprep.subr.bf16.mxu0 0
      %969 = vmatpush1.bf16.msra.mxu0 0
      %970 = vmatprep.subr.bf16.mxu0 0
      %971 = vmatpush1.bf16.msra.mxu0 0
      %972 = vmatprep.mubr.bf16.mxu0 0
      %973 = vmatmul.mubr.bf16.gmra.mrb[0].mxu0 %v910
      %v974 = vpop.f32.mrb[0].mxu0
      %v975 = vadd.f32 %v786, %v974
      %v976 = vpop.f32.mrb[0].mxu0
      %v977 = vadd.f32 %v786, %v976
      %v978 = vpop.f32.mrb[0].mxu0
      %v979 = vadd.f32 %v791, %v978
      %v980 = vpop.f32.mrb[0].mxu0
      %v981 = vadd.f32 %v791, %v980
      %982 = vmatprep.mubr.bf16.mxu0 0
      %983 = vmatmul.mubr.bf16.gmra.mrb[0].mxu0 %v913
      %v984 = vpop.f32.mrb[0].mxu0
      %v985 = vadd.f32 %v796, %v984
      %v986 = vpop.f32.mrb[0].mxu0
      %v987 = vadd.f32 %v796, %v986
      %v988 = vpop.f32.mrb[0].mxu0
      %v989 = vadd.f32 %v801, %v988
      %v990 = vpop.f32.mrb[0].mxu0
      %v991 = vadd.f32 %v801, %v990
      %992 = vmatprep.mubr.bf16.mxu0 0
      %993 = vmatmul.mubr.bf16.gmra.mrb[0].mxu0 %v916
      %v994 = vpop.f32.mrb[0].mxu0
      %v995 = vadd.f32 %v806, %v994
      %v996 = vpop.f32.mrb[0].mxu0
      %v997 = vadd.f32 %v806, %v996
      %v998 = vpop.f32.mrb[0].mxu0
      %v999 = vadd.f32 %v811, %v998
      %v1000 = vpop.f32.mrb[0].mxu0
      %v1001 = vadd.f32 %v811, %v1000
      %1002 = vmatprep.mubr.bf16.mxu0 0
      %1003 = vmatmul.mubr.bf16.gmra.mrb[0].mxu0 %v919
      %v1004 = vpop.f32.mrb[0].mxu0
      %v1005 = vadd.f32 %v816, %v1004
      %v1006 = vpop.f32.mrb[0].mxu0
      %v1007 = vadd.f32 %v816, %v1006
      %v1008 = vpop.f32.mrb[0].mxu0
      %v1009 = vadd.f32 %v821, %v1008
      %v1010 = vpop.f32.mrb[0].mxu0
      %v1011 = vadd.f32 %v821, %v1010
      %1012 = vmatprep.mubr.bf16.mxu0 0
      %1013 = vmatmul.mubr.bf16.gmra.mrb[0].mxu0 %v922
      %v1014 = vpop.f32.mrb[0].mxu0
      %v1015 = vadd.f32 %v826, %v1014
      %v1016 = vpop.f32.mrb[0].mxu0
      %v1017 = vadd.f32 %v826, %v1016
      %v1018 = vpop.f32.mrb[0].mxu0
      %v1019 = vadd.f32 %v831, %v1018
      %v1020 = vpop.f32.mrb[0].mxu0
      %v1021 = vadd.f32 %v831, %v1020
      %1022 = vmatprep.mubr.bf16.mxu0 0
      %1023 = vmatmul.mubr.bf16.gmra.mrb[0].mxu0 %v925
      %v1024 = vpop.f32.mrb[0].mxu0
      %v1025 = vadd.f32 %v836, %v1024
      %v1026 = vpop.f32.mrb[0].mxu0
      %v1027 = vadd.f32 %v836, %v1026
      %v1028 = vpop.f32.mrb[0].mxu0
      %v1029 = vadd.f32 %v841, %v1028
      %v1030 = vpop.f32.mrb[0].mxu0
      %v1031 = vadd.f32 %v841, %v1030
      %1032 = vmatprep.mubr.bf16.mxu0 0
      %1033 = vmatmul.mubr.bf16.gmra.mrb[0].mxu0 %v928
      %v1034 = vpop.f32.mrb[0].mxu0
      %v1035 = vadd.f32 %v846, %v1034
      %v1036 = vpop.f32.mrb[0].mxu0
      %v1037 = vadd.f32 %v846, %v1036
      %v1038 = vpop.f32.mrb[0].mxu0
      %v1039 = vadd.f32 %v851, %v1038
      %v1040 = vpop.f32.mrb[0].mxu0
      %v1041 = vadd.f32 %v851, %v1040
      %1042 = vmatprep.mubr.bf16.mxu0 0
      %1043 = vmatmul.mubr.bf16.gmra.mrb[0].mxu0 %v931
      %v1044 = vpop.f32.mrb[0].mxu0
      %v1045 = vadd.f32 %v856, %v1044
      %v1046 = vpop.f32.mrb[0].mxu0
      %v1047 = vadd.f32 %v856, %v1046
      %v1048 = vpop.f32.mrb[0].mxu0
      %v1049 = vadd.f32 %v861, %v1048
      %v1050 = vpop.f32.mrb[0].mxu0
      %v1051 = vadd.f32 %v861, %v1050
      %1052 = vdwg.mxu0
      %v1053 = vmax.f32 %v975, 0.0
      %v1054 = vmax.f32 %v977, 0.0
      %v1055 = vmax.f32 %v979, 0.0
      %v1056 = vmax.f32 %v981, 0.0
      %v1057 = vmax.f32 %v985, 0.0
      %v1058 = vmax.f32 %v987, 0.0
      %v1059 = vmax.f32 %v989, 0.0
      %v1060 = vmax.f32 %v991, 0.0
      %v1061 = vmax.f32 %v995, 0.0
      %v1062 = vmax.f32 %v997, 0.0
      %v1063 = vmax.f32 %v999, 0.0
      %v1064 = vmax.f32 %v1001, 0.0
      %v1065 = vmax.f32 %v1005, 0.0
      %v1066 = vmax.f32 %v1007, 0.0
      %v1067 = vmax.f32 %v1009, 0.0
      %v1068 = vmax.f32 %v1011, 0.0
      %v1069 = vmax.f32 %v1015, 0.0
      %v1070 = vmax.f32 %v1017, 0.0
      %v1071 = vmax.f32 %v1019, 0.0
      %v1072 = vmax.f32 %v1021, 0.0
      %v1073 = vmax.f32 %v1025, 0.0
      %v1074 = vmax.f32 %v1027, 0.0
      %v1075 = vmax.f32 %v1029, 0.0
      %v1076 = vmax.f32 %v1031, 0.0
      %v1077 = vmax.f32 %v1035, 0.0
      %v1078 = vmax.f32 %v1037, 0.0
      %v1079 = vmax.f32 %v1039, 0.0
      %v1080 = vmax.f32 %v1041, 0.0
      %v1081 = vmax.f32 %v1045, 0.0
      %v1082 = vmax.f32 %v1047, 0.0
      %v1083 = vmax.f32 %v1049, 0.0
      %v1084 = vmax.f32 %v1051, 0.0
      %v1085 = vpack.c.bf16 %v1055, %v1053
      %v1086 = vpack.c.bf16 %v1056, %v1054
      %v1087 = vpack.c.bf16 %v1059, %v1057
      %v1088 = vpack.c.bf16 %v1060, %v1058
      %v1089 = vpack.c.bf16 %v1063, %v1061
      %v1090 = vpack.c.bf16 %v1064, %v1062
      %v1091 = vpack.c.bf16 %v1067, %v1065
      %v1092 = vpack.c.bf16 %v1068, %v1066
      %v1093 = vpack.c.bf16 %v1071, %v1069
      %v1094 = vpack.c.bf16 %v1072, %v1070
      %v1095 = vpack.c.bf16 %v1075, %v1073
      %v1096 = vpack.c.bf16 %v1076, %v1074
      %v1097 = vpack.c.bf16 %v1079, %v1077
      %v1098 = vpack.c.bf16 %v1080, %v1078
      %v1099 = vpack.c.bf16 %v1083, %v1081
      %v1100 = vpack.c.bf16 %v1084, %v1082
      %v1117 = vunpack.c.l.b16 %v1085
      %v1118 = vunpack.c.l.b16 %v1086
      %v1119 = vunpack.c.h.b16 %v1085
      %v1120 = vunpack.c.h.b16 %v1086
      %v1121 = vunpack.c.l.b16 %v1087
      %v1122 = vunpack.c.l.b16 %v1088
      %v1123 = vunpack.c.h.b16 %v1087
      %v1124 = vunpack.c.h.b16 %v1088
      %v1125 = vunpack.c.l.b16 %v1089
      %v1126 = vunpack.c.l.b16 %v1090
      %v1127 = vunpack.c.h.b16 %v1089
      %v1128 = vunpack.c.h.b16 %v1090
      %v1129 = vunpack.c.l.b16 %v1091
      %v1130 = vunpack.c.l.b16 %v1092
      %v1131 = vunpack.c.h.b16 %v1091
      %v1132 = vunpack.c.h.b16 %v1092
      %v1133 = vunpack.c.l.b16 %v1093
      %v1134 = vunpack.c.l.b16 %v1094
      %v1135 = vunpack.c.h.b16 %v1093
      %v1136 = vunpack.c.h.b16 %v1094
      %v1137 = vunpack.c.l.b16 %v1095
      %v1138 = vunpack.c.l.b16 %v1096
      %v1139 = vunpack.c.h.b16 %v1095
      %v1140 = vunpack.c.h.b16 %v1096
      %v1141 = vunpack.c.l.b16 %v1097
      %v1142 = vunpack.c.l.b16 %v1098
      %v1143 = vunpack.c.h.b16 %v1097
      %v1144 = vunpack.c.h.b16 %v1098
      %v1145 = vunpack.c.l.b16 %v1099
      %v1146 = vunpack.c.l.b16 %v1100
      %v1147 = vunpack.c.h.b16 %v1099
      %v1148 = vunpack.c.h.b16 %v1100
      %v1149 = vpack.c.b16 %v1118, %v1117
      %v1150 = vpack.c.b16 %v1120, %v1119
      %v1151 = vpack.c.b16 %v1122, %v1121
      %v1152 = vpack.c.b16 %v1124, %v1123
      %v1153 = vpack.c.b16 %v1126, %v1125
      %v1154 = vpack.c.b16 %v1128, %v1127
      %v1155 = vpack.c.b16 %v1130, %v1129
      %v1156 = vpack.c.b16 %v1132, %v1131
      %v1157 = vpack.c.b16 %v1134, %v1133
      %v1158 = vpack.c.b16 %v1136, %v1135
      %v1159 = vpack.c.b16 %v1138, %v1137
      %v1160 = vpack.c.b16 %v1140, %v1139
      %v1161 = vpack.c.b16 %v1142, %v1141
      %v1162 = vpack.c.b16 %v1144, %v1143
      %v1163 = vpack.c.b16 %v1146, %v1145
      %v1164 = vpack.c.b16 %v1148, %v1147
      %1181 = vst [vmem:[%s701] sm:$0xff] %v1149
      %1182 = vst [vmem:[%s701 + $0x8] sm:$0xff] %v1150
      %1183 = vst [vmem:[%s701 + $0x10] sm:$0xff] %v1151
      %1184 = vst [vmem:[%s701 + $0x18] sm:$0xff] %v1152
      %1185 = vst [vmem:[%s701 + $0x20] sm:$0xff] %v1153
      %1186 = vst [vmem:[%s701 + $0x28] sm:$0xff] %v1154
      %1187 = vst [vmem:[%s701 + $0x30] sm:$0xff] %v1155
      %1188 = vst [vmem:[%s701 + $0x38] sm:$0xff] %v1156
      %1189 = vst [vmem:[%s701 + $0x40] sm:$0xff] %v1157
      %1190 = vst [vmem:[%s701 + $0x48] sm:$0xff] %v1158
      %1191 = vst [vmem:[%s701 + $0x50] sm:$0xff] %v1159
      %1192 = vst [vmem:[%s701 + $0x58] sm:$0xff] %v1160
      %1193 = vst [vmem:[%s701 + $0x60] sm:$0xff] %v1161
      %1194 = vst [vmem:[%s701 + $0x68] sm:$0xff] %v1162
      %1195 = vst [vmem:[%s701 + $0x70] sm:$0xff] %v1163
      %1196 = vst [vmem:[%s701 + $0x78] sm:$0xff] %v1164
      %v1197 = vld [vmem:[%s5] sm:$0xf]
      %v1198 = vld [vmem:[%s5 + $0x4] sm:$0xf]
      %v1199 = vld [vmem:[%s5 + $0x8] sm:$0xf]
      %v1200 = vld [vmem:[%s5 + $0xc] sm:$0xf]
      %v1201 = vld [vmem:[%s5 + $0x10] sm:$0xf]
      %v1202 = vld [vmem:[%s5 + $0x14] sm:$0xf]
      %v1203 = vld [vmem:[%s5 + $0x18] sm:$0xf]
      %v1204 = vld [vmem:[%s5 + $0x1c] sm:$0xf]
      %v1205 = vld [vmem:[%s6] sm:$0xff]
      %v1206 = vld [vmem:[%s6 + $0x8] sm:$0xff]
      %v1207 = vld [vmem:[%s6 + $0x10] sm:$0xff]
      %v1208 = vld [vmem:[%s6 + $0x18] sm:$0xff]
      %v1209 = vld [vmem:[%s6 + $0x20] sm:$0xff]
      %v1210 = vld [vmem:[%s6 + $0x28] sm:$0xff]
      %v1211 = vld [vmem:[%s6 + $0x30] sm:$0xff]
      %v1212 = vld [vmem:[%s6 + $0x38] sm:$0xff]
      %1214 = vset.pattern.permute.xlu0 0
      %1215 = vperm.xlu0 %1214, %v1205
      %v1216 = vpop.permute.xlu0 %1215
      %1219 = vset.pattern.permute.xlu0 0
      %1220 = vperm.xlu0 %1219, %v1206
      %v1221 = vpop.permute.xlu0 %1220
      %1224 = vset.pattern.permute.xlu0 0
      %1225 = vperm.xlu0 %1224, %v1207
      %v1226 = vpop.permute.xlu0 %1225
      %1229 = vset.pattern.permute.xlu0 0
      %1230 = vperm.xlu0 %1229, %v1208
      %v1231 = vpop.permute.xlu0 %1230
      %1234 = vset.pattern.permute.xlu0 0
      %1235 = vperm.xlu0 %1234, %v1209
      %v1236 = vpop.permute.xlu0 %1235
      %1239 = vset.pattern.permute.xlu0 0
      %1240 = vperm.xlu0 %1239, %v1210
      %v1241 = vpop.permute.xlu0 %1240
      %1244 = vset.pattern.permute.xlu0 0
      %1245 = vperm.xlu0 %1244, %v1211
      %v1246 = vpop.permute.xlu0 %1245
      %1249 = vset.pattern.permute.xlu0 0
      %1250 = vperm.xlu0 %1249, %v1212
      %v1251 = vpop.permute.xlu0 %1250
      %v1261 = vunpack.c.l.b16 %v1197
      %v1262 = vunpack.c.l.b16 %v1198
      %v1263 = vunpack.c.l.b16 %v1199
      %v1264 = vunpack.c.l.b16 %v1200
      %v1265 = vunpack.c.l.b16 %v1201
      %v1266 = vunpack.c.l.b16 %v1202
      %v1267 = vunpack.c.l.b16 %v1203
      %v1268 = vunpack.c.l.b16 %v1204
      %v1269 = vpack.c.b16 %v1262, %v1261
      %v1270 = vpack.c.b16 %v1264, %v1263
      %v1271 = vpack.c.b16 %v1266, %v1265
      %v1272 = vpack.c.b16 %v1268, %v1267
      %1277 = vmatprep.subr.bf16.mxu0 %v1086
      %1278 = vmatpush1.bf16.msra.mxu0 %v1085
      %1279 = vmatprep.subr.bf16.mxu0 %v1088
      %1280 = vmatpush1.bf16.msra.mxu0 %v1087
      %1281 = vmatprep.subr.bf16.mxu0 %v1090
      %1282 = vmatpush1.bf16.msra.mxu0 %v1089
      %1283 = vmatprep.subr.bf16.mxu0 %v1092
      %1284 = vmatpush1.bf16.msra.mxu0 %v1091
      %1285 = vmatprep.subr.bf16.mxu0 %v1094
      %1286 = vmatpush1.bf16.msra.mxu0 %v1093
      %1287 = vmatprep.subr.bf16.mxu0 %v1096
      %1288 = vmatpush1.bf16.msra.mxu0 %v1095
      %1289 = vmatprep.subr.bf16.mxu0 %v1098
      %1290 = vmatpush1.bf16.msra.mxu0 %v1097
      %1291 = vmatprep.subr.bf16.mxu0 %v1100
      %1292 = vmatpush1.bf16.msra.mxu0 %v1099
      %1293 = vmatprep.subr.bf16.mxu0 0
      %1294 = vmatpush1.bf16.msra.mxu0 0
      %1295 = vmatprep.subr.bf16.mxu0 0
      %1296 = vmatpush1.bf16.msra.mxu0 0
      %1297 = vmatprep.subr.bf16.mxu0 0
      %1298 = vmatpush1.bf16.msra.mxu0 0
      %1299 = vmatprep.subr.bf16.mxu0 0
      %1300 = vmatpush1.bf16.msra.mxu0 0
      %1301 = vmatprep.subr.bf16.mxu0 0
      %1302 = vmatpush1.bf16.msra.mxu0 0
      %1303 = vmatprep.subr.bf16.mxu0 0
      %1304 = vmatpush1.bf16.msra.mxu0 0
      %1305 = vmatprep.subr.bf16.mxu0 0
      %1306 = vmatpush1.bf16.msra.mxu0 0
      %1307 = vmatprep.subr.bf16.mxu0 0
      %1308 = vmatpush1.bf16.msra.mxu0 0
      %1309 = vmatprep.mubr.bf16.mxu0 0
      %1310 = vmatmul.mubr.bf16.gmra.mrb[0].mxu0 %v1269
      %v1311 = vpop.f32.mrb[0].mxu0
      %v1312 = vadd.f32 %v1216, %v1311
      %v1313 = vpop.f32.mrb[0].mxu0
      %v1314 = vadd.f32 %v1216, %v1313
      %v1315 = vpop.f32.mrb[0].mxu0
      %v1316 = vadd.f32 %v1221, %v1315
      %v1317 = vpop.f32.mrb[0].mxu0
      %v1318 = vadd.f32 %v1221, %v1317
      %1319 = vmatprep.mubr.bf16.mxu0 0
      %1320 = vmatmul.mubr.bf16.gmra.mrb[0].mxu0 %v1270
      %v1321 = vpop.f32.mrb[0].mxu0
      %v1322 = vadd.f32 %v1226, %v1321
      %v1323 = vpop.f32.mrb[0].mxu0
      %v1324 = vadd.f32 %v1226, %v1323
      %v1325 = vpop.f32.mrb[0].mxu0
      %v1326 = vadd.f32 %v1231, %v1325
      %v1327 = vpop.f32.mrb[0].mxu0
      %v1328 = vadd.f32 %v1231, %v1327
      %1329 = vmatprep.mubr.bf16.mxu0 0
      %1330 = vmatmul.mubr.bf16.gmra.mrb[0].mxu0 %v1271
      %v1331 = vpop.f32.mrb[0].mxu0
      %v1332 = vadd.f32 %v1236, %v1331
      %v1333 = vpop.f32.mrb[0].mxu0
      %v1334 = vadd.f32 %v1236, %v1333
      %v1335 = vpop.f32.mrb[0].mxu0
      %v1336 = vadd.f32 %v1241, %v1335
      %v1337 = vpop.f32.mrb[0].mxu0
      %v1338 = vadd.f32 %v1241, %v1337
      %1339 = vmatprep.mubr.bf16.mxu0 0
      %1340 = vmatmul.mubr.bf16.gmra.mrb[0].mxu0 %v1272
      %v1341 = vpop.f32.mrb[0].mxu0
      %v1342 = vadd.f32 %v1246, %v1341
      %v1343 = vpop.f32.mrb[0].mxu0
      %v1344 = vadd.f32 %v1246, %v1343
      %v1345 = vpop.f32.mrb[0].mxu0
      %v1346 = vadd.f32 %v1251, %v1345
      %v1347 = vpop.f32.mrb[0].mxu0
      %v1348 = vadd.f32 %v1251, %v1347
      %1349 = vdwg.mxu0
      %v1350 = vmax.f32 %v1312, 0.0
      %v1351 = vmax.f32 %v1314, 0.0
      %v1352 = vmax.f32 %v1316, 0.0
      %v1353 = vmax.f32 %v1318, 0.0
      %v1354 = vmax.f32 %v1322, 0.0
      %v1355 = vmax.f32 %v1324, 0.0
      %v1356 = vmax.f32 %v1326, 0.0
      %v1357 = vmax.f32 %v1328, 0.0
      %v1358 = vmax.f32 %v1332, 0.0
      %v1359 = vmax.f32 %v1334, 0.0
      %v1360 = vmax.f32 %v1336, 0.0
      %v1361 = vmax.f32 %v1338, 0.0
      %v1362 = vmax.f32 %v1342, 0.0
      %v1363 = vmax.f32 %v1344, 0.0
      %v1364 = vmax.f32 %v1346, 0.0
      %v1365 = vmax.f32 %v1348, 0.0
      %v1366 = vpack.c.bf16 %v1352, %v1350
      %v1367 = vpack.c.bf16 %v1353, %v1351
      %v1368 = vpack.c.bf16 %v1356, %v1354
      %v1369 = vpack.c.bf16 %v1357, %v1355
      %v1370 = vpack.c.bf16 %v1360, %v1358
      %v1371 = vpack.c.bf16 %v1361, %v1359
      %v1372 = vpack.c.bf16 %v1364, %v1362
      %v1373 = vpack.c.bf16 %v1365, %v1363
      %v1374 = vld [vmem:[%s7] sm:$0xf]
      %v1375 = vld [vmem:[%s7 + $0x4] sm:$0xf]
      %v1376 = vld [vmem:[%s7 + $0x8] sm:$0xf]
      %v1377 = vld [vmem:[%s7 + $0xc] sm:$0xf]
      %v1378 = vld [vmem:[%s7 + $0x10] sm:$0xf]
      %v1379 = vld [vmem:[%s7 + $0x14] sm:$0xf]
      %v1380 = vld [vmem:[%s7 + $0x18] sm:$0xf]
      %v1381 = vld [vmem:[%s7 + $0x1c] sm:$0xf]
      %v1382 = vld [vmem:[%s8] sm:$0xff]
      %v1383 = vld [vmem:[%s8 + $0x8] sm:$0xff]
      %v1384 = vld [vmem:[%s8 + $0x10] sm:$0xff]
      %v1385 = vld [vmem:[%s8 + $0x18] sm:$0xff]
      %v1386 = vld [vmem:[%s8 + $0x20] sm:$0xff]
      %v1387 = vld [vmem:[%s8 + $0x28] sm:$0xff]
      %v1388 = vld [vmem:[%s8 + $0x30] sm:$0xff]
      %v1389 = vld [vmem:[%s8 + $0x38] sm:$0xff]
      %1391 = vset.pattern.permute.xlu0 0
      %1392 = vperm.xlu0 %1391, %v1382
      %v1393 = vpop.permute.xlu0 %1392
      %1396 = vset.pattern.permute.xlu0 0
      %1397 = vperm.xlu0 %1396, %v1383
      %v1398 = vpop.permute.xlu0 %1397
      %1401 = vset.pattern.permute.xlu0 0
      %1402 = vperm.xlu0 %1401, %v1384
      %v1403 = vpop.permute.xlu0 %1402
      %1406 = vset.pattern.permute.xlu0 0
      %1407 = vperm.xlu0 %1406, %v1385
      %v1408 = vpop.permute.xlu0 %1407
      %1411 = vset.pattern.permute.xlu0 0
      %1412 = vperm.xlu0 %1411, %v1386
      %v1413 = vpop.permute.xlu0 %1412
      %1416 = vset.pattern.permute.xlu0 0
      %1417 = vperm.xlu0 %1416, %v1387
      %v1418 = vpop.permute.xlu0 %1417
      %1421 = vset.pattern.permute.xlu0 0
      %1422 = vperm.xlu0 %1421, %v1388
      %v1423 = vpop.permute.xlu0 %1422
      %1426 = vset.pattern.permute.xlu0 0
      %1427 = vperm.xlu0 %1426, %v1389
      %v1428 = vpop.permute.xlu0 %1427
      %v1438 = vunpack.c.l.b16 %v1374
      %v1439 = vunpack.c.l.b16 %v1375
      %v1440 = vunpack.c.l.b16 %v1376
      %v1441 = vunpack.c.l.b16 %v1377
      %v1442 = vunpack.c.l.b16 %v1378
      %v1443 = vunpack.c.l.b16 %v1379
      %v1444 = vunpack.c.l.b16 %v1380
      %v1445 = vunpack.c.l.b16 %v1381
      %v1446 = vpack.c.b16 %v1439, %v1438
      %v1447 = vpack.c.b16 %v1441, %v1440
      %v1448 = vpack.c.b16 %v1443, %v1442
      %v1449 = vpack.c.b16 %v1445, %v1444
      %vm1450 = vcmask 523264
      %v1452 = vsel %vm1450, %v1446, 0
      %v1455 = vsel %vm1450, %v1447, 0
      %v1458 = vsel %vm1450, %v1448, 0
      %v1461 = vsel %vm1450, %v1449, 0
      %1463 = vmatprep.subr.bf16.mxu0 %v1367
      %1464 = vmatpush1.bf16.msra.mxu0 %v1366
      %1465 = vmatprep.subr.bf16.mxu0 %v1369
      %1466 = vmatpush1.bf16.msra.mxu0 %v1368
      %1467 = vmatprep.subr.bf16.mxu0 %v1371
      %1468 = vmatpush1.bf16.msra.mxu0 %v1370
      %1469 = vmatprep.subr.bf16.mxu0 %v1373
      %1470 = vmatpush1.bf16.msra.mxu0 %v1372
      %1471 = vmatprep.subr.bf16.mxu0 0
      %1472 = vmatpush1.bf16.msra.mxu0 0
      %1473 = vmatprep.subr.bf16.mxu0 0
      %1474 = vmatpush1.bf16.msra.mxu0 0
      %1475 = vmatprep.subr.bf16.mxu0 0
      %1476 = vmatpush1.bf16.msra.mxu0 0
      %1477 = vmatprep.subr.bf16.mxu0 0
      %1478 = vmatpush1.bf16.msra.mxu0 0
      %1479 = vmatprep.subr.bf16.mxu0 0
      %1480 = vmatpush1.bf16.msra.mxu0 0
      %1481 = vmatprep.subr.bf16.mxu0 0
      %1482 = vmatpush1.bf16.msra.mxu0 0
      %1483 = vmatprep.subr.bf16.mxu0 0
      %1484 = vmatpush1.bf16.msra.mxu0 0
      %1485 = vmatprep.subr.bf16.mxu0 0
      %1486 = vmatpush1.bf16.msra.mxu0 0
      %1487 = vmatprep.subr.bf16.mxu0 0
      %1488 = vmatpush1.bf16.msra.mxu0 0
      %1489 = vmatprep.subr.bf16.mxu0 0
      %1490 = vmatpush1.bf16.msra.mxu0 0
      %1491 = vmatprep.subr.bf16.mxu0 0
      %1492 = vmatpush1.bf16.msra.mxu0 0
      %1493 = vmatprep.subr.bf16.mxu0 0
      %1494 = vmatpush1.bf16.msra.mxu0 0
      %1495 = vmatprep.mubr.bf16.mxu0 0
      %1496 = vmatmul.mubr.bf16.gmra.mrb[0].mxu0 %v1452
      %v1497 = vpop.f32.mrb[0].mxu0
      %v1498 = vadd.f32 %v1393, %v1497
      %v1499 = vpop.f32.mrb[0].mxu0
      %v1500 = vadd.f32 %v1393, %v1499
      %v1501 = vpop.f32.mrb[0].mxu0
      %v1502 = vadd.f32 %v1398, %v1501
      %v1503 = vpop.f32.mrb[0].mxu0
      %v1504 = vadd.f32 %v1398, %v1503
      %1505 = vmatprep.mubr.bf16.mxu0 0
      %1506 = vmatmul.mubr.bf16.gmra.mrb[0].mxu0 %v1455
      %v1507 = vpop.f32.mrb[0].mxu0
      %v1508 = vadd.f32 %v1403, %v1507
      %v1509 = vpop.f32.mrb[0].mxu0
      %v1510 = vadd.f32 %v1403, %v1509
      %v1511 = vpop.f32.mrb[0].mxu0
      %v1512 = vadd.f32 %v1408, %v1511
      %v1513 = vpop.f32.mrb[0].mxu0
      %v1514 = vadd.f32 %v1408, %v1513
      %1515 = vmatprep.mubr.bf16.mxu0 0
      %1516 = vmatmul.mubr.bf16.gmra.mrb[0].mxu0 %v1458
      %v1517 = vpop.f32.mrb[0].mxu0
      %v1518 = vadd.f32 %v1413, %v1517
      %v1519 = vpop.f32.mrb[0].mxu0
      %v1520 = vadd.f32 %v1413, %v1519
      %v1521 = vpop.f32.mrb[0].mxu0
      %v1522 = vadd.f32 %v1418, %v1521
      %v1523 = vpop.f32.mrb[0].mxu0
      %v1524 = vadd.f32 %v1418, %v1523
      %1525 = vmatprep.mubr.bf16.mxu0 0
      %1526 = vmatmul.mubr.bf16.gmra.mrb[0].mxu0 %v1461
      %v1527 = vpop.f32.mrb[0].mxu0
      %v1528 = vadd.f32 %v1423, %v1527
      %v1529 = vpop.f32.mrb[0].mxu0
      %v1530 = vadd.f32 %v1423, %v1529
      %v1531 = vpop.f32.mrb[0].mxu0
      %v1532 = vadd.f32 %v1428, %v1531
      %v1533 = vpop.f32.mrb[0].mxu0
      %v1534 = vadd.f32 %v1428, %v1533
      %1535 = vdwg.mxu0
      %v1536 = vmax.f32 %v1498, 0.0
      %v1537 = vmax.f32 %v1500, 0.0
      %v1538 = vmax.f32 %v1502, 0.0
      %v1539 = vmax.f32 %v1504, 0.0
      %v1540 = vmax.f32 %v1508, 0.0
      %v1541 = vmax.f32 %v1510, 0.0
      %v1542 = vmax.f32 %v1512, 0.0
      %v1543 = vmax.f32 %v1514, 0.0
      %v1544 = vmax.f32 %v1518, 0.0
      %v1545 = vmax.f32 %v1520, 0.0
      %v1546 = vmax.f32 %v1522, 0.0
      %v1547 = vmax.f32 %v1524, 0.0
      %v1548 = vmax.f32 %v1528, 0.0
      %v1549 = vmax.f32 %v1530, 0.0
      %v1550 = vmax.f32 %v1532, 0.0
      %v1551 = vmax.f32 %v1534, 0.0
      %v1552 = vpack.c.bf16 %v1538, %v1536
      %v1553 = vpack.c.bf16 %v1539, %v1537
      %v1554 = vpack.c.bf16 %v1542, %v1540
      %v1555 = vpack.c.bf16 %v1543, %v1541
      %v1556 = vpack.c.bf16 %v1546, %v1544
      %v1557 = vpack.c.bf16 %v1547, %v1545
      %v1558 = vpack.c.bf16 %v1550, %v1548
      %v1559 = vpack.c.bf16 %v1551, %v1549
      %v1560 = vld [vmem:[%s9] sm:$0xf]
      %v1561 = vld [vmem:[%s9 + $0x4] sm:$0xf]
      %v1562 = vld [vmem:[%s9 + $0x8] sm:$0xf]
      %v1563 = vld [vmem:[%s9 + $0xc] sm:$0xf]
      %v1564 = vld [vmem:[%s9 + $0x10] sm:$0xf]
      %v1565 = vld [vmem:[%s9 + $0x14] sm:$0xf]
      %v1566 = vld [vmem:[%s9 + $0x18] sm:$0xf]
      %v1567 = vld [vmem:[%s9 + $0x1c] sm:$0xf]
      %v1568 = vld [vmem:[%s9 + $0x20] sm:$0xf]
      %v1569 = vld [vmem:[%s9 + $0x24] sm:$0xf]
      %v1570 = vld [vmem:[%s9 + $0x28] sm:$0xf]
      %v1571 = vld [vmem:[%s9 + $0x2c] sm:$0xf]
      %v1572 = vld [vmem:[%s9 + $0x30] sm:$0xf]
      %v1573 = vld [vmem:[%s9 + $0x34] sm:$0xf]
      %v1574 = vld [vmem:[%s9 + $0x38] sm:$0xf]
      %v1575 = vld [vmem:[%s9 + $0x3c] sm:$0xf]
      %v1576 = vld [vmem:[%s10] sm:$0xff]
      %v1577 = vld [vmem:[%s10 + $0x8] sm:$0xff]
      %v1578 = vld [vmem:[%s10 + $0x10] sm:$0xff]
      %v1579 = vld [vmem:[%s10 + $0x18] sm:$0xff]
      %v1580 = vld [vmem:[%s10 + $0x20] sm:$0xff]
      %v1581 = vld [vmem:[%s10 + $0x28] sm:$0xff]
      %v1582 = vld [vmem:[%s10 + $0x30] sm:$0xff]
      %v1583 = vld [vmem:[%s10 + $0x38] sm:$0xff]
      %v1584 = vld [vmem:[%s10 + $0x40] sm:$0xff]
      %v1585 = vld [vmem:[%s10 + $0x48] sm:$0xff]
      %v1586 = vld [vmem:[%s10 + $0x50] sm:$0xff]
      %v1587 = vld [vmem:[%s10 + $0x58] sm:$0xff]
      %v1588 = vld [vmem:[%s10 + $0x60] sm:$0xff]
      %v1589 = vld [vmem:[%s10 + $0x68] sm:$0xff]
      %v1590 = vld [vmem:[%s10 + $0x70] sm:$0xff]
      %v1591 = vld [vmem:[%s10 + $0x78] sm:$0xff]
      %1593 = vset.pattern.permute.xlu0 0
      %1594 = vperm.xlu0 %1593, %v1576
      %v1595 = vpop.permute.xlu0 %1594
      %1598 = vset.pattern.permute.xlu0 0
      %1599 = vperm.xlu0 %1598, %v1577
      %v1600 = vpop.permute.xlu0 %1599
      %1603 = vset.pattern.permute.xlu0 0
      %1604 = vperm.xlu0 %1603, %v1578
      %v1605 = vpop.permute.xlu0 %1604
      %1608 = vset.pattern.permute.xlu0 0
      %1609 = vperm.xlu0 %1608, %v1579
      %v1610 = vpop.permute.xlu0 %1609
      %1613 = vset.pattern.permute.xlu0 0
      %1614 = vperm.xlu0 %1613, %v1580
      %v1615 = vpop.permute.xlu0 %1614
      %1618 = vset.pattern.permute.xlu0 0
      %1619 = vperm.xlu0 %1618, %v1581
      %v1620 = vpop.permute.xlu0 %1619
      %1623 = vset.pattern.permute.xlu0 0
      %1624 = vperm.xlu0 %1623, %v1582
      %v1625 = vpop.permute.xlu0 %1624
      %1628 = vset.pattern.permute.xlu0 0
      %1629 = vperm.xlu0 %1628, %v1583
      %v1630 = vpop.permute.xlu0 %1629
      %1633 = vset.pattern.permute.xlu0 0
      %1634 = vperm.xlu0 %1633, %v1584
      %v1635 = vpop.permute.xlu0 %1634
      %1638 = vset.pattern.permute.xlu0 0
      %1639 = vperm.xlu0 %1638, %v1585
      %v1640 = vpop.permute.xlu0 %1639
      %1643 = vset.pattern.permute.xlu0 0
      %1644 = vperm.xlu0 %1643, %v1586
      %v1645 = vpop.permute.xlu0 %1644
      %1648 = vset.pattern.permute.xlu0 0
      %1649 = vperm.xlu0 %1648, %v1587
      %v1650 = vpop.permute.xlu0 %1649
      %1653 = vset.pattern.permute.xlu0 0
      %1654 = vperm.xlu0 %1653, %v1588
      %v1655 = vpop.permute.xlu0 %1654
      %1658 = vset.pattern.permute.xlu0 0
      %1659 = vperm.xlu0 %1658, %v1589
      %v1660 = vpop.permute.xlu0 %1659
      %1663 = vset.pattern.permute.xlu0 0
      %1664 = vperm.xlu0 %1663, %v1590
      %v1665 = vpop.permute.xlu0 %1664
      %1668 = vset.pattern.permute.xlu0 0
      %1669 = vperm.xlu0 %1668, %v1591
      %v1670 = vpop.permute.xlu0 %1669
      %v1688 = vunpack.c.l.b16 %v1560
      %v1689 = vunpack.c.l.b16 %v1561
      %v1690 = vunpack.c.l.b16 %v1562
      %v1691 = vunpack.c.l.b16 %v1563
      %v1692 = vunpack.c.l.b16 %v1564
      %v1693 = vunpack.c.l.b16 %v1565
      %v1694 = vunpack.c.l.b16 %v1566
      %v1695 = vunpack.c.l.b16 %v1567
      %v1696 = vunpack.c.l.b16 %v1568
      %v1697 = vunpack.c.l.b16 %v1569
      %v1698 = vunpack.c.l.b16 %v1570
      %v1699 = vunpack.c.l.b16 %v1571
      %v1700 = vunpack.c.l.b16 %v1572
      %v1701 = vunpack.c.l.b16 %v1573
      %v1702 = vunpack.c.l.b16 %v1574
      %v1703 = vunpack.c.l.b16 %v1575
      %v1704 = vpack.c.b16 %v1689, %v1688
      %v1705 = vpack.c.b16 %v1691, %v1690
      %v1706 = vpack.c.b16 %v1693, %v1692
      %v1707 = vpack.c.b16 %v1695, %v1694
      %v1708 = vpack.c.b16 %v1697, %v1696
      %v1709 = vpack.c.b16 %v1699, %v1698
      %v1710 = vpack.c.b16 %v1701, %v1700
      %v1711 = vpack.c.b16 %v1703, %v1702
      %v1713 = vsel %vm1450, %v1704, 0
      %v1716 = vsel %vm1450, %v1705, 0
      %v1719 = vsel %vm1450, %v1706, 0
      %v1722 = vsel %vm1450, %v1707, 0
      %v1725 = vsel %vm1450, %v1708, 0
      %v1728 = vsel %vm1450, %v1709, 0
      %v1731 = vsel %vm1450, %v1710, 0
      %v1734 = vsel %vm1450, %v1711, 0
      %1736 = vmatprep.subr.bf16.mxu0 %v1553
      %1737 = vmatpush1.bf16.msra.mxu0 %v1552
      %1738 = vmatprep.subr.bf16.mxu0 %v1555
      %1739 = vmatpush1.bf16.msra.mxu0 %v1554
      %1740 = vmatprep.subr.bf16.mxu0 %v1557
      %1741 = vmatpush1.bf16.msra.mxu0 %v1556
      %1742 = vmatprep.subr.bf16.mxu0 %v1559
      %1743 = vmatpush1.bf16.msra.mxu0 %v1558
      %1744 = vmatprep.subr.bf16.mxu0 0
      %1745 = vmatpush1.bf16.msra.mxu0 0
      %1746 = vmatprep.subr.bf16.mxu0 0
      %1747 = vmatpush1.bf16.msra.mxu0 0
      %1748 = vmatprep.subr.bf16.mxu0 0
      %1749 = vmatpush1.bf16.msra.mxu0 0
      %1750 = vmatprep.subr.bf16.mxu0 0
      %1751 = vmatpush1.bf16.msra.mxu0 0
      %1752 = vmatprep.subr.bf16.mxu0 0
      %1753 = vmatpush1.bf16.msra.mxu0 0
      %1754 = vmatprep.subr.bf16.mxu0 0
      %1755 = vmatpush1.bf16.msra.mxu0 0
      %1756 = vmatprep.subr.bf16.mxu0 0
      %1757 = vmatpush1.bf16.msra.mxu0 0
      %1758 = vmatprep.subr.bf16.mxu0 0
      %1759 = vmatpush1.bf16.msra.mxu0 0
      %1760 = vmatprep.subr.bf16.mxu0 0
      %1761 = vmatpush1.bf16.msra.mxu0 0
      %1762 = vmatprep.subr.bf16.mxu0 0
      %1763 = vmatpush1.bf16.msra.mxu0 0
      %1764 = vmatprep.subr.bf16.mxu0 0
      %1765 = vmatpush1.bf16.msra.mxu0 0
      %1766 = vmatprep.subr.bf16.mxu0 0
      %1767 = vmatpush1.bf16.msra.mxu0 0
      %1768 = vmatprep.mubr.bf16.mxu0 0
      %1769 = vmatmul.mubr.bf16.gmra.mrb[0].mxu0 %v1713
      %v1770 = vpop.f32.mrb[0].mxu0
      %v1771 = vadd.f32 %v1595, %v1770
      %v1772 = vpop.f32.mrb[0].mxu0
      %v1773 = vadd.f32 %v1595, %v1772
      %v1774 = vpop.f32.mrb[0].mxu0
      %v1775 = vadd.f32 %v1600, %v1774
      %v1776 = vpop.f32.mrb[0].mxu0
      %v1777 = vadd.f32 %v1600, %v1776
      %1778 = vmatprep.mubr.bf16.mxu0 0
      %1779 = vmatmul.mubr.bf16.gmra.mrb[0].mxu0 %v1716
      %v1780 = vpop.f32.mrb[0].mxu0
      %v1781 = vadd.f32 %v1605, %v1780
      %v1782 = vpop.f32.mrb[0].mxu0
      %v1783 = vadd.f32 %v1605, %v1782
      %v1784 = vpop.f32.mrb[0].mxu0
      %v1785 = vadd.f32 %v1610, %v1784
      %v1786 = vpop.f32.mrb[0].mxu0
      %v1787 = vadd.f32 %v1610, %v1786
      %1788 = vmatprep.mubr.bf16.mxu0 0
      %1789 = vmatmul.mubr.bf16.gmra.mrb[0].mxu0 %v1719
      %v1790 = vpop.f32.mrb[0].mxu0
      %v1791 = vadd.f32 %v1615, %v1790
      %v1792 = vpop.f32.mrb[0].mxu0
      %v1793 = vadd.f32 %v1615, %v1792
      %v1794 = vpop.f32.mrb[0].mxu0
      %v1795 = vadd.f32 %v1620, %v1794
      %v1796 = vpop.f32.mrb[0].mxu0
      %v1797 = vadd.f32 %v1620, %v1796
      %1798 = vmatprep.mubr.bf16.mxu0 0
      %1799 = vmatmul.mubr.bf16.gmra.mrb[0].mxu0 %v1722
      %v1800 = vpop.f32.mrb[0].mxu0
      %v1801 = vadd.f32 %v1625, %v1800
      %v1802 = vpop.f32.mrb[0].mxu0
      %v1803 = vadd.f32 %v1625, %v1802
      %v1804 = vpop.f32.mrb[0].mxu0
      %v1805 = vadd.f32 %v1630, %v1804
      %v1806 = vpop.f32.mrb[0].mxu0
      %v1807 = vadd.f32 %v1630, %v1806
      %1808 = vmatprep.mubr.bf16.mxu0 0
      %1809 = vmatmul.mubr.bf16.gmra.mrb[0].mxu0 %v1725
      %v1810 = vpop.f32.mrb[0].mxu0
      %v1811 = vadd.f32 %v1635, %v1810
      %v1812 = vpop.f32.mrb[0].mxu0
      %v1813 = vadd.f32 %v1635, %v1812
      %v1814 = vpop.f32.mrb[0].mxu0
      %v1815 = vadd.f32 %v1640, %v1814
      %v1816 = vpop.f32.mrb[0].mxu0
      %v1817 = vadd.f32 %v1640, %v1816
      %1818 = vmatprep.mubr.bf16.mxu0 0
      %1819 = vmatmul.mubr.bf16.gmra.mrb[0].mxu0 %v1728
      %v1820 = vpop.f32.mrb[0].mxu0
      %v1821 = vadd.f32 %v1645, %v1820
      %v1822 = vpop.f32.mrb[0].mxu0
      %v1823 = vadd.f32 %v1645, %v1822
      %v1824 = vpop.f32.mrb[0].mxu0
      %v1825 = vadd.f32 %v1650, %v1824
      %v1826 = vpop.f32.mrb[0].mxu0
      %v1827 = vadd.f32 %v1650, %v1826
      %1828 = vmatprep.mubr.bf16.mxu0 0
      %1829 = vmatmul.mubr.bf16.gmra.mrb[0].mxu0 %v1731
      %v1830 = vpop.f32.mrb[0].mxu0
      %v1831 = vadd.f32 %v1655, %v1830
      %v1832 = vpop.f32.mrb[0].mxu0
      %v1833 = vadd.f32 %v1655, %v1832
      %v1834 = vpop.f32.mrb[0].mxu0
      %v1835 = vadd.f32 %v1660, %v1834
      %v1836 = vpop.f32.mrb[0].mxu0
      %v1837 = vadd.f32 %v1660, %v1836
      %1838 = vmatprep.mubr.bf16.mxu0 0
      %1839 = vmatmul.mubr.bf16.gmra.mrb[0].mxu0 %v1734
      %v1840 = vpop.f32.mrb[0].mxu0
      %v1841 = vadd.f32 %v1665, %v1840
      %v1842 = vpop.f32.mrb[0].mxu0
      %v1843 = vadd.f32 %v1665, %v1842
      %v1844 = vpop.f32.mrb[0].mxu0
      %v1845 = vadd.f32 %v1670, %v1844
      %v1846 = vpop.f32.mrb[0].mxu0
      %v1847 = vadd.f32 %v1670, %v1846
      %1848 = vdwg.mxu0
      %v1849 = vmax.f32 %v1771, 0.0
      %v1850 = vmax.f32 %v1773, 0.0
      %v1851 = vmax.f32 %v1775, 0.0
      %v1852 = vmax.f32 %v1777, 0.0
      %v1853 = vmax.f32 %v1781, 0.0
      %v1854 = vmax.f32 %v1783, 0.0
      %v1855 = vmax.f32 %v1785, 0.0
      %v1856 = vmax.f32 %v1787, 0.0
      %v1857 = vmax.f32 %v1791, 0.0
      %v1858 = vmax.f32 %v1793, 0.0
      %v1859 = vmax.f32 %v1795, 0.0
      %v1860 = vmax.f32 %v1797, 0.0
      %v1861 = vmax.f32 %v1801, 0.0
      %v1862 = vmax.f32 %v1803, 0.0
      %v1863 = vmax.f32 %v1805, 0.0
      %v1864 = vmax.f32 %v1807, 0.0
      %v1865 = vmax.f32 %v1811, 0.0
      %v1866 = vmax.f32 %v1813, 0.0
      %v1867 = vmax.f32 %v1815, 0.0
      %v1868 = vmax.f32 %v1817, 0.0
      %v1869 = vmax.f32 %v1821, 0.0
      %v1870 = vmax.f32 %v1823, 0.0
      %v1871 = vmax.f32 %v1825, 0.0
      %v1872 = vmax.f32 %v1827, 0.0
      %v1873 = vmax.f32 %v1831, 0.0
      %v1874 = vmax.f32 %v1833, 0.0
      %v1875 = vmax.f32 %v1835, 0.0
      %v1876 = vmax.f32 %v1837, 0.0
      %v1877 = vmax.f32 %v1841, 0.0
      %v1878 = vmax.f32 %v1843, 0.0
      %v1879 = vmax.f32 %v1845, 0.0
      %v1880 = vmax.f32 %v1847, 0.0
      %v1881 = vld [vmem:[%s3] sm:$0xf]
      %v1882 = vld [vmem:[%s3 + $0x4] sm:$0xf]
      %v1883 = vld [vmem:[%s3 + $0x8] sm:$0xf]
      %v1884 = vld [vmem:[%s3 + $0xc] sm:$0xf]
      %v1885 = vld [vmem:[%s3 + $0x10] sm:$0xf]
      %v1886 = vld [vmem:[%s3 + $0x14] sm:$0xf]
      %v1887 = vld [vmem:[%s3 + $0x18] sm:$0xf]
      %v1888 = vld [vmem:[%s3 + $0x1c] sm:$0xf]
      %v1889 = vld [vmem:[%s3 + $0x20] sm:$0xf]
      %v1890 = vld [vmem:[%s3 + $0x24] sm:$0xf]
      %v1891 = vld [vmem:[%s3 + $0x28] sm:$0xf]
      %v1892 = vld [vmem:[%s3 + $0x2c] sm:$0xf]
      %v1893 = vld [vmem:[%s3 + $0x30] sm:$0xf]
      %v1894 = vld [vmem:[%s3 + $0x34] sm:$0xf]
      %v1895 = vld [vmem:[%s3 + $0x38] sm:$0xf]
      %v1896 = vld [vmem:[%s3 + $0x3c] sm:$0xf]
      %v1897 = vld [vmem:[%s4] sm:$0xff]
      %v1898 = vld [vmem:[%s4 + $0x8] sm:$0xff]
      %v1899 = vld [vmem:[%s4 + $0x10] sm:$0xff]
      %v1900 = vld [vmem:[%s4 + $0x18] sm:$0xff]
      %v1901 = vld [vmem:[%s4 + $0x20] sm:$0xff]
      %v1902 = vld [vmem:[%s4 + $0x28] sm:$0xff]
      %v1903 = vld [vmem:[%s4 + $0x30] sm:$0xff]
      %v1904 = vld [vmem:[%s4 + $0x38] sm:$0xff]
      %v1905 = vld [vmem:[%s4 + $0x40] sm:$0xff]
      %v1906 = vld [vmem:[%s4 + $0x48] sm:$0xff]
      %v1907 = vld [vmem:[%s4 + $0x50] sm:$0xff]
      %v1908 = vld [vmem:[%s4 + $0x58] sm:$0xff]
      %v1909 = vld [vmem:[%s4 + $0x60] sm:$0xff]
      %v1910 = vld [vmem:[%s4 + $0x68] sm:$0xff]
      %v1911 = vld [vmem:[%s4 + $0x70] sm:$0xff]
      %v1912 = vld [vmem:[%s4 + $0x78] sm:$0xff]
      %1914 = vset.pattern.permute.xlu0 0
      %1915 = vperm.xlu0 %1914, %v1897
      %v1916 = vpop.permute.xlu0 %1915
      %1919 = vset.pattern.permute.xlu0 0
      %1920 = vperm.xlu0 %1919, %v1898
      %v1921 = vpop.permute.xlu0 %1920
      %1924 = vset.pattern.permute.xlu0 0
      %1925 = vperm.xlu0 %1924, %v1899
      %v1926 = vpop.permute.xlu0 %1925
      %1929 = vset.pattern.permute.xlu0 0
      %1930 = vperm.xlu0 %1929, %v1900
      %v1931 = vpop.permute.xlu0 %1930
      %1934 = vset.pattern.permute.xlu0 0
      %1935 = vperm.xlu0 %1934, %v1901
      %v1936 = vpop.permute.xlu0 %1935
      %1939 = vset.pattern.permute.xlu0 0
      %1940 = vperm.xlu0 %1939, %v1902
      %v1941 = vpop.permute.xlu0 %1940
      %1944 = vset.pattern.permute.xlu0 0
      %1945 = vperm.xlu0 %1944, %v1903
      %v1946 = vpop.permute.xlu0 %1945
      %1949 = vset.pattern.permute.xlu0 0
      %1950 = vperm.xlu0 %1949, %v1904
      %v1951 = vpop.permute.xlu0 %1950
      %1954 = vset.pattern.permute.xlu0 0
      %1955 = vperm.xlu0 %1954, %v1905
      %v1956 = vpop.permute.xlu0 %1955
      %1959 = vset.pattern.permute.xlu0 0
      %1960 = vperm.xlu0 %1959, %v1906
      %v1961 = vpop.permute.xlu0 %1960
      %1964 = vset.pattern.permute.xlu0 0
      %1965 = vperm.xlu0 %1964, %v1907
      %v1966 = vpop.permute.xlu0 %1965
      %1969 = vset.pattern.permute.xlu0 0
      %1970 = vperm.xlu0 %1969, %v1908
      %v1971 = vpop.permute.xlu0 %1970
      %1974 = vset.pattern.permute.xlu0 0
      %1975 = vperm.xlu0 %1974, %v1909
      %v1976 = vpop.permute.xlu0 %1975
      %1979 = vset.pattern.permute.xlu0 0
      %1980 = vperm.xlu0 %1979, %v1910
      %v1981 = vpop.permute.xlu0 %1980
      %1984 = vset.pattern.permute.xlu0 0
      %1985 = vperm.xlu0 %1984, %v1911
      %v1986 = vpop.permute.xlu0 %1985
      %1989 = vset.pattern.permute.xlu0 0
      %1990 = vperm.xlu0 %1989, %v1912
      %v1991 = vpop.permute.xlu0 %1990
      %v2009 = vunpack.c.l.b16 %v1881
      %v2010 = vunpack.c.l.b16 %v1882
      %v2011 = vunpack.c.l.b16 %v1883
      %v2012 = vunpack.c.l.b16 %v1884
      %v2013 = vunpack.c.l.b16 %v1885
      %v2014 = vunpack.c.l.b16 %v1886
      %v2015 = vunpack.c.l.b16 %v1887
      %v2016 = vunpack.c.l.b16 %v1888
      %v2017 = vunpack.c.l.b16 %v1889
      %v2018 = vunpack.c.l.b16 %v1890
      %v2019 = vunpack.c.l.b16 %v1891
      %v2020 = vunpack.c.l.b16 %v1892
      %v2021 = vunpack.c.l.b16 %v1893
      %v2022 = vunpack.c.l.b16 %v1894
      %v2023 = vunpack.c.l.b16 %v1895
      %v2024 = vunpack.c.l.b16 %v1896
      %v2025 = vpack.c.b16 %v2010, %v2009
      %v2026 = vpack.c.b16 %v2012, %v2011
      %v2027 = vpack.c.b16 %v2014, %v2013
      %v2028 = vpack.c.b16 %v2016, %v2015
      %v2029 = vpack.c.b16 %v2018, %v2017
      %v2030 = vpack.c.b16 %v2020, %v2019
      %v2031 = vpack.c.b16 %v2022, %v2021
      %v2032 = vpack.c.b16 %v2024, %v2023
      %v2034 = vsel %vm908, %v2025, 0
      %v2037 = vsel %vm908, %v2026, 0
      %v2040 = vsel %vm908, %v2027, 0
      %v2043 = vsel %vm908, %v2028, 0
      %v2046 = vsel %vm908, %v2029, 0
      %v2049 = vsel %vm908, %v2030, 0
      %v2052 = vsel %vm908, %v2031, 0
      %v2055 = vsel %vm908, %v2032, 0
      %2057 = vmatprep.subr.bf16.mxu0 %v938
      %2058 = vmatpush1.bf16.msra.mxu0 %v935
      %2059 = vmatprep.subr.bf16.mxu0 0
      %2060 = vmatpush1.bf16.msra.mxu0 0
      %2061 = vmatprep.subr.bf16.mxu0 0
      %2062 = vmatpush1.bf16.msra.mxu0 0
      %2063 = vmatprep.subr.bf16.mxu0 0
      %2064 = vmatpush1.bf16.msra.mxu0 0
      %2065 = vmatprep.subr.bf16.mxu0 0
      %2066 = vmatpush1.bf16.msra.mxu0 0
      %2067 = vmatprep.subr.bf16.mxu0 0
      %2068 = vmatpush1.bf16.msra.mxu0 0
      %2069 = vmatprep.subr.bf16.mxu0 0
      %2070 = vmatpush1.bf16.msra.mxu0 0
      %2071 = vmatprep.subr.bf16.mxu0 0
      %2072 = vmatpush1.bf16.msra.mxu0 0
      %2073 = vmatprep.subr.bf16.mxu0 0
      %2074 = vmatpush1.bf16.msra.mxu0 0
      %2075 = vmatprep.subr.bf16.mxu0 0
      %2076 = vmatpush1.bf16.msra.mxu0 0
      %2077 = vmatprep.subr.bf16.mxu0 0
      %2078 = vmatpush1.bf16.msra.mxu0 0
      %2079 = vmatprep.subr.bf16.mxu0 0
      %2080 = vmatpush1.bf16.msra.mxu0 0
      %2081 = vmatprep.subr.bf16.mxu0 0
      %2082 = vmatpush1.bf16.msra.mxu0 0
      %2083 = vmatprep.subr.bf16.mxu0 0
      %2084 = vmatpush1.bf16.msra.mxu0 0
      %2085 = vmatprep.subr.bf16.mxu0 0
      %2086 = vmatpush1.bf16.msra.mxu0 0
      %2087 = vmatprep.subr.bf16.mxu0 0
      %2088 = vmatpush1.bf16.msra.mxu0 0
      %2089 = vmatprep.mubr.bf16.mxu0 0
      %2090 = vmatmul.mubr.bf16.gmra.mrb[0].mxu0 %v2034
      %v2091 = vpop.f32.mrb[0].mxu0
      %v2092 = vadd.f32 %v1916, %v2091
      %v2093 = vpop.f32.mrb[0].mxu0
      %v2094 = vadd.f32 %v1916, %v2093
      %v2095 = vpop.f32.mrb[0].mxu0
      %v2096 = vadd.f32 %v1921, %v2095
      %v2097 = vpop.f32.mrb[0].mxu0
      %v2098 = vadd.f32 %v1921, %v2097
      %2099 = vmatprep.mubr.bf16.mxu0 0
      %2100 = vmatmul.mubr.bf16.gmra.mrb[0].mxu0 %v2037
      %v2101 = vpop.f32.mrb[0].mxu0
      %v2102 = vadd.f32 %v1926, %v2101
      %v2103 = vpop.f32.mrb[0].mxu0
      %v2104 = vadd.f32 %v1926, %v2103
      %v2105 = vpop.f32.mrb[0].mxu0
      %v2106 = vadd.f32 %v1931, %v2105
      %v2107 = vpop.f32.mrb[0].mxu0
      %v2108 = vadd.f32 %v1931, %v2107
      %2109 = vmatprep.mubr.bf16.mxu0 0
      %2110 = vmatmul.mubr.bf16.gmra.mrb[0].mxu0 %v2040
      %v2111 = vpop.f32.mrb[0].mxu0
      %v2112 = vadd.f32 %v1936, %v2111
      %v2113 = vpop.f32.mrb[0].mxu0
      %v2114 = vadd.f32 %v1936, %v2113
      %v2115 = vpop.f32.mrb[0].mxu0
      %v2116 = vadd.f32 %v1941, %v2115
      %v2117 = vpop.f32.mrb[0].mxu0
      %v2118 = vadd.f32 %v1941, %v2117
      %2119 = vmatprep.mubr.bf16.mxu0 0
      %2120 = vmatmul.mubr.bf16.gmra.mrb[0].mxu0 %v2043
      %v2121 = vpop.f32.mrb[0].mxu0
      %v2122 = vadd.f32 %v1946, %v2121
      %v2123 = vpop.f32.mrb[0].mxu0
      %v2124 = vadd.f32 %v1946, %v2123
      %v2125 = vpop.f32.mrb[0].mxu0
      %v2126 = vadd.f32 %v1951, %v2125
      %v2127 = vpop.f32.mrb[0].mxu0
      %v2128 = vadd.f32 %v1951, %v2127
      %2129 = vmatprep.mubr.bf16.mxu0 0
      %2130 = vmatmul.mubr.bf16.gmra.mrb[0].mxu0 %v2046
      %v2131 = vpop.f32.mrb[0].mxu0
      %v2132 = vadd.f32 %v1956, %v2131
      %v2133 = vpop.f32.mrb[0].mxu0
      %v2134 = vadd.f32 %v1956, %v2133
      %v2135 = vpop.f32.mrb[0].mxu0
      %v2136 = vadd.f32 %v1961, %v2135
      %v2137 = vpop.f32.mrb[0].mxu0
      %v2138 = vadd.f32 %v1961, %v2137
      %2139 = vmatprep.mubr.bf16.mxu0 0
      %2140 = vmatmul.mubr.bf16.gmra.mrb[0].mxu0 %v2049
      %v2141 = vpop.f32.mrb[0].mxu0
      %v2142 = vadd.f32 %v1966, %v2141
      %v2143 = vpop.f32.mrb[0].mxu0
      %v2144 = vadd.f32 %v1966, %v2143
      %v2145 = vpop.f32.mrb[0].mxu0
      %v2146 = vadd.f32 %v1971, %v2145
      %v2147 = vpop.f32.mrb[0].mxu0
      %v2148 = vadd.f32 %v1971, %v2147
      %2149 = vmatprep.mubr.bf16.mxu0 0
      %2150 = vmatmul.mubr.bf16.gmra.mrb[0].mxu0 %v2052
      %v2151 = vpop.f32.mrb[0].mxu0
      %v2152 = vadd.f32 %v1976, %v2151
      %v2153 = vpop.f32.mrb[0].mxu0
      %v2154 = vadd.f32 %v1976, %v2153
      %v2155 = vpop.f32.mrb[0].mxu0
      %v2156 = vadd.f32 %v1981, %v2155
      %v2157 = vpop.f32.mrb[0].mxu0
      %v2158 = vadd.f32 %v1981, %v2157
      %2159 = vmatprep.mubr.bf16.mxu0 0
      %2160 = vmatmul.mubr.bf16.gmra.mrb[0].mxu0 %v2055
      %v2161 = vpop.f32.mrb[0].mxu0
      %v2162 = vadd.f32 %v1986, %v2161
      %v2163 = vpop.f32.mrb[0].mxu0
      %v2164 = vadd.f32 %v1986, %v2163
      %v2165 = vpop.f32.mrb[0].mxu0
      %v2166 = vadd.f32 %v1991, %v2165
      %v2167 = vpop.f32.mrb[0].mxu0
      %v2168 = vadd.f32 %v1991, %v2167
      %2169 = vdwg.mxu0
      %v2170 = vmax.f32 %v2092, 0.0
      %v2171 = vmax.f32 %v2094, 0.0
      %v2172 = vmax.f32 %v2096, 0.0
      %v2173 = vmax.f32 %v2098, 0.0
      %v2174 = vmax.f32 %v2102, 0.0
      %v2175 = vmax.f32 %v2104, 0.0
      %v2176 = vmax.f32 %v2106, 0.0
      %v2177 = vmax.f32 %v2108, 0.0
      %v2178 = vmax.f32 %v2112, 0.0
      %v2179 = vmax.f32 %v2114, 0.0
      %v2180 = vmax.f32 %v2116, 0.0
      %v2181 = vmax.f32 %v2118, 0.0
      %v2182 = vmax.f32 %v2122, 0.0
      %v2183 = vmax.f32 %v2124, 0.0
      %v2184 = vmax.f32 %v2126, 0.0
      %v2185 = vmax.f32 %v2128, 0.0
      %v2186 = vmax.f32 %v2132, 0.0
      %v2187 = vmax.f32 %v2134, 0.0
      %v2188 = vmax.f32 %v2136, 0.0
      %v2189 = vmax.f32 %v2138, 0.0
      %v2190 = vmax.f32 %v2142, 0.0
      %v2191 = vmax.f32 %v2144, 0.0
      %v2192 = vmax.f32 %v2146, 0.0
      %v2193 = vmax.f32 %v2148, 0.0
      %v2194 = vmax.f32 %v2152, 0.0
      %v2195 = vmax.f32 %v2154, 0.0
      %v2196 = vmax.f32 %v2156, 0.0
      %v2197 = vmax.f32 %v2158, 0.0
      %v2198 = vmax.f32 %v2162, 0.0
      %v2199 = vmax.f32 %v2164, 0.0
      %v2200 = vmax.f32 %v2166, 0.0
      %v2201 = vmax.f32 %v2168, 0.0
      %v2202 = vpack.c.bf16 %v2172, %v2170
      %v2203 = vpack.c.bf16 %v2173, %v2171
      %v2204 = vpack.c.bf16 %v2176, %v2174
      %v2205 = vpack.c.bf16 %v2177, %v2175
      %v2206 = vpack.c.bf16 %v2180, %v2178
      %v2207 = vpack.c.bf16 %v2181, %v2179
      %v2208 = vpack.c.bf16 %v2184, %v2182
      %v2209 = vpack.c.bf16 %v2185, %v2183
      %v2210 = vpack.c.bf16 %v2188, %v2186
      %v2211 = vpack.c.bf16 %v2189, %v2187
      %v2212 = vpack.c.bf16 %v2192, %v2190
      %v2213 = vpack.c.bf16 %v2193, %v2191
      %v2214 = vpack.c.bf16 %v2196, %v2194
      %v2215 = vpack.c.bf16 %v2197, %v2195
      %v2216 = vpack.c.bf16 %v2200, %v2198
      %v2217 = vpack.c.bf16 %v2201, %v2199
      %v2234 = vunpack.c.l.b16 %v2202
      %v2235 = vunpack.c.l.b16 %v2203
      %v2236 = vunpack.c.h.b16 %v2202
      %v2237 = vunpack.c.h.b16 %v2203
      %v2238 = vunpack.c.l.b16 %v2204
      %v2239 = vunpack.c.l.b16 %v2205
      %v2240 = vunpack.c.h.b16 %v2204
      %v2241 = vunpack.c.h.b16 %v2205
      %v2242 = vunpack.c.l.b16 %v2206
      %v2243 = vunpack.c.l.b16 %v2207
      %v2244 = vunpack.c.h.b16 %v2206
      %v2245 = vunpack.c.h.b16 %v2207
      %v2246 = vunpack.c.l.b16 %v2208
      %v2247 = vunpack.c.l.b16 %v2209
      %v2248 = vunpack.c.h.b16 %v2208
      %v2249 = vunpack.c.h.b16 %v2209
      %v2250 = vunpack.c.l.b16 %v2210
      %v2251 = vunpack.c.l.b16 %v2211
      %v2252 = vunpack.c.h.b16 %v2210
      %v2253 = vunpack.c.h.b16 %v2211
      %v2254 = vunpack.c.l.b16 %v2212
      %v2255 = vunpack.c.l.b16 %v2213
      %v2256 = vunpack.c.h.b16 %v2212
      %v2257 = vunpack.c.h.b16 %v2213
      %v2258 = vunpack.c.l.b16 %v2214
      %v2259 = vunpack.c.l.b16 %v2215
      %v2260 = vunpack.c.h.b16 %v2214
      %v2261 = vunpack.c.h.b16 %v2215
      %v2262 = vunpack.c.l.b16 %v2216
      %v2263 = vunpack.c.l.b16 %v2217
      %v2264 = vunpack.c.h.b16 %v2216
      %v2265 = vunpack.c.h.b16 %v2217
      %v2266 = vpack.c.b16 %v2235, %v2234
      %v2267 = vpack.c.b16 %v2237, %v2236
      %v2268 = vpack.c.b16 %v2239, %v2238
      %v2269 = vpack.c.b16 %v2241, %v2240
      %v2270 = vpack.c.b16 %v2243, %v2242
      %v2271 = vpack.c.b16 %v2245, %v2244
      %v2272 = vpack.c.b16 %v2247, %v2246
      %v2273 = vpack.c.b16 %v2249, %v2248
      %v2274 = vpack.c.b16 %v2251, %v2250
      %v2275 = vpack.c.b16 %v2253, %v2252
      %v2276 = vpack.c.b16 %v2255, %v2254
      %v2277 = vpack.c.b16 %v2257, %v2256
      %v2278 = vpack.c.b16 %v2259, %v2258
      %v2279 = vpack.c.b16 %v2261, %v2260
      %v2280 = vpack.c.b16 %v2263, %v2262
      %v2281 = vpack.c.b16 %v2265, %v2264
      %2298 = vst [vmem:[%s711] sm:$0xff] %v2266
      %2299 = vst [vmem:[%s711 + $0x8] sm:$0xff] %v2267
      %2300 = vst [vmem:[%s711 + $0x10] sm:$0xff] %v2268
      %2301 = vst [vmem:[%s711 + $0x18] sm:$0xff] %v2269
      %2302 = vst [vmem:[%s711 + $0x20] sm:$0xff] %v2270
      %2303 = vst [vmem:[%s711 + $0x28] sm:$0xff] %v2271
      %2304 = vst [vmem:[%s711 + $0x30] sm:$0xff] %v2272
      %2305 = vst [vmem:[%s711 + $0x38] sm:$0xff] %v2273
      %2306 = vst [vmem:[%s711 + $0x40] sm:$0xff] %v2274
      %2307 = vst [vmem:[%s711 + $0x48] sm:$0xff] %v2275
      %2308 = vst [vmem:[%s711 + $0x50] sm:$0xff] %v2276
      %2309 = vst [vmem:[%s711 + $0x58] sm:$0xff] %v2277
      %2310 = vst [vmem:[%s711 + $0x60] sm:$0xff] %v2278
      %2311 = vst [vmem:[%s711 + $0x68] sm:$0xff] %v2279
      %2312 = vst [vmem:[%s711 + $0x70] sm:$0xff] %v2280
      %2313 = vst [vmem:[%s711 + $0x78] sm:$0xff] %v2281
      %v2314 = vld [vmem:[%s11] sm:$0xf]
      %v2315 = vld [vmem:[%s11 + $0x4] sm:$0xf]
      %v2316 = vld [vmem:[%s11 + $0x8] sm:$0xf]
      %v2317 = vld [vmem:[%s11 + $0xc] sm:$0xf]
      %v2318 = vld [vmem:[%s11 + $0x10] sm:$0xf]
      %v2319 = vld [vmem:[%s11 + $0x14] sm:$0xf]
      %v2320 = vld [vmem:[%s11 + $0x18] sm:$0xf]
      %v2321 = vld [vmem:[%s11 + $0x1c] sm:$0xf]
      %v2322 = vld [vmem:[%s12] sm:$0xff]
      %v2323 = vld [vmem:[%s12 + $0x8] sm:$0xff]
      %v2324 = vld [vmem:[%s12 + $0x10] sm:$0xff]
      %v2325 = vld [vmem:[%s12 + $0x18] sm:$0xff]
      %v2326 = vld [vmem:[%s12 + $0x20] sm:$0xff]
      %v2327 = vld [vmem:[%s12 + $0x28] sm:$0xff]
      %v2328 = vld [vmem:[%s12 + $0x30] sm:$0xff]
      %v2329 = vld [vmem:[%s12 + $0x38] sm:$0xff]
      %2331 = vset.pattern.permute.xlu0 0
      %2332 = vperm.xlu0 %2331, %v2322
      %v2333 = vpop.permute.xlu0 %2332
      %2336 = vset.pattern.permute.xlu0 0
      %2337 = vperm.xlu0 %2336, %v2323
      %v2338 = vpop.permute.xlu0 %2337
      %2341 = vset.pattern.permute.xlu0 0
      %2342 = vperm.xlu0 %2341, %v2324
      %v2343 = vpop.permute.xlu0 %2342
      %2346 = vset.pattern.permute.xlu0 0
      %2347 = vperm.xlu0 %2346, %v2325
      %v2348 = vpop.permute.xlu0 %2347
      %2351 = vset.pattern.permute.xlu0 0
      %2352 = vperm.xlu0 %2351, %v2326
      %v2353 = vpop.permute.xlu0 %2352
      %2356 = vset.pattern.permute.xlu0 0
      %2357 = vperm.xlu0 %2356, %v2327
      %v2358 = vpop.permute.xlu0 %2357
      %2361 = vset.pattern.permute.xlu0 0
      %2362 = vperm.xlu0 %2361, %v2328
      %v2363 = vpop.permute.xlu0 %2362
      %2366 = vset.pattern.permute.xlu0 0
      %2367 = vperm.xlu0 %2366, %v2329
      %v2368 = vpop.permute.xlu0 %2367
      %v2378 = vunpack.c.l.b16 %v2314
      %v2379 = vunpack.c.l.b16 %v2315
      %v2380 = vunpack.c.l.b16 %v2316
      %v2381 = vunpack.c.l.b16 %v2317
      %v2382 = vunpack.c.l.b16 %v2318
      %v2383 = vunpack.c.l.b16 %v2319
      %v2384 = vunpack.c.l.b16 %v2320
      %v2385 = vunpack.c.l.b16 %v2321
      %v2386 = vpack.c.b16 %v2379, %v2378
      %v2387 = vpack.c.b16 %v2381, %v2380
      %v2388 = vpack.c.b16 %v2383, %v2382
      %v2389 = vpack.c.b16 %v2385, %v2384
      %2394 = vmatprep.subr.bf16.mxu0 %v2203
      %2395 = vmatpush1.bf16.msra.mxu0 %v2202
      %2396 = vmatprep.subr.bf16.mxu0 %v2205
      %2397 = vmatpush1.bf16.msra.mxu0 %v2204
      %2398 = vmatprep.subr.bf16.mxu0 %v2207
      %2399 = vmatpush1.bf16.msra.mxu0 %v2206
      %2400 = vmatprep.subr.bf16.mxu0 %v2209
      %2401 = vmatpush1.bf16.msra.mxu0 %v2208
      %2402 = vmatprep.subr.bf16.mxu0 %v2211
      %2403 = vmatpush1.bf16.msra.mxu0 %v2210
      %2404 = vmatprep.subr.bf16.mxu0 %v2213
      %2405 = vmatpush1.bf16.msra.mxu0 %v2212
      %2406 = vmatprep.subr.bf16.mxu0 %v2215
      %2407 = vmatpush1.bf16.msra.mxu0 %v2214
      %2408 = vmatprep.subr.bf16.mxu0 %v2217
      %2409 = vmatpush1.bf16.msra.mxu0 %v2216
      %2410 = vmatprep.subr.bf16.mxu0 0
      %2411 = vmatpush1.bf16.msra.mxu0 0
      %2412 = vmatprep.subr.bf16.mxu0 0
      %2413 = vmatpush1.bf16.msra.mxu0 0
      %2414 = vmatprep.subr.bf16.mxu0 0
      %2415 = vmatpush1.bf16.msra.mxu0 0
      %2416 = vmatprep.subr.bf16.mxu0 0
      %2417 = vmatpush1.bf16.msra.mxu0 0
      %2418 = vmatprep.subr.bf16.mxu0 0
      %2419 = vmatpush1.bf16.msra.mxu0 0
      %2420 = vmatprep.subr.bf16.mxu0 0
      %2421 = vmatpush1.bf16.msra.mxu0 0
      %2422 = vmatprep.subr.bf16.mxu0 0
      %2423 = vmatpush1.bf16.msra.mxu0 0
      %2424 = vmatprep.subr.bf16.mxu0 0
      %2425 = vmatpush1.bf16.msra.mxu0 0
      %2426 = vmatprep.mubr.bf16.mxu0 0
      %2427 = vmatmul.mubr.bf16.gmra.mrb[0].mxu0 %v2386
      %v2428 = vpop.f32.mrb[0].mxu0
      %v2429 = vadd.f32 %v2333, %v2428
      %v2430 = vpop.f32.mrb[0].mxu0
      %v2431 = vadd.f32 %v2333, %v2430
      %v2432 = vpop.f32.mrb[0].mxu0
      %v2433 = vadd.f32 %v2338, %v2432
      %v2434 = vpop.f32.mrb[0].mxu0
      %v2435 = vadd.f32 %v2338, %v2434
      %2436 = vmatprep.mubr.bf16.mxu0 0
      %2437 = vmatmul.mubr.bf16.gmra.mrb[0].mxu0 %v2387
      %v2438 = vpop.f32.mrb[0].mxu0
      %v2439 = vadd.f32 %v2343, %v2438
      %v2440 = vpop.f32.mrb[0].mxu0
      %v2441 = vadd.f32 %v2343, %v2440
      %v2442 = vpop.f32.mrb[0].mxu0
      %v2443 = vadd.f32 %v2348, %v2442
      %v2444 = vpop.f32.mrb[0].mxu0
      %v2445 = vadd.f32 %v2348, %v2444
      %2446 = vmatprep.mubr.bf16.mxu0 0
      %2447 = vmatmul.mubr.bf16.gmra.mrb[0].mxu0 %v2388
      %v2448 = vpop.f32.mrb[0].mxu0
      %v2449 = vadd.f32 %v2353, %v2448
      %v2450 = vpop.f32.mrb[0].mxu0
      %v2451 = vadd.f32 %v2353, %v2450
      %v2452 = vpop.f32.mrb[0].mxu0
      %v2453 = vadd.f32 %v2358, %v2452
      %v2454 = vpop.f32.mrb[0].mxu0
      %v2455 = vadd.f32 %v2358, %v2454
      %2456 = vmatprep.mubr.bf16.mxu0 0
      %2457 = vmatmul.mubr.bf16.gmra.mrb[0].mxu0 %v2389
      %v2458 = vpop.f32.mrb[0].mxu0
      %v2459 = vadd.f32 %v2363, %v2458
      %v2460 = vpop.f32.mrb[0].mxu0
      %v2461 = vadd.f32 %v2363, %v2460
      %v2462 = vpop.f32.mrb[0].mxu0
      %v2463 = vadd.f32 %v2368, %v2462
      %v2464 = vpop.f32.mrb[0].mxu0
      %v2465 = vadd.f32 %v2368, %v2464
      %2466 = vdwg.mxu0
      %v2467 = vmax.f32 %v2429, 0.0
      %v2468 = vmax.f32 %v2431, 0.0
      %v2469 = vmax.f32 %v2433, 0.0
      %v2470 = vmax.f32 %v2435, 0.0
      %v2471 = vmax.f32 %v2439, 0.0
      %v2472 = vmax.f32 %v2441, 0.0
      %v2473 = vmax.f32 %v2443, 0.0
      %v2474 = vmax.f32 %v2445, 0.0
      %v2475 = vmax.f32 %v2449, 0.0
      %v2476 = vmax.f32 %v2451, 0.0
      %v2477 = vmax.f32 %v2453, 0.0
      %v2478 = vmax.f32 %v2455, 0.0
      %v2479 = vmax.f32 %v2459, 0.0
      %v2480 = vmax.f32 %v2461, 0.0
      %v2481 = vmax.f32 %v2463, 0.0
      %v2482 = vmax.f32 %v2465, 0.0
      %v2483 = vpack.c.bf16 %v2469, %v2467
      %v2484 = vpack.c.bf16 %v2470, %v2468
      %v2485 = vpack.c.bf16 %v2473, %v2471
      %v2486 = vpack.c.bf16 %v2474, %v2472
      %v2487 = vpack.c.bf16 %v2477, %v2475
      %v2488 = vpack.c.bf16 %v2478, %v2476
      %v2489 = vpack.c.bf16 %v2481, %v2479
      %v2490 = vpack.c.bf16 %v2482, %v2480
      %v2491 = vld [vmem:[%s13] sm:$0xf]
      %v2492 = vld [vmem:[%s13 + $0x4] sm:$0xf]
      %v2493 = vld [vmem:[%s13 + $0x8] sm:$0xf]
      %v2494 = vld [vmem:[%s13 + $0xc] sm:$0xf]
      %v2495 = vld [vmem:[%s13 + $0x10] sm:$0xf]
      %v2496 = vld [vmem:[%s13 + $0x14] sm:$0xf]
      %v2497 = vld [vmem:[%s13 + $0x18] sm:$0xf]
      %v2498 = vld [vmem:[%s13 + $0x1c] sm:$0xf]
      %v2499 = vld [vmem:[%s14] sm:$0xff]
      %v2500 = vld [vmem:[%s14 + $0x8] sm:$0xff]
      %v2501 = vld [vmem:[%s14 + $0x10] sm:$0xff]
      %v2502 = vld [vmem:[%s14 + $0x18] sm:$0xff]
      %v2503 = vld [vmem:[%s14 + $0x20] sm:$0xff]
      %v2504 = vld [vmem:[%s14 + $0x28] sm:$0xff]
      %v2505 = vld [vmem:[%s14 + $0x30] sm:$0xff]
      %v2506 = vld [vmem:[%s14 + $0x38] sm:$0xff]
      %2508 = vset.pattern.permute.xlu0 0
      %2509 = vperm.xlu0 %2508, %v2499
      %v2510 = vpop.permute.xlu0 %2509
      %2513 = vset.pattern.permute.xlu0 0
      %2514 = vperm.xlu0 %2513, %v2500
      %v2515 = vpop.permute.xlu0 %2514
      %2518 = vset.pattern.permute.xlu0 0
      %2519 = vperm.xlu0 %2518, %v2501
      %v2520 = vpop.permute.xlu0 %2519
      %2523 = vset.pattern.permute.xlu0 0
      %2524 = vperm.xlu0 %2523, %v2502
      %v2525 = vpop.permute.xlu0 %2524
      %2528 = vset.pattern.permute.xlu0 0
      %2529 = vperm.xlu0 %2528, %v2503
      %v2530 = vpop.permute.xlu0 %2529
      %2533 = vset.pattern.permute.xlu0 0
      %2534 = vperm.xlu0 %2533, %v2504
      %v2535 = vpop.permute.xlu0 %2534
      %2538 = vset.pattern.permute.xlu0 0
      %2539 = vperm.xlu0 %2538, %v2505
      %v2540 = vpop.permute.xlu0 %2539
      %2543 = vset.pattern.permute.xlu0 0
      %2544 = vperm.xlu0 %2543, %v2506
      %v2545 = vpop.permute.xlu0 %2544
      %v2555 = vunpack.c.l.b16 %v2491
      %v2556 = vunpack.c.l.b16 %v2492
      %v2557 = vunpack.c.l.b16 %v2493
      %v2558 = vunpack.c.l.b16 %v2494
      %v2559 = vunpack.c.l.b16 %v2495
      %v2560 = vunpack.c.l.b16 %v2496
      %v2561 = vunpack.c.l.b16 %v2497
      %v2562 = vunpack.c.l.b16 %v2498
      %v2563 = vpack.c.b16 %v2556, %v2555
      %v2564 = vpack.c.b16 %v2558, %v2557
      %v2565 = vpack.c.b16 %v2560, %v2559
      %v2566 = vpack.c.b16 %v2562, %v2561
      %v2568 = vsel %vm1450, %v2563, 0
      %v2571 = vsel %vm1450, %v2564, 0
      %v2574 = vsel %vm1450, %v2565, 0
      %v2577 = vsel %vm1450, %v2566, 0
      %2579 = vmatprep.subr.bf16.mxu0 %v2484
      %2580 = vmatpush1.bf16.msra.mxu0 %v2483
      %2581 = vmatprep.subr.bf16.mxu0 %v2486
      %2582 = vmatpush1.bf16.msra.mxu0 %v2485
      %2583 = vmatprep.subr.bf16.mxu0 %v2488
      %2584 = vmatpush1.bf16.msra.mxu0 %v2487
      %2585 = vmatprep.subr.bf16.mxu0 %v2490
      %2586 = vmatpush1.bf16.msra.mxu0 %v2489
      %2587 = vmatprep.subr.bf16.mxu0 0
      %2588 = vmatpush1.bf16.msra.mxu0 0
      %2589 = vmatprep.subr.bf16.mxu0 0
      %2590 = vmatpush1.bf16.msra.mxu0 0
      %2591 = vmatprep.subr.bf16.mxu0 0
      %2592 = vmatpush1.bf16.msra.mxu0 0
      %2593 = vmatprep.subr.bf16.mxu0 0
      %2594 = vmatpush1.bf16.msra.mxu0 0
      %2595 = vmatprep.subr.bf16.mxu0 0
      %2596 = vmatpush1.bf16.msra.mxu0 0
      %2597 = vmatprep.subr.bf16.mxu0 0
      %2598 = vmatpush1.bf16.msra.mxu0 0
      %2599 = vmatprep.subr.bf16.mxu0 0
      %2600 = vmatpush1.bf16.msra.mxu0 0
      %2601 = vmatprep.subr.bf16.mxu0 0
      %2602 = vmatpush1.bf16.msra.mxu0 0
      %2603 = vmatprep.subr.bf16.mxu0 0
      %2604 = vmatpush1.bf16.msra.mxu0 0
      %2605 = vmatprep.subr.bf16.mxu0 0
      %2606 = vmatpush1.bf16.msra.mxu0 0
      %2607 = vmatprep.subr.bf16.mxu0 0
      %2608 = vmatpush1.bf16.msra.mxu0 0
      %2609 = vmatprep.subr.bf16.mxu0 0
      %2610 = vmatpush1.bf16.msra.mxu0 0
      %2611 = vmatprep.mubr.bf16.mxu0 0
      %2612 = vmatmul.mubr.bf16.gmra.mrb[0].mxu0 %v2568
      %v2613 = vpop.f32.mrb[0].mxu0
      %v2614 = vadd.f32 %v2510, %v2613
      %v2615 = vpop.f32.mrb[0].mxu0
      %v2616 = vadd.f32 %v2510, %v2615
      %v2617 = vpop.f32.mrb[0].mxu0
      %v2618 = vadd.f32 %v2515, %v2617
      %v2619 = vpop.f32.mrb[0].mxu0
      %v2620 = vadd.f32 %v2515, %v2619
      %2621 = vmatprep.mubr.bf16.mxu0 0
      %2622 = vmatmul.mubr.bf16.gmra.mrb[0].mxu0 %v2571
      %v2623 = vpop.f32.mrb[0].mxu0
      %v2624 = vadd.f32 %v2520, %v2623
      %v2625 = vpop.f32.mrb[0].mxu0
      %v2626 = vadd.f32 %v2520, %v2625
      %v2627 = vpop.f32.mrb[0].mxu0
      %v2628 = vadd.f32 %v2525, %v2627
      %v2629 = vpop.f32.mrb[0].mxu0
      %v2630 = vadd.f32 %v2525, %v2629
      %2631 = vmatprep.mubr.bf16.mxu0 0
      %2632 = vmatmul.mubr.bf16.gmra.mrb[0].mxu0 %v2574
      %v2633 = vpop.f32.mrb[0].mxu0
      %v2634 = vadd.f32 %v2530, %v2633
      %v2635 = vpop.f32.mrb[0].mxu0
      %v2636 = vadd.f32 %v2530, %v2635
      %v2637 = vpop.f32.mrb[0].mxu0
      %v2638 = vadd.f32 %v2535, %v2637
      %v2639 = vpop.f32.mrb[0].mxu0
      %v2640 = vadd.f32 %v2535, %v2639
      %2641 = vmatprep.mubr.bf16.mxu0 0
      %2642 = vmatmul.mubr.bf16.gmra.mrb[0].mxu0 %v2577
      %v2643 = vpop.f32.mrb[0].mxu0
      %v2644 = vadd.f32 %v2540, %v2643
      %v2645 = vpop.f32.mrb[0].mxu0
      %v2646 = vadd.f32 %v2540, %v2645
      %v2647 = vpop.f32.mrb[0].mxu0
      %v2648 = vadd.f32 %v2545, %v2647
      %v2649 = vpop.f32.mrb[0].mxu0
      %v2650 = vadd.f32 %v2545, %v2649
      %2651 = vdwg.mxu0
      %v2652 = vmax.f32 %v2614, 0.0
      %v2653 = vmax.f32 %v2616, 0.0
      %v2654 = vmax.f32 %v2618, 0.0
      %v2655 = vmax.f32 %v2620, 0.0
      %v2656 = vmax.f32 %v2624, 0.0
      %v2657 = vmax.f32 %v2626, 0.0
      %v2658 = vmax.f32 %v2628, 0.0
      %v2659 = vmax.f32 %v2630, 0.0
      %v2660 = vmax.f32 %v2634, 0.0
      %v2661 = vmax.f32 %v2636, 0.0
      %v2662 = vmax.f32 %v2638, 0.0
      %v2663 = vmax.f32 %v2640, 0.0
      %v2664 = vmax.f32 %v2644, 0.0
      %v2665 = vmax.f32 %v2646, 0.0
      %v2666 = vmax.f32 %v2648, 0.0
      %v2667 = vmax.f32 %v2650, 0.0
      %v2668 = vpack.c.bf16 %v2654, %v2652
      %v2669 = vpack.c.bf16 %v2655, %v2653
      %v2670 = vpack.c.bf16 %v2658, %v2656
      %v2671 = vpack.c.bf16 %v2659, %v2657
      %v2672 = vpack.c.bf16 %v2662, %v2660
      %v2673 = vpack.c.bf16 %v2663, %v2661
      %v2674 = vpack.c.bf16 %v2666, %v2664
      %v2675 = vpack.c.bf16 %v2667, %v2665
      %v2676 = vld [vmem:[%s15] sm:$0xf]
      %v2677 = vld [vmem:[%s15 + $0x4] sm:$0xf]
      %v2678 = vld [vmem:[%s15 + $0x8] sm:$0xf]
      %v2679 = vld [vmem:[%s15 + $0xc] sm:$0xf]
      %v2680 = vld [vmem:[%s15 + $0x10] sm:$0xf]
      %v2681 = vld [vmem:[%s15 + $0x14] sm:$0xf]
      %v2682 = vld [vmem:[%s15 + $0x18] sm:$0xf]
      %v2683 = vld [vmem:[%s15 + $0x1c] sm:$0xf]
      %v2684 = vld [vmem:[%s15 + $0x20] sm:$0xf]
      %v2685 = vld [vmem:[%s15 + $0x24] sm:$0xf]
      %v2686 = vld [vmem:[%s15 + $0x28] sm:$0xf]
      %v2687 = vld [vmem:[%s15 + $0x2c] sm:$0xf]
      %v2688 = vld [vmem:[%s15 + $0x30] sm:$0xf]
      %v2689 = vld [vmem:[%s15 + $0x34] sm:$0xf]
      %v2690 = vld [vmem:[%s15 + $0x38] sm:$0xf]
      %v2691 = vld [vmem:[%s15 + $0x3c] sm:$0xf]
      %v2692 = vld [vmem:[%s16] sm:$0xff]
      %v2693 = vld [vmem:[%s16 + $0x8] sm:$0xff]
      %v2694 = vld [vmem:[%s16 + $0x10] sm:$0xff]
      %v2695 = vld [vmem:[%s16 + $0x18] sm:$0xff]
      %v2696 = vld [vmem:[%s16 + $0x20] sm:$0xff]
      %v2697 = vld [vmem:[%s16 + $0x28] sm:$0xff]
      %v2698 = vld [vmem:[%s16 + $0x30] sm:$0xff]
      %v2699 = vld [vmem:[%s16 + $0x38] sm:$0xff]
      %v2700 = vld [vmem:[%s16 + $0x40] sm:$0xff]
      %v2701 = vld [vmem:[%s16 + $0x48] sm:$0xff]
      %v2702 = vld [vmem:[%s16 + $0x50] sm:$0xff]
      %v2703 = vld [vmem:[%s16 + $0x58] sm:$0xff]
      %v2704 = vld [vmem:[%s16 + $0x60] sm:$0xff]
      %v2705 = vld [vmem:[%s16 + $0x68] sm:$0xff]
      %v2706 = vld [vmem:[%s16 + $0x70] sm:$0xff]
      %v2707 = vld [vmem:[%s16 + $0x78] sm:$0xff]
      %2709 = vset.pattern.permute.xlu0 0
      %2710 = vperm.xlu0 %2709, %v2692
      %v2711 = vpop.permute.xlu0 %2710
      %2714 = vset.pattern.permute.xlu0 0
      %2715 = vperm.xlu0 %2714, %v2693
      %v2716 = vpop.permute.xlu0 %2715
      %2719 = vset.pattern.permute.xlu0 0
      %2720 = vperm.xlu0 %2719, %v2694
      %v2721 = vpop.permute.xlu0 %2720
      %2724 = vset.pattern.permute.xlu0 0
      %2725 = vperm.xlu0 %2724, %v2695
      %v2726 = vpop.permute.xlu0 %2725
      %2729 = vset.pattern.permute.xlu0 0
      %2730 = vperm.xlu0 %2729, %v2696
      %v2731 = vpop.permute.xlu0 %2730
      %2734 = vset.pattern.permute.xlu0 0
      %2735 = vperm.xlu0 %2734, %v2697
      %v2736 = vpop.permute.xlu0 %2735
      %2739 = vset.pattern.permute.xlu0 0
      %2740 = vperm.xlu0 %2739, %v2698
      %v2741 = vpop.permute.xlu0 %2740
      %2744 = vset.pattern.permute.xlu0 0
      %2745 = vperm.xlu0 %2744, %v2699
      %v2746 = vpop.permute.xlu0 %2745
      %2749 = vset.pattern.permute.xlu0 0
      %2750 = vperm.xlu0 %2749, %v2700
      %v2751 = vpop.permute.xlu0 %2750
      %2754 = vset.pattern.permute.xlu0 0
      %2755 = vperm.xlu0 %2754, %v2701
      %v2756 = vpop.permute.xlu0 %2755
      %2759 = vset.pattern.permute.xlu0 0
      %2760 = vperm.xlu0 %2759, %v2702
      %v2761 = vpop.permute.xlu0 %2760
      %2764 = vset.pattern.permute.xlu0 0
      %2765 = vperm.xlu0 %2764, %v2703
      %v2766 = vpop.permute.xlu0 %2765
      %2769 = vset.pattern.permute.xlu0 0
      %2770 = vperm.xlu0 %2769, %v2704
      %v2771 = vpop.permute.xlu0 %2770
      %2774 = vset.pattern.permute.xlu0 0
      %2775 = vperm.xlu0 %2774, %v2705
      %v2776 = vpop.permute.xlu0 %2775
      %2779 = vset.pattern.permute.xlu0 0
      %2780 = vperm.xlu0 %2779, %v2706
      %v2781 = vpop.permute.xlu0 %2780
      %2784 = vset.pattern.permute.xlu0 0
      %2785 = vperm.xlu0 %2784, %v2707
      %v2786 = vpop.permute.xlu0 %2785
      %v2804 = vunpack.c.l.b16 %v2676
      %v2805 = vunpack.c.l.b16 %v2677
      %v2806 = vunpack.c.l.b16 %v2678
      %v2807 = vunpack.c.l.b16 %v2679
      %v2808 = vunpack.c.l.b16 %v2680
      %v2809 = vunpack.c.l.b16 %v2681
      %v2810 = vunpack.c.l.b16 %v2682
      %v2811 = vunpack.c.l.b16 %v2683
      %v2812 = vunpack.c.l.b16 %v2684
      %v2813 = vunpack.c.l.b16 %v2685
      %v2814 = vunpack.c.l.b16 %v2686
      %v2815 = vunpack.c.l.b16 %v2687
      %v2816 = vunpack.c.l.b16 %v2688
      %v2817 = vunpack.c.l.b16 %v2689
      %v2818 = vunpack.c.l.b16 %v2690
      %v2819 = vunpack.c.l.b16 %v2691
      %v2820 = vpack.c.b16 %v2805, %v2804
      %v2821 = vpack.c.b16 %v2807, %v2806
      %v2822 = vpack.c.b16 %v2809, %v2808
      %v2823 = vpack.c.b16 %v2811, %v2810
      %v2824 = vpack.c.b16 %v2813, %v2812
      %v2825 = vpack.c.b16 %v2815, %v2814
      %v2826 = vpack.c.b16 %v2817, %v2816
      %v2827 = vpack.c.b16 %v2819, %v2818
      %v2829 = vsel %vm1450, %v2820, 0
      %v2832 = vsel %vm1450, %v2821, 0
      %v2835 = vsel %vm1450, %v2822, 0
      %v2838 = vsel %vm1450, %v2823, 0
      %v2841 = vsel %vm1450, %v2824, 0
      %v2844 = vsel %vm1450, %v2825, 0
      %v2847 = vsel %vm1450, %v2826, 0
      %v2850 = vsel %vm1450, %v2827, 0
      %2852 = vmatprep.subr.bf16.mxu0 %v2669
      %2853 = vmatpush1.bf16.msra.mxu0 %v2668
      %2854 = vmatprep.subr.bf16.mxu0 %v2671
      %2855 = vmatpush1.bf16.msra.mxu0 %v2670
      %2856 = vmatprep.subr.bf16.mxu0 %v2673
      %2857 = vmatpush1.bf16.msra.mxu0 %v2672
      %2858 = vmatprep.subr.bf16.mxu0 %v2675
      %2859 = vmatpush1.bf16.msra.mxu0 %v2674
      %2860 = vmatprep.subr.bf16.mxu0 0
      %2861 = vmatpush1.bf16.msra.mxu0 0
      %2862 = vmatprep.subr.bf16.mxu0 0
      %2863 = vmatpush1.bf16.msra.mxu0 0
      %2864 = vmatprep.subr.bf16.mxu0 0
      %2865 = vmatpush1.bf16.msra.mxu0 0
      %2866 = vmatprep.subr.bf16.mxu0 0
      %2867 = vmatpush1.bf16.msra.mxu0 0
      %2868 = vmatprep.subr.bf16.mxu0 0
      %2869 = vmatpush1.bf16.msra.mxu0 0
      %2870 = vmatprep.subr.bf16.mxu0 0
      %2871 = vmatpush1.bf16.msra.mxu0 0
      %2872 = vmatprep.subr.bf16.mxu0 0
      %2873 = vmatpush1.bf16.msra.mxu0 0
      %2874 = vmatprep.subr.bf16.mxu0 0
      %2875 = vmatpush1.bf16.msra.mxu0 0
      %2876 = vmatprep.subr.bf16.mxu0 0
      %2877 = vmatpush1.bf16.msra.mxu0 0
      %2878 = vmatprep.subr.bf16.mxu0 0
      %2879 = vmatpush1.bf16.msra.mxu0 0
      %2880 = vmatprep.subr.bf16.mxu0 0
      %2881 = vmatpush1.bf16.msra.mxu0 0
      %2882 = vmatprep.subr.bf16.mxu0 0
      %2883 = vmatpush1.bf16.msra.mxu0 0
      %2884 = vmatprep.mubr.bf16.mxu0 0
      %2885 = vmatmul.mubr.bf16.gmra.mrb[0].mxu0 %v2829
      %v2886 = vpop.f32.mrb[0].mxu0
      %v2887 = vadd.f32 %v2711, %v2886
      %v2888 = vpop.f32.mrb[0].mxu0
      %v2889 = vadd.f32 %v2711, %v2888
      %v2890 = vpop.f32.mrb[0].mxu0
      %v2891 = vadd.f32 %v2716, %v2890
      %v2892 = vpop.f32.mrb[0].mxu0
      %v2893 = vadd.f32 %v2716, %v2892
      %2894 = vmatprep.mubr.bf16.mxu0 0
      %2895 = vmatmul.mubr.bf16.gmra.mrb[0].mxu0 %v2832
      %v2896 = vpop.f32.mrb[0].mxu0
      %v2897 = vadd.f32 %v2721, %v2896
      %v2898 = vpop.f32.mrb[0].mxu0
      %v2899 = vadd.f32 %v2721, %v2898
      %v2900 = vpop.f32.mrb[0].mxu0
      %v2901 = vadd.f32 %v2726, %v2900
      %v2902 = vpop.f32.mrb[0].mxu0
      %v2903 = vadd.f32 %v2726, %v2902
      %2904 = vmatprep.mubr.bf16.mxu0 0
      %2905 = vmatmul.mubr.bf16.gmra.mrb[0].mxu0 %v2835
      %v2906 = vpop.f32.mrb[0].mxu0
      %v2907 = vadd.f32 %v2731, %v2906
      %v2908 = vpop.f32.mrb[0].mxu0
      %v2909 = vadd.f32 %v2731, %v2908
      %v2910 = vpop.f32.mrb[0].mxu0
      %v2911 = vadd.f32 %v2736, %v2910
      %v2912 = vpop.f32.mrb[0].mxu0
      %v2913 = vadd.f32 %v2736, %v2912
      %2914 = vmatprep.mubr.bf16.mxu0 0
      %2915 = vmatmul.mubr.bf16.gmra.mrb[0].mxu0 %v2838
      %v2916 = vpop.f32.mrb[0].mxu0
      %v2917 = vadd.f32 %v2741, %v2916
      %v2918 = vpop.f32.mrb[0].mxu0
      %v2919 = vadd.f32 %v2741, %v2918
      %v2920 = vpop.f32.mrb[0].mxu0
      %v2921 = vadd.f32 %v2746, %v2920
      %v2922 = vpop.f32.mrb[0].mxu0
      %v2923 = vadd.f32 %v2746, %v2922
      %2924 = vmatprep.mubr.bf16.mxu0 0
      %2925 = vmatmul.mubr.bf16.gmra.mrb[0].mxu0 %v2841
      %v2926 = vpop.f32.mrb[0].mxu0
      %v2927 = vadd.f32 %v2751, %v2926
      %v2928 = vpop.f32.mrb[0].mxu0
      %v2929 = vadd.f32 %v2751, %v2928
      %v2930 = vpop.f32.mrb[0].mxu0
      %v2931 = vadd.f32 %v2756, %v2930
      %v2932 = vpop.f32.mrb[0].mxu0
      %v2933 = vadd.f32 %v2756, %v2932
      %2934 = vmatprep.mubr.bf16.mxu0 0
      %2935 = vmatmul.mubr.bf16.gmra.mrb[0].mxu0 %v2844
      %v2936 = vpop.f32.mrb[0].mxu0
      %v2937 = vadd.f32 %v2761, %v2936
      %v2938 = vpop.f32.mrb[0].mxu0
      %v2939 = vadd.f32 %v2761, %v2938
      %v2940 = vpop.f32.mrb[0].mxu0
      %v2941 = vadd.f32 %v2766, %v2940
      %v2942 = vpop.f32.mrb[0].mxu0
      %v2943 = vadd.f32 %v2766, %v2942
      %2944 = vmatprep.mubr.bf16.mxu0 0
      %2945 = vmatmul.mubr.bf16.gmra.mrb[0].mxu0 %v2847
      %v2946 = vpop.f32.mrb[0].mxu0
      %v2947 = vadd.f32 %v2771, %v2946
      %v2948 = vpop.f32.mrb[0].mxu0
      %v2949 = vadd.f32 %v2771, %v2948
      %v2950 = vpop.f32.mrb[0].mxu0
      %v2951 = vadd.f32 %v2776, %v2950
      %v2952 = vpop.f32.mrb[0].mxu0
      %v2953 = vadd.f32 %v2776, %v2952
      %2954 = vmatprep.mubr.bf16.mxu0 0
      %2955 = vmatmul.mubr.bf16.gmra.mrb[0].mxu0 %v2850
      %v2956 = vpop.f32.mrb[0].mxu0
      %v2957 = vadd.f32 %v2781, %v2956
      %v2958 = vpop.f32.mrb[0].mxu0
      %v2959 = vadd.f32 %v2781, %v2958
      %v2960 = vpop.f32.mrb[0].mxu0
      %v2961 = vadd.f32 %v2786, %v2960
      %v2962 = vpop.f32.mrb[0].mxu0
      %v2963 = vadd.f32 %v2786, %v2962
      %2964 = vdwg.mxu0
      %v2965 = vmax.f32 %v2887, 0.0
      %v2966 = vmax.f32 %v2889, 0.0
      %v2967 = vmax.f32 %v2891, 0.0
      %v2968 = vmax.f32 %v2893, 0.0
      %v2969 = vmax.f32 %v2897, 0.0
      %v2970 = vmax.f32 %v2899, 0.0
      %v2971 = vmax.f32 %v2901, 0.0
      %v2972 = vmax.f32 %v2903, 0.0
      %v2973 = vmax.f32 %v2907, 0.0
      %v2974 = vmax.f32 %v2909, 0.0
      %v2975 = vmax.f32 %v2911, 0.0
      %v2976 = vmax.f32 %v2913, 0.0
      %v2977 = vmax.f32 %v2917, 0.0
      %v2978 = vmax.f32 %v2919, 0.0
      %v2979 = vmax.f32 %v2921, 0.0
      %v2980 = vmax.f32 %v2923, 0.0
      %v2981 = vmax.f32 %v2927, 0.0
      %v2982 = vmax.f32 %v2929, 0.0
      %v2983 = vmax.f32 %v2931, 0.0
      %v2984 = vmax.f32 %v2933, 0.0
      %v2985 = vmax.f32 %v2937, 0.0
      %v2986 = vmax.f32 %v2939, 0.0
      %v2987 = vmax.f32 %v2941, 0.0
      %v2988 = vmax.f32 %v2943, 0.0
      %v2989 = vmax.f32 %v2947, 0.0
      %v2990 = vmax.f32 %v2949, 0.0
      %v2991 = vmax.f32 %v2951, 0.0
      %v2992 = vmax.f32 %v2953, 0.0
      %v2993 = vmax.f32 %v2957, 0.0
      %v2994 = vmax.f32 %v2959, 0.0
      %v2995 = vmax.f32 %v2961, 0.0
      %v2996 = vmax.f32 %v2963, 0.0
      %v2997 = vsub.f32 %v1849, %v2965
      %v2998 = vsub.f32 %v1850, %v2966
      %v2999 = vsub.f32 %v1851, %v2967
      %v3000 = vsub.f32 %v1852, %v2968
      %v3001 = vsub.f32 %v1853, %v2969
      %v3002 = vsub.f32 %v1854, %v2970
      %v3003 = vsub.f32 %v1855, %v2971
      %v3004 = vsub.f32 %v1856, %v2972
      %v3005 = vsub.f32 %v1857, %v2973
      %v3006 = vsub.f32 %v1858, %v2974
      %v3007 = vsub.f32 %v1859, %v2975
      %v3008 = vsub.f32 %v1860, %v2976
      %v3009 = vsub.f32 %v1861, %v2977
      %v3010 = vsub.f32 %v1862, %v2978
      %v3011 = vsub.f32 %v1863, %v2979
      %v3012 = vsub.f32 %v1864, %v2980
      %v3013 = vsub.f32 %v1865, %v2981
      %v3014 = vsub.f32 %v1866, %v2982
      %v3015 = vsub.f32 %v1867, %v2983
      %v3016 = vsub.f32 %v1868, %v2984
      %v3017 = vsub.f32 %v1869, %v2985
      %v3018 = vsub.f32 %v1870, %v2986
      %v3019 = vsub.f32 %v1871, %v2987
      %v3020 = vsub.f32 %v1872, %v2988
      %v3021 = vsub.f32 %v1873, %v2989
      %v3022 = vsub.f32 %v1874, %v2990
      %v3023 = vsub.f32 %v1875, %v2991
      %v3024 = vsub.f32 %v1876, %v2992
      %v3025 = vsub.f32 %v1877, %v2993
      %v3026 = vsub.f32 %v1878, %v2994
      %v3027 = vsub.f32 %v1879, %v2995
      %v3028 = vsub.f32 %v1880, %v2996
      %v3029 = vpack.c.bf16 %v2999, %v2997
      %v3030 = vpack.c.bf16 %v3000, %v2998
      %v3031 = vpack.c.bf16 %v3003, %v3001
      %v3032 = vpack.c.bf16 %v3004, %v3002
      %v3033 = vpack.c.bf16 %v3007, %v3005
      %v3034 = vpack.c.bf16 %v3008, %v3006
      %v3035 = vpack.c.bf16 %v3011, %v3009
      %v3036 = vpack.c.bf16 %v3012, %v3010
      %v3037 = vpack.c.bf16 %v3015, %v3013
      %v3038 = vpack.c.bf16 %v3016, %v3014
      %v3039 = vpack.c.bf16 %v3019, %v3017
      %v3040 = vpack.c.bf16 %v3020, %v3018
      %v3041 = vpack.c.bf16 %v3023, %v3021
      %v3042 = vpack.c.bf16 %v3024, %v3022
      %v3043 = vpack.c.bf16 %v3027, %v3025
      %v3044 = vpack.c.bf16 %v3028, %v3026
      %v3061 = vunpack.c.l.b16 %v3029
      %v3062 = vunpack.c.l.b16 %v3030
      %v3063 = vunpack.c.h.b16 %v3029
      %v3064 = vunpack.c.h.b16 %v3030
      %v3065 = vunpack.c.l.b16 %v3031
      %v3066 = vunpack.c.l.b16 %v3032
      %v3067 = vunpack.c.h.b16 %v3031
      %v3068 = vunpack.c.h.b16 %v3032
      %v3069 = vunpack.c.l.b16 %v3033
      %v3070 = vunpack.c.l.b16 %v3034
      %v3071 = vunpack.c.h.b16 %v3033
      %v3072 = vunpack.c.h.b16 %v3034
      %v3073 = vunpack.c.l.b16 %v3035
      %v3074 = vunpack.c.l.b16 %v3036
      %v3075 = vunpack.c.h.b16 %v3035
      %v3076 = vunpack.c.h.b16 %v3036
      %v3077 = vunpack.c.l.b16 %v3037
      %v3078 = vunpack.c.l.b16 %v3038
      %v3079 = vunpack.c.h.b16 %v3037
      %v3080 = vunpack.c.h.b16 %v3038
      %v3081 = vunpack.c.l.b16 %v3039
      %v3082 = vunpack.c.l.b16 %v3040
      %v3083 = vunpack.c.h.b16 %v3039
      %v3084 = vunpack.c.h.b16 %v3040
      %v3085 = vunpack.c.l.b16 %v3041
      %v3086 = vunpack.c.l.b16 %v3042
      %v3087 = vunpack.c.h.b16 %v3041
      %v3088 = vunpack.c.h.b16 %v3042
      %v3089 = vunpack.c.l.b16 %v3043
      %v3090 = vunpack.c.l.b16 %v3044
      %v3091 = vunpack.c.h.b16 %v3043
      %v3092 = vunpack.c.h.b16 %v3044
      %v3093 = vpack.c.b16 %v3062, %v3061
      %v3094 = vpack.c.b16 %v3064, %v3063
      %v3095 = vpack.c.b16 %v3066, %v3065
      %v3096 = vpack.c.b16 %v3068, %v3067
      %v3097 = vpack.c.b16 %v3070, %v3069
      %v3098 = vpack.c.b16 %v3072, %v3071
      %v3099 = vpack.c.b16 %v3074, %v3073
      %v3100 = vpack.c.b16 %v3076, %v3075
      %v3101 = vpack.c.b16 %v3078, %v3077
      %v3102 = vpack.c.b16 %v3080, %v3079
      %v3103 = vpack.c.b16 %v3082, %v3081
      %v3104 = vpack.c.b16 %v3084, %v3083
      %v3105 = vpack.c.b16 %v3086, %v3085
      %v3106 = vpack.c.b16 %v3088, %v3087
      %v3107 = vpack.c.b16 %v3090, %v3089
      %v3108 = vpack.c.b16 %v3092, %v3091
      %3125 = vst [vmem:[%s721] sm:$0xff] %v3093
      %3126 = vst [vmem:[%s721 + $0x8] sm:$0xff] %v3094
      %3127 = vst [vmem:[%s721 + $0x10] sm:$0xff] %v3095
      %3128 = vst [vmem:[%s721 + $0x18] sm:$0xff] %v3096
      %3129 = vst [vmem:[%s721 + $0x20] sm:$0xff] %v3097
      %3130 = vst [vmem:[%s721 + $0x28] sm:$0xff] %v3098
      %3131 = vst [vmem:[%s721 + $0x30] sm:$0xff] %v3099
      %3132 = vst [vmem:[%s721 + $0x38] sm:$0xff] %v3100
      %3133 = vst [vmem:[%s721 + $0x40] sm:$0xff] %v3101
      %3134 = vst [vmem:[%s721 + $0x48] sm:$0xff] %v3102
      %3135 = vst [vmem:[%s721 + $0x50] sm:$0xff] %v3103
      %3136 = vst [vmem:[%s721 + $0x58] sm:$0xff] %v3104
      %3137 = vst [vmem:[%s721 + $0x60] sm:$0xff] %v3105
      %3138 = vst [vmem:[%s721 + $0x68] sm:$0xff] %v3106
      %3139 = vst [vmem:[%s721 + $0x70] sm:$0xff] %v3107
      %3140 = vst [vmem:[%s721 + $0x78] sm:$0xff] %v3108
      %v3141 = vld [vmem:[%s727] sm:$0xff]
      %v3142 = vld [vmem:[%s727 + $0x8] sm:$0xff]
      %v3143 = vld [vmem:[%s727 + $0x10] sm:$0xff]
      %v3144 = vld [vmem:[%s727 + $0x18] sm:$0xff]
      %v3145 = vld [vmem:[%s727 + $0x20] sm:$0xff]
      %v3146 = vld [vmem:[%s727 + $0x28] sm:$0xff]
      %v3147 = vld [vmem:[%s727 + $0x30] sm:$0xff]
      %v3148 = vld [vmem:[%s727 + $0x38] sm:$0xff]
      %v3149 = vld [vmem:[%s727 + $0x40] sm:$0xff]
      %v3150 = vld [vmem:[%s727 + $0x48] sm:$0xff]
      %v3151 = vld [vmem:[%s727 + $0x50] sm:$0xff]
      %v3152 = vld [vmem:[%s727 + $0x58] sm:$0xff]
      %v3153 = vld [vmem:[%s727 + $0x60] sm:$0xff]
      %v3154 = vld [vmem:[%s727 + $0x68] sm:$0xff]
      %v3155 = vld [vmem:[%s727 + $0x70] sm:$0xff]
      %v3156 = vld [vmem:[%s727 + $0x78] sm:$0xff]
      %v3157 = vadd.f32 %v2997, %v2998
      %3158 = vadd.xlane.f32.xlu0 %v3157
      %v3159 = vpop.xlane.xlu0 %3158
      %v3160 = vadd.f32 %v2999, %v3000
      %3161 = vadd.xlane.f32.xlu0 %v3160
      %v3162 = vpop.xlane.xlu0 %3161
      %v3163 = vadd.f32 %v3001, %v3002
      %3164 = vadd.xlane.f32.xlu0 %v3163
      %v3165 = vpop.xlane.xlu0 %3164
      %v3166 = vadd.f32 %v3003, %v3004
      %3167 = vadd.xlane.f32.xlu0 %v3166
      %v3168 = vpop.xlane.xlu0 %3167
      %v3169 = vadd.f32 %v3005, %v3006
      %3170 = vadd.xlane.f32.xlu0 %v3169
      %v3171 = vpop.xlane.xlu0 %3170
      %v3172 = vadd.f32 %v3007, %v3008
      %3173 = vadd.xlane.f32.xlu0 %v3172
      %v3174 = vpop.xlane.xlu0 %3173
      %v3175 = vadd.f32 %v3009, %v3010
      %3176 = vadd.xlane.f32.xlu0 %v3175
      %v3177 = vpop.xlane.xlu0 %3176
      %v3178 = vadd.f32 %v3011, %v3012
      %3179 = vadd.xlane.f32.xlu0 %v3178
      %v3180 = vpop.xlane.xlu0 %3179
      %v3181 = vadd.f32 %v3013, %v3014
      %3182 = vadd.xlane.f32.xlu0 %v3181
      %v3183 = vpop.xlane.xlu0 %3182
      %v3184 = vadd.f32 %v3015, %v3016
      %3185 = vadd.xlane.f32.xlu0 %v3184
      %v3186 = vpop.xlane.xlu0 %3185
      %v3187 = vadd.f32 %v3017, %v3018
      %3188 = vadd.xlane.f32.xlu0 %v3187
      %v3189 = vpop.xlane.xlu0 %3188
      %v3190 = vadd.f32 %v3019, %v3020
      %3191 = vadd.xlane.f32.xlu0 %v3190
      %v3192 = vpop.xlane.xlu0 %3191
      %v3193 = vadd.f32 %v3021, %v3022
      %3194 = vadd.xlane.f32.xlu0 %v3193
      %v3195 = vpop.xlane.xlu0 %3194
      %v3196 = vadd.f32 %v3023, %v3024
      %3197 = vadd.xlane.f32.xlu0 %v3196
      %v3198 = vpop.xlane.xlu0 %3197
      %v3199 = vadd.f32 %v3025, %v3026
      %3200 = vadd.xlane.f32.xlu0 %v3199
      %v3201 = vpop.xlane.xlu0 %3200
      %v3202 = vadd.f32 %v3027, %v3028
      %3203 = vadd.xlane.f32.xlu0 %v3202
      %v3204 = vpop.xlane.xlu0 %3203
      %v3205 = vadd.f32 %v3141, %v3159
      %v3206 = vadd.f32 %v3142, %v3162
      %v3207 = vadd.f32 %v3143, %v3165
      %v3208 = vadd.f32 %v3144, %v3168
      %v3209 = vadd.f32 %v3145, %v3171
      %v3210 = vadd.f32 %v3146, %v3174
      %v3211 = vadd.f32 %v3147, %v3177
      %v3212 = vadd.f32 %v3148, %v3180
      %v3213 = vadd.f32 %v3149, %v3183
      %v3214 = vadd.f32 %v3150, %v3186
      %v3215 = vadd.f32 %v3151, %v3189
      %v3216 = vadd.f32 %v3152, %v3192
      %v3217 = vadd.f32 %v3153, %v3195
      %v3218 = vadd.f32 %v3154, %v3198
      %v3219 = vadd.f32 %v3155, %v3201
      %v3220 = vadd.f32 %v3156, %v3204
      %vm3221 = vcmask 7168
      %3222 = vst.msk [vmem:[%s727] sm:$0xff] %vm3221, %v3205
      %3223 = vst.msk [vmem:[%s727 + $0x8] sm:$0xff] %vm3221, %v3206
      %3224 = vst.msk [vmem:[%s727 + $0x10] sm:$0xff] %vm3221, %v3207
      %3225 = vst.msk [vmem:[%s727 + $0x18] sm:$0xff] %vm3221, %v3208
      %3226 = vst.msk [vmem:[%s727 + $0x20] sm:$0xff] %vm3221, %v3209
      %3227 = vst.msk [vmem:[%s727 + $0x28] sm:$0xff] %vm3221, %v3210
      %3228 = vst.msk [vmem:[%s727 + $0x30] sm:$0xff] %vm3221, %v3211
      %3229 = vst.msk [vmem:[%s727 + $0x38] sm:$0xff] %vm3221, %v3212
      %3230 = vst.msk [vmem:[%s727 + $0x40] sm:$0xff] %vm3221, %v3213
      %3231 = vst.msk [vmem:[%s727 + $0x48] sm:$0xff] %vm3221, %v3214
      %3232 = vst.msk [vmem:[%s727 + $0x50] sm:$0xff] %vm3221, %v3215
      %3233 = vst.msk [vmem:[%s727 + $0x58] sm:$0xff] %vm3221, %v3216
      %3234 = vst.msk [vmem:[%s727 + $0x60] sm:$0xff] %vm3221, %v3217
      %3235 = vst.msk [vmem:[%s727 + $0x68] sm:$0xff] %vm3221, %v3218
      %3236 = vst.msk [vmem:[%s727 + $0x70] sm:$0xff] %vm3221, %v3219
      %3237 = vst.msk [vmem:[%s727 + $0x78] sm:$0xff] %vm3221, %v3220
      %s3238 = smul.u32 2, %s37
      %p3239 = scmp.lt.s32.totalorder %s36, 7
      %s3240 = scalar_select %p3239, %s36, 7
      %p3241 = scmp.lt.s32.totalorder %s3238, 1
      %s3242 = scalar_select %p3241, %s3238, 1
      %s3243 = smul.addr %s3240, 32
      %s3244 = sadd.s32 %s3242, %s3243
      %s3245 = smul.addr %s3244, 4
      %s3246 = scalar_lea.vmem %s17, %s3245
      %s3247 = smul.u32 2, %s37
      %p3248 = scmp.lt.s32.totalorder %s36, 7
      %s3249 = scalar_select %p3248, %s36, 7
      %p3250 = scmp.lt.s32.totalorder %s3247, 1
      %s3251 = scalar_select %p3250, %s3247, 1
      %s3252 = smul.addr %s3249, 32
      %s3253 = sadd.s32 %s3251, %s3252
      %s3254 = smul.addr %s3253, 4
      %s3255 = scalar_lea.vmem %s18, %s3254
      %s3256 = smul.u32 2, %s37
      %p3257 = scmp.lt.s32.totalorder %s36, 7
      %s3258 = scalar_select %p3257, %s36, 7
      %p3259 = scmp.lt.s32.totalorder %s3256, 1
      %s3260 = scalar_select %p3259, %s3256, 1
      %s3261 = smul.addr %s3258, 32
      %s3262 = sadd.s32 %s3260, %s3261
      %s3263 = smul.addr %s3262, 4
      %s3264 = scalar_lea.vmem %s19, %s3263
      %p3265 = scmp.lt.s32.totalorder %s36, 7
      %s3266 = scalar_select %p3265, %s36, 7
      %s3267 = smul.addr %s3266, 16
      %s3268 = smul.addr %s3267, 8
      %s3269 = scalar_lea.vmem %s20, %s3268
      // Predicated region
      $region93: #{emo_id_forward.1} parent=87 // pred_check
        %p3270 = pneg %p428
      $region94: #{emo_id_forward.1} parent=87 // pred_check_branch
        %3272 = sbr.rel (%p3270) target = $region96
      $region95: #{emo_id_forward.1} parent=87 // pred_region
        %s3273 = smul.u32 2, %s37
      $region96: #{emo_id_forward.1} parent=87 // pred_fallthru
        _
      // Predicated region
      $region97: #{emo_id_forward.1} parent=87 // pred_check
        %p3274 = pneg %p456
      $region98: #{emo_id_forward.1} parent=87 // pred_check_branch
        %3276 = sbr.rel (%p3274) target = $region100
      $region99: #{emo_id_forward.1} parent=87 // pred_region
        %s3277 = smul.u32 2, %s37
      $region100: #{emo_id_forward.1} parent=87 // pred_fallthru
        _
      // Predicated region
      $region101: #{emo_id_forward.1} parent=87 // pred_check
        %p3278 = pneg %p484
      $region102: #{emo_id_forward.1} parent=87 // pred_check_branch
        %3280 = sbr.rel (%p3278) target = $region104
      $region103: #{emo_id_forward.1} parent=87 // pred_region
        %s3281 = smul.u32 2, %s37
      $region104: #{emo_id_forward.1} parent=87 // pred_fallthru
        _
      // Predicated region
      $region105: #{emo_id_forward.1} parent=87 // pred_check
        %p3282 = pneg %p510
      $region106: #{emo_id_forward.1} parent=87 // pred_check_branch
        %3284 = sbr.rel (%p3282) target = $region108
      $region107: #{emo_id_forward.1} parent=87 // pred_region
        _
      $region108: #{emo_id_forward.1} parent=87 // pred_fallthru
        _
    $region88: #{emo_id_forward.1} parent=5 // pred_fallthru
      _
    %p3285 = scmp.le.s32.totalorder 2, %s27
    // Predicated region
    $region109: #{emo_id_forward.1} parent=5 // pred_check
      %p3286 = pneg %p3285
    $region110: #{emo_id_forward.1} parent=5 // pred_check_branch
      %3288 = sbr.rel (%p3286) target = $region112
    $region111: #{emo_id_forward.1} parent=5 // pred_region
      %s3289 = ssub.s32 %s27, 2
      // Predicated region
      $region113: #{emo_id_forward.1} parent=111 // pred_check
        %p3290 = pneg %p434
      $region114: #{emo_id_forward.1} parent=111 // pred_check_branch
        %3292 = sbr.rel (%p3290) target = $region116
      $region115: #{emo_id_forward.1} parent=111 // pred_region
        %s3293 = smul.u32 2, %s39
        %p3294 = scmp.lt.s32.totalorder %s38, 7
        %s3295 = scalar_select %p3294, %s38, 7
        %p3296 = scmp.lt.s32.totalorder %s3293, 1
        %s3297 = scalar_select %p3296, %s3293, 1
        %s3298 = smul.addr %s3295, 32
        %s3299 = sadd.s32 %s3297, %s3298
        %s3300 = smul.addr %s3299, 4
        %s3301 = scalar_lea.vmem %s17, %s3300
      $region116: #{emo_id_forward.1} parent=111 // pred_fallthru
        _
      // Predicated region
      $region117: #{emo_id_forward.1} parent=111 // pred_check
        %p3302 = pneg %p462
      $region118: #{emo_id_forward.1} parent=111 // pred_check_branch
        %3304 = sbr.rel (%p3302) target = $region120
      $region119: #{emo_id_forward.1} parent=111 // pred_region
        %s3305 = smul.u32 2, %s39
        %p3306 = scmp.lt.s32.totalorder %s38, 7
        %s3307 = scalar_select %p3306, %s38, 7
        %p3308 = scmp.lt.s32.totalorder %s3305, 1
        %s3309 = scalar_select %p3308, %s3305, 1
        %s3310 = smul.addr %s3307, 32
        %s3311 = sadd.s32 %s3309, %s3310
        %s3312 = smul.addr %s3311, 4
        %s3313 = scalar_lea.vmem %s18, %s3312
      $region120: #{emo_id_forward.1} parent=111 // pred_fallthru
        _
      // Predicated region
      $region121: #{emo_id_forward.1} parent=111 // pred_check
        %p3314 = pneg %p490
      $region122: #{emo_id_forward.1} parent=111 // pred_check_branch
        %3316 = sbr.rel (%p3314) target = $region124
      $region123: #{emo_id_forward.1} parent=111 // pred_region
        %s3317 = smul.u32 2, %s39
        %p3318 = scmp.lt.s32.totalorder %s38, 7
        %s3319 = scalar_select %p3318, %s38, 7
        %p3320 = scmp.lt.s32.totalorder %s3317, 1
        %s3321 = scalar_select %p3320, %s3317, 1
        %s3322 = smul.addr %s3319, 32
        %s3323 = sadd.s32 %s3321, %s3322
        %s3324 = smul.addr %s3323, 4
        %s3325 = scalar_lea.vmem %s19, %s3324
      $region124: #{emo_id_forward.1} parent=111 // pred_fallthru
        _
      // Predicated region
      $region125: #{emo_id_forward.1} parent=111 // pred_check
        %p3326 = pneg %p516
      $region126: #{emo_id_forward.1} parent=111 // pred_check_branch
        %3328 = sbr.rel (%p3326) target = $region128
      $region127: #{emo_id_forward.1} parent=111 // pred_region
        %p3329 = scmp.lt.s32.totalorder %s38, 7
        %s3330 = scalar_select %p3329, %s38, 7
        %s3331 = smul.addr %s3330, 16
        %s3332 = smul.addr %s3331, 8
        %s3333 = scalar_lea.vmem %s20, %s3332
      $region128: #{emo_id_forward.1} parent=111 // pred_fallthru
        _
    $region112: #{emo_id_forward.1} parent=5 // pred_fallthru
      _
  $region6: #{emo_id_forward.1} parent=0 // loop_footer
    %s31 = sadd.s32 1, %s27
  $region7: #{emo_id_forward.1} parent=0 // loop_footer_branch
    %26 = sbr.rel target = $region3
  $region8: #{emo_id_forward.1} parent=0 // loop_exit
    _

</llo_original>
